<compile_context>
chip_gen: v6e
topology: v6e:2x2x1
jax: 0.10.0
libtpu: 0.0.40
codegen_flags: <defaults>
</compile_context>

<pallas_src>
import math

import jax
import jax.numpy as jnp
from jax import lax
from jax.experimental import pallas as pl
from jax.experimental.pallas import tpu as pltpu


def _round_up(x, m):
    return -(-x // m) * m


def _geometry(W, HWp, K, D, layer_cfg):
    assert (D * (K - 1)) % 2 == 0, "even effective kernel not supported"
    P = D * (K - 1) // 2                      # 'same' padding radius
    PAD = _round_up(P * (W + 1), 128) if P > 0 else 0
    FLAT = PAD + HWp + PAD                    # per-image flat-padded extent
    ROWS = max(cp for (_, cp, _, _) in layer_cfg)
    KKC_MAX = max(K * K * cp for (_, cp, _, _) in layer_cfg)
    return P, PAD, FLAT, ROWS, KKC_MAX


def _make_pionono_kernel(H, W, HW, HWp, C, L, K, D, TB, layer_cfg,
                         n_classes, use_softmax):
    """layer_cfg: list of (cin, cin_pad, cout, relu)."""
    P, PAD, FLAT, ROWS, KKC_MAX = _geometry(W, HWp, K, D, layer_cfg)
    n_layers = len(layer_cfg)
    tail = FLAT - (PAD + HW)

    def kernel(*refs):
        z_ref = refs[0]                       # (B_pad, L) f32, SMEM prefetch
        fm_ref = refs[1]                      # (TB, C, HWp) VMEM
        wb = refs[2:2 + 2 * n_layers]
        out_ref = refs[2 + 2 * n_layers]      # (TB, n_classes, HWp)
        x_scr = refs[3 + 2 * n_layers]        # (ROWS, TB*FLAT) f32
        col_scr = refs[4 + 2 * n_layers]      # (KKC_MAX, TB*HWp) bf16

        g = pl.program_id(0)

        # --- prologue: zero pad regions, store [feature_map ; tiled z] -----
        # (done every step so it is safe if the parallel batch axis is split
        #  across TensorCores)
        for tb in range(TB):
            base = tb * FLAT
            if PAD:
                x_scr[:, base:base + PAD] = jnp.zeros((ROWS, PAD), jnp.float32)
            if tail:
                x_scr[:, base + PAD + HW:base + FLAT] = jnp.zeros(
                    (ROWS, tail), jnp.float32)
            if ROWS > C + L:
                x_scr[C + L:ROWS, base + PAD:base + PAD + HW] = jnp.zeros(
                    (ROWS - (C + L), HW), jnp.float32)
            # feature map (host already lane-padded with zeros to HWp)
            x_scr[0:C, base + PAD:base + PAD + HWp] = fm_ref[tb]
            # z scalars from SMEM, broadcast across lanes (tf.tile semantics)
            zrows = [jnp.full((1, HW), z_ref[g * TB + tb, l], jnp.float32)
                     for l in range(L)]
            x_scr[C:C + L, base + PAD:base + PAD + HW] = (
                zrows[0] if L == 1 else jnp.concatenate(zrows, axis=0))

        # --- per-dx column-validity masks (hoisted) ------------------------
        wpos = lax.broadcasted_iota(jnp.int32, (1, HWp), 1) % W
        wmask = {}
        for kx in range(K):
            dx = kx * D - P
            if dx != 0 and dx not in wmask:
                wmask[dx] = (wpos + dx >= 0) & (wpos + dx < W)

        logits = None
        for li, (cin, cin_pad, cout, relu) in enumerate(layer_cfg):
            w_ref, b_ref = wb[2 * li], wb[2 * li + 1]
            kkc = K * K * cin_pad
            # im2col: (kkc, TB*HWp) bf16; all stores 16-sublane / 128-lane
            # aligned (cin_pad % 16 == 0, HWp % 128 == 0).
            t = 0
            for ky in range(K):
                dy = ky * D - P
                for kx in range(K):
                    dx = kx * D - P
                    off = dy * W + dx
                    for tb in range(TB):
                        base = tb * FLAT
                        patch = x_scr[0:cin_pad,
                                      base + PAD + off:base + PAD + off + HWp]
                        if dx != 0:
                            patch = jnp.where(wmask[dx], patch, 0.0)
                        col_scr[t * cin_pad:(t + 1) * cin_pad,
                                tb * HWp:(tb + 1) * HWp] = \
                            patch.astype(jnp.bfloat16)
                    t += 1
            # ONE fused MXU dot per layer over the TB*HWp-wide RHS.
            acc = jnp.dot(w_ref[...], col_scr[0:kkc, :],
                          preferred_element_type=jnp.float32)
            acc = acc + b_ref[...]                      # (cout,1) broadcast
            if relu:
                acc = jnp.maximum(acc, 0.0)
                for tb in range(TB):
                    base = tb * FLAT
                    # write back only the HW valid columns so the zero halo
                    # around each image stays zero
                    x_scr[0:cout, base + PAD:base + PAD + HW] = \
                        acc[:, tb * HWp:tb * HWp + HW]
            else:
                logits = acc                            # (n_classes, TB*HWp)

        if use_softmax:
            m = logits[0:1, :]
            for c in range(1, n_classes):
                m = jnp.maximum(m, logits[c:c + 1, :])
            e = jnp.exp(logits - m)
            s = e[0:1, :]
            for c in range(1, n_classes):
                s = s + e[c:c + 1, :]
            out = e / s                                 # exact normalisation
        else:
            out = logits
        for tb in range(TB):
            out_ref[tb] = out[:, tb * HWp:(tb + 1) * HWp].astype(out_ref.dtype)

    return kernel


def _choose_tb(B, HWp, ROWS, FLAT, KKC_MAX, C, n_classes,
               target_lanes=2048, vmem_budget=24 * 1024 * 1024):
    """Pick the per-step batch tile: widen MXU N, keep >=2 grid steps,
    stay under a conservative VMEM budget, avoid padded batch waste."""
    tb = max(1, min(B, max(1, target_lanes // HWp)))

    def scratch_bytes(t):
        return (ROWS * t * FLAT * 4 + KKC_MAX * t * HWp * 2 +
                2 * t * C * HWp * 4 + 2 * t * n_classes * HWp * 4)

    while tb > 1 and scratch_bytes(tb) > vmem_budget:
        tb -= 1
    while tb > 1 and -(-B // tb) < 2:       # keep both v7x TCs busy
        tb -= 1
    while tb > 1 and B % tb != 0:           # prefer divisors of B
        tb -= 1
    return tb


def pionono_head_apply(feature_map, z, params, *, head_kernelsize,
                       head_dilation, use_softmax=True, tile_batch=None):
    """feature_map: (B, C, H, W) NCHW; z: (B, L).  Returns (B, ncls, H, W)."""
    B, C, H, W = feature_map.shape
    L = z.shape[1]
    K, D = head_kernelsize, head_dilation
    HW = H * W
    HWp = _round_up(HW, 128)          # lane-dense (unmasked vst) everywhere
    n_layers = len(params)
    n_classes = params[-1][0].shape[-1]

    # channel-chain sanity
    assert params[0][0].shape[2] == C + L
    for i in range(n_layers - 1):
        assert params[i][0].shape[3] == params[i + 1][0].shape[2]
    # Note: C % 8 == 0 keeps the feature-map / z sublane stores tile aligned
    # (true for this module, C=16); other C stays correct but slower.

    layer_cfg = []
    for i, (w, _) in enumerate(params):
        kh, kw, cin, cout = w.shape
        assert kh == K and kw == K
        cin_pad = _round_up(cin, 16)   # bf16 sublane tile = 16 rows
        layer_cfg.append((cin, cin_pad, cout, i < n_layers - 1))

    P, PAD, FLAT, ROWS, KKC_MAX = _geometry(W, HWp, K, D, layer_cfg)

    TB = tile_batch if tile_batch is not None else _choose_tb(
        B, HWp, ROWS, FLAT, KKC_MAX, C, n_classes)
    G = -(-B // TB)
    B_pad = G * TB

    # flatten / pad weights: (cout, K*K*cin_pad) bf16, (cout, 1) f32 bias
    flat_params = []
    in_specs = [pl.BlockSpec((TB, C, HWp), lambda g, zr: (g, 0, 0))]
    for (w, bias), (cin, cin_pad, cout, _) in zip(params, layer_cfg):
        w_p = jnp.zeros((K, K, cin_pad, cout), jnp.float32)
        w_p = w_p.at[:, :, :cin, :].set(w.astype(jnp.float32))
        # column order (ky, kx, cin_pad) matches the im2col row order
        w_flat = jnp.transpose(w_p, (3, 0, 1, 2)).reshape(
            cout, K * K * cin_pad).astype(jnp.bfloat16)
        b2 = bias.reshape(cout, 1).astype(jnp.float32)
        flat_params += [w_flat, b2]
        in_specs += [pl.BlockSpec(w_flat.shape, lambda g, zr: (0, 0)),
                     pl.BlockSpec(b2.shape, lambda g, zr: (0, 0))]

    kernel = _make_pionono_kernel(H, W, HW, HWp, C, L, K, D, TB,
                                  layer_cfg, n_classes, use_softmax)

    # host-side lane / batch padding (cheap, keeps all stores unmasked)
    fm_flat = feature_map.reshape(B, C, HW).astype(jnp.float32)
    fm_flat = jnp.pad(fm_flat, ((0, B_pad - B), (0, 0), (0, HWp - HW)))
    z2d = jnp.pad(z.astype(jnp.float32), ((0, B_pad - B), (0, 0)))

    out_shape = jax.ShapeDtypeStruct((B_pad, n_classes, HWp), jnp.float32)
    out_spec = pl.BlockSpec((TB, n_classes, HWp), lambda g, zr: (g, 0, 0))

    scratch_shapes = [
        pltpu.VMEM((ROWS, TB * FLAT), jnp.float32),    # flat-padded activ.
        pltpu.VMEM((KKC_MAX, TB * HWp), jnp.bfloat16), # im2col matrix
    ]

    # VMEM budget: scratch + double-buffered in/out blocks + weights (x2 for
    # headroom), floored / capped to stay valid on every generation.
    scratch_bytes = ROWS * TB * FLAT * 4 + KKC_MAX * TB * HWp * 2
    block_bytes = 2 * TB * C * HWp * 4 + 2 * TB * n_classes * HWp * 4
    weight_bytes = 2 * sum(int(p.size) * p.dtype.itemsize for p in flat_params)
    vmem_limit = int(min(64 * 1024 * 1024,
                         max(16 * 1024 * 1024,
                             2 * (scratch_bytes + block_bytes + weight_bytes))))

    grid_spec = pltpu.PrefetchScalarGridSpec(
        num_scalar_prefetch=1,            # z lands in SMEM before the grid
        grid=(G,),
        in_specs=in_specs,
        out_specs=out_spec,
        scratch_shapes=scratch_shapes)

    y = pl.pallas_call(
        kernel,
        out_shape=out_shape,
        grid_spec=grid_spec,
        compiler_params=pltpu.CompilerParams(
            dimension_semantics=("parallel",),
            vmem_limit_bytes=vmem_limit),
    )(z2d, fm_flat, *flat_params)

    # drop batch / lane padding, reshape back to NCHW (free, contiguous)
    return y[:B, :, :HW].reshape(B, n_classes, H, W)


def init_pionono_params(key, num_filters_last_layer, latent_dim, num_classes,
                        no_convs_fcomb, k):
    """Xavier-uniform weights (HWIO), zero biases — matches initialize_weights."""
    params = []
    cins = [num_filters_last_layer + latent_dim] + \
           [num_filters_last_layer] * (no_convs_fcomb - 2)
    for cin in cins:
        cout = num_filters_last_layer
        key, sub = jax.random.split(key)
        bound = math.sqrt(6.0 / (cin * k * k + cout * k * k))
        w = jax.random.uniform(sub, (k, k, cin, cout), jnp.float32, -bound, bound)
        params.append((w, jnp.zeros((cout,), jnp.float32)))
    key, sub = jax.random.split(key)
    cin, cout = num_filters_last_layer, num_classes
    bound = math.sqrt(6.0 / (cin * k * k + cout * k * k))
    wl = jax.random.uniform(sub, (k, k, cin, cout), jnp.float32, -bound, bound)
    params.append((wl, jnp.zeros((cout,), jnp.float32)))
    return params


def pionono_head_reference(feature_map, z, params, *, head_kernelsize,
                           head_dilation, use_softmax=True):
    """Pure-JAX reference (XLA conv) mirroring the PyTorch forward."""
    B, C, H, W = feature_map.shape
    L = z.shape[1]
    zt = jnp.broadcast_to(z[:, :, None, None], (B, L, H, W))
    x = jnp.concatenate([feature_map, zt], axis=1)            # NCHW concat
    x = jnp.transpose(x, (0, 2, 3, 1)).astype(jnp.float32)    # -> NHWC
    D = head_dilation
    for i, (w, bias) in enumerate(params):
        x = lax.conv_general_dilated(
            x, w.astype(jnp.float32), window_strides=(1, 1), padding="SAME",
            rhs_dilation=(D, D),
            dimension_numbers=("NHWC", "HWIO", "NHWC"),
            precision=lax.Precision.HIGHEST) + bias.reshape(1, 1, 1, -1)
        if i < len(params) - 1:
            x = jnp.maximum(x, 0.0)
    if use_softmax:
        x = jax.nn.softmax(x, axis=-1)
    return jnp.transpose(x, (0, 3, 1, 2))                     # back to NCHW


if __name__ == "__main__":
    # Head config consistent with PiononoLoss (num_filters=16, latent_dim=8,
    # num_classes=2, no_convs_fcomb=3); K=3 exercises the full im2col path.
    num_filters_last_layer = 16
    latent_dim = 8
    num_classes = 2
    no_convs_fcomb = 3
    head_kernelsize = 3
    head_dilation = 1

    B, H, W = 4, 16, 16

    key = jax.random.PRNGKey(0)
    k_fm, k_z, k_p = jax.random.split(key, 3)
    feature_map = jax.random.normal(
        k_fm, (B, num_filters_last_layer, H, W), jnp.float32)  # NCHW (torch)
    z = jax.random.normal(k_z, (B, latent_dim), jnp.float32)

    params = init_pionono_params(k_p, num_filters_last_layer, latent_dim,
                                 num_classes, no_convs_fcomb, head_kernelsize)

    y = pionono_head_apply(feature_map, z, params,
                           head_kernelsize=head_kernelsize,
                           head_dilation=head_dilation,
                           use_softmax=True)
    y = jax.block_until_ready(y)

    y_ref = pionono_head_reference(feature_map, z, params,
                                   head_kernelsize=head_kernelsize,
                                   head_dilation=head_dilation,
                                   use_softmax=True)
    y_ref = jax.block_until_ready(y_ref)

    assert y.shape == (B, num_classes, H, W)
    # exact-divide softmax: per-pixel class probabilities sum to 1
    assert bool(jnp.allclose(jnp.sum(y, axis=1), 1.0, atol=1e-5))
    # bf16 MXU operands (f32 accumulation) vs f32 HIGHEST-precision reference
    assert bool(jnp.allclose(y, y_ref, atol=2e-2, rtol=2e-2)), "mismatch vs reference"

    print("KERNEL_OK")
</pallas_src>

<mosaic_0001>
module attributes {stable_mosaic.version = 11 : i64} {
  func.func @kernel(%arg0: i32, %arg1: memref<4x8xf32, #tpu.memory_space<smem>>, %arg2: memref<2x16x256xf32, #tpu.memory_space<vmem>>, %arg3: memref<16x288xbf16, #tpu.memory_space<vmem>>, %arg4: memref<16x1xf32, #tpu.memory_space<vmem>>, %arg5: memref<16x144xbf16, #tpu.memory_space<vmem>>, %arg6: memref<16x1xf32, #tpu.memory_space<vmem>>, %arg7: memref<2x144xbf16, #tpu.memory_space<vmem>>, %arg8: memref<2x1xf32, #tpu.memory_space<vmem>>, %arg9: memref<2x2x256xf32, #tpu.memory_space<vmem>>, %arg10: memref<32x1024xf32, #tpu.memory_space<vmem>>, %arg11: memref<288x512xbf16, #tpu.memory_space<vmem>>) attributes {dimension_semantics = [#tpu.dimension_semantics<parallel>], iteration_bounds = array<i64: 2>, scalar_prefetch = 1 : i64, scratch_operands = 2 : i64, tpu.core_type = #tpu.core_type<tc>, window_params = [{transform_indices = @transform_0, window_bounds = array<i64: 2, 16, 256>}, {pipeline_mode = #tpu.pipeline_mode<synchronous>, transform_indices = @transform_1, window_bounds = array<i64: 16, 288>}, {pipeline_mode = #tpu.pipeline_mode<synchronous>, transform_indices = @transform_2, window_bounds = array<i64: 16, 1>}, {pipeline_mode = #tpu.pipeline_mode<synchronous>, transform_indices = @transform_3, window_bounds = array<i64: 16, 144>}, {pipeline_mode = #tpu.pipeline_mode<synchronous>, transform_indices = @transform_4, window_bounds = array<i64: 16, 1>}, {pipeline_mode = #tpu.pipeline_mode<synchronous>, transform_indices = @transform_5, window_bounds = array<i64: 2, 144>}, {pipeline_mode = #tpu.pipeline_mode<synchronous>, transform_indices = @transform_6, window_bounds = array<i64: 2, 1>}, {transform_indices = @transform_7, window_bounds = array<i64: 2, 2, 256>}]} {
    %cst = arith.constant 0.000000e+00 : f32
    %0 = vector.broadcast %cst : f32 to vector<32x128xf32>
    %c0 = arith.constant 0 : index
    %c0_0 = arith.constant 0 : index
    %1 = vector.load %arg10[%c0, %c0_0] : memref<32x1024xf32, #tpu.memory_space<vmem>>, vector<32x128xf32>
    tpu.vector_store %arg10[%c0, %c0_0], %0 {strides = array<i32>} : memref<32x1024xf32, #tpu.memory_space<vmem>>, vector<32x128xf32>,
    %cst_1 = arith.constant 0.000000e+00 : f32
    %2 = vector.broadcast %cst_1 : f32 to vector<32x128xf32>
    %c0_2 = arith.constant 0 : index
    %c384 = arith.constant 384 : index
    %3 = vector.load %arg10[%c0_2, %c384] : memref<32x1024xf32, #tpu.memory_space<vmem>>, vector<32x128xf32>
    tpu.vector_store %arg10[%c0_2, %c384], %2 {strides = array<i32>} : memref<32x1024xf32, #tpu.memory_space<vmem>>, vector<32x128xf32>,
    %cst_3 = arith.constant 0.000000e+00 : f32
    %4 = vector.broadcast %cst_3 : f32 to vector<8x256xf32>
    %c24 = arith.constant 24 : index
    %c128 = arith.constant 128 : index
    %5 = vector.load %arg10[%c24, %c128] : memref<32x1024xf32, #tpu.memory_space<vmem>>, vector<8x256xf32>
    tpu.vector_store %arg10[%c24, %c128], %4 {strides = array<i32>} : memref<32x1024xf32, #tpu.memory_space<vmem>>, vector<8x256xf32>,
    %c0_4 = arith.constant 0 : index
    %c0_5 = arith.constant 0 : index
    %c0_6 = arith.constant 0 : index
    %6 = vector.load %arg2[%c0_4, %c0_5, %c0_6] : memref<2x16x256xf32, #tpu.memory_space<vmem>>, vector<1x16x256xf32>
    %7 = vector.shape_cast %6 : vector<1x16x256xf32> to vector<16x256xf32>
    %c0_7 = arith.constant 0 : index
    %c128_8 = arith.constant 128 : index
    %8 = vector.load %arg10[%c0_7, %c128_8] : memref<32x1024xf32, #tpu.memory_space<vmem>>, vector<16x256xf32>
    tpu.vector_store %arg10[%c0_7, %c128_8], %7 {strides = array<i32>} : memref<32x1024xf32, #tpu.memory_space<vmem>>, vector<16x256xf32>,
    %c2_i32 = arith.constant 2 : i32
    %9 = arith.muli %arg0, %c2_i32 : i32
    %c0_i32 = arith.constant 0 : i32
    %10 = arith.addi %9, %c0_i32 : i32
    %11 = arith.index_cast %10 : i32 to index
    %c0_9 = arith.constant 0 : index
    %12 = memref.load %arg1[%11, %c0_9] : memref<4x8xf32, #tpu.memory_space<smem>>
    %13 = vector.broadcast %12 : f32 to vector<1x256xf32>
    %c2_i32_10 = arith.constant 2 : i32
    %14 = arith.muli %arg0, %c2_i32_10 : i32
    %c0_i32_11 = arith.constant 0 : i32
    %15 = arith.addi %14, %c0_i32_11 : i32
    %16 = arith.index_cast %15 : i32 to index
    %c1 = arith.constant 1 : index
    %17 = memref.load %arg1[%16, %c1] : memref<4x8xf32, #tpu.memory_space<smem>>
    %18 = vector.broadcast %17 : f32 to vector<1x256xf32>
    %c2_i32_12 = arith.constant 2 : i32
    %19 = arith.muli %arg0, %c2_i32_12 : i32
    %c0_i32_13 = arith.constant 0 : i32
    %20 = arith.addi %19, %c0_i32_13 : i32
    %21 = arith.index_cast %20 : i32 to index
    %c2 = arith.constant 2 : index
    %22 = memref.load %arg1[%21, %c2] : memref<4x8xf32, #tpu.memory_space<smem>>
    %23 = vector.broadcast %22 : f32 to vector<1x256xf32>
    %c2_i32_14 = arith.constant 2 : i32
    %24 = arith.muli %arg0, %c2_i32_14 : i32
    %c0_i32_15 = arith.constant 0 : i32
    %25 = arith.addi %24, %c0_i32_15 : i32
    %26 = arith.index_cast %25 : i32 to index
    %c3 = arith.constant 3 : index
    %27 = memref.load %arg1[%26, %c3] : memref<4x8xf32, #tpu.memory_space<smem>>
    %28 = vector.broadcast %27 : f32 to vector<1x256xf32>
    %c2_i32_16 = arith.constant 2 : i32
    %29 = arith.muli %arg0, %c2_i32_16 : i32
    %c0_i32_17 = arith.constant 0 : i32
    %30 = arith.addi %29, %c0_i32_17 : i32
    %31 = arith.index_cast %30 : i32 to index
    %c4 = arith.constant 4 : index
    %32 = memref.load %arg1[%31, %c4] : memref<4x8xf32, #tpu.memory_space<smem>>
    %33 = vector.broadcast %32 : f32 to vector<1x256xf32>
    %c2_i32_18 = arith.constant 2 : i32
    %34 = arith.muli %arg0, %c2_i32_18 : i32
    %c0_i32_19 = arith.constant 0 : i32
    %35 = arith.addi %34, %c0_i32_19 : i32
    %36 = arith.index_cast %35 : i32 to index
    %c5 = arith.constant 5 : index
    %37 = memref.load %arg1[%36, %c5] : memref<4x8xf32, #tpu.memory_space<smem>>
    %38 = vector.broadcast %37 : f32 to vector<1x256xf32>
    %c2_i32_20 = arith.constant 2 : i32
    %39 = arith.muli %arg0, %c2_i32_20 : i32
    %c0_i32_21 = arith.constant 0 : i32
    %40 = arith.addi %39, %c0_i32_21 : i32
    %41 = arith.index_cast %40 : i32 to index
    %c6 = arith.constant 6 : index
    %42 = memref.load %arg1[%41, %c6] : memref<4x8xf32, #tpu.memory_space<smem>>
    %43 = vector.broadcast %42 : f32 to vector<1x256xf32>
    %c2_i32_22 = arith.constant 2 : i32
    %44 = arith.muli %arg0, %c2_i32_22 : i32
    %c0_i32_23 = arith.constant 0 : i32
    %45 = arith.addi %44, %c0_i32_23 : i32
    %46 = arith.index_cast %45 : i32 to index
    %c7 = arith.constant 7 : index
    %47 = memref.load %arg1[%46, %c7] : memref<4x8xf32, #tpu.memory_space<smem>>
    %48 = vector.broadcast %47 : f32 to vector<1x256xf32>
    %49 = tpu.concatenate %13, %18, %23, %28, %33, %38, %43, %48 in 0 : vector<1x256xf32>, vector<1x256xf32>, vector<1x256xf32>, vector<1x256xf32>, vector<1x256xf32>, vector<1x256xf32>, vector<1x256xf32>, vector<1x256xf32> -> vector<8x256xf32>
    %c16 = arith.constant 16 : index
    %c128_24 = arith.constant 128 : index
    %50 = vector.load %arg10[%c16, %c128_24] : memref<32x1024xf32, #tpu.memory_space<vmem>>, vector<8x256xf32>
    tpu.vector_store %arg10[%c16, %c128_24], %49 {strides = array<i32>} : memref<32x1024xf32, #tpu.memory_space<vmem>>, vector<8x256xf32>,
    %cst_25 = arith.constant 0.000000e+00 : f32
    %51 = vector.broadcast %cst_25 : f32 to vector<32x128xf32>
    %c0_26 = arith.constant 0 : index
    %c512 = arith.constant 512 : index
    %52 = vector.load %arg10[%c0_26, %c512] : memref<32x1024xf32, #tpu.memory_space<vmem>>, vector<32x128xf32>
    tpu.vector_store %arg10[%c0_26, %c512], %51 {strides = array<i32>} : memref<32x1024xf32, #tpu.memory_space<vmem>>, vector<32x128xf32>,
    %cst_27 = arith.constant 0.000000e+00 : f32
    %53 = vector.broadcast %cst_27 : f32 to vector<32x128xf32>
    %c0_28 = arith.constant 0 : index
    %c896 = arith.constant 896 : index
    %54 = vector.load %arg10[%c0_28, %c896] : memref<32x1024xf32, #tpu.memory_space<vmem>>, vector<32x128xf32>
    tpu.vector_store %arg10[%c0_28, %c896], %53 {strides = array<i32>} : memref<32x1024xf32, #tpu.memory_space<vmem>>, vector<32x128xf32>,
    %cst_29 = arith.constant 0.000000e+00 : f32
    %55 = vector.broadcast %cst_29 : f32 to vector<8x256xf32>
    %c24_30 = arith.constant 24 : index
    %c640 = arith.constant 640 : index
    %56 = vector.load %arg10[%c24_30, %c640] : memref<32x1024xf32, #tpu.memory_space<vmem>>, vector<8x256xf32>
    tpu.vector_store %arg10[%c24_30, %c640], %55 {strides = array<i32>} : memref<32x1024xf32, #tpu.memory_space<vmem>>, vector<8x256xf32>,
    %c1_31 = arith.constant 1 : index
    %c0_32 = arith.constant 0 : index
    %c0_33 = arith.constant 0 : index
    %57 = vector.load %arg2[%c1_31, %c0_32, %c0_33] : memref<2x16x256xf32, #tpu.memory_space<vmem>>, vector<1x16x256xf32>
    %58 = vector.shape_cast %57 : vector<1x16x256xf32> to vector<16x256xf32>
    %c0_34 = arith.constant 0 : index
    %c640_35 = arith.constant 640 : index
    %59 = vector.load %arg10[%c0_34, %c640_35] : memref<32x1024xf32, #tpu.memory_space<vmem>>, vector<16x256xf32>
    tpu.vector_store %arg10[%c0_34, %c640_35], %58 {strides = array<i32>} : memref<32x1024xf32, #tpu.memory_space<vmem>>, vector<16x256xf32>,
    %c2_i32_36 = arith.constant 2 : i32
    %60 = arith.muli %arg0, %c2_i32_36 : i32
    %c1_i32 = arith.constant 1 : i32
    %61 = arith.addi %60, %c1_i32 : i32
    %62 = arith.index_cast %61 : i32 to index
    %c0_37 = arith.constant 0 : index
    %63 = memref.load %arg1[%62, %c0_37] : memref<4x8xf32, #tpu.memory_space<smem>>
    %64 = vector.broadcast %63 : f32 to vector<1x256xf32>
    %c2_i32_38 = arith.constant 2 : i32
    %65 = arith.muli %arg0, %c2_i32_38 : i32
    %c1_i32_39 = arith.constant 1 : i32
    %66 = arith.addi %65, %c1_i32_39 : i32
    %67 = arith.index_cast %66 : i32 to index
    %c1_40 = arith.constant 1 : index
    %68 = memref.load %arg1[%67, %c1_40] : memref<4x8xf32, #tpu.memory_space<smem>>
    %69 = vector.broadcast %68 : f32 to vector<1x256xf32>
    %c2_i32_41 = arith.constant 2 : i32
    %70 = arith.muli %arg0, %c2_i32_41 : i32
    %c1_i32_42 = arith.constant 1 : i32
    %71 = arith.addi %70, %c1_i32_42 : i32
    %72 = arith.index_cast %71 : i32 to index
    %c2_43 = arith.constant 2 : index
    %73 = memref.load %arg1[%72, %c2_43] : memref<4x8xf32, #tpu.memory_space<smem>>
    %74 = vector.broadcast %73 : f32 to vector<1x256xf32>
    %c2_i32_44 = arith.constant 2 : i32
    %75 = arith.muli %arg0, %c2_i32_44 : i32
    %c1_i32_45 = arith.constant 1 : i32
    %76 = arith.addi %75, %c1_i32_45 : i32
    %77 = arith.index_cast %76 : i32 to index
    %c3_46 = arith.constant 3 : index
    %78 = memref.load %arg1[%77, %c3_46] : memref<4x8xf32, #tpu.memory_space<smem>>
    %79 = vector.broadcast %78 : f32 to vector<1x256xf32>
    %c2_i32_47 = arith.constant 2 : i32
    %80 = arith.muli %arg0, %c2_i32_47 : i32
    %c1_i32_48 = arith.constant 1 : i32
    %81 = arith.addi %80, %c1_i32_48 : i32
    %82 = arith.index_cast %81 : i32 to index
    %c4_49 = arith.constant 4 : index
    %83 = memref.load %arg1[%82, %c4_49] : memref<4x8xf32, #tpu.memory_space<smem>>
    %84 = vector.broadcast %83 : f32 to vector<1x256xf32>
    %c2_i32_50 = arith.constant 2 : i32
    %85 = arith.muli %arg0, %c2_i32_50 : i32
    %c1_i32_51 = arith.constant 1 : i32
    %86 = arith.addi %85, %c1_i32_51 : i32
    %87 = arith.index_cast %86 : i32 to index
    %c5_52 = arith.constant 5 : index
    %88 = memref.load %arg1[%87, %c5_52] : memref<4x8xf32, #tpu.memory_space<smem>>
    %89 = vector.broadcast %88 : f32 to vector<1x256xf32>
    %c2_i32_53 = arith.constant 2 : i32
    %90 = arith.muli %arg0, %c2_i32_53 : i32
    %c1_i32_54 = arith.constant 1 : i32
    %91 = arith.addi %90, %c1_i32_54 : i32
    %92 = arith.index_cast %91 : i32 to index
    %c6_55 = arith.constant 6 : index
    %93 = memref.load %arg1[%92, %c6_55] : memref<4x8xf32, #tpu.memory_space<smem>>
    %94 = vector.broadcast %93 : f32 to vector<1x256xf32>
    %c2_i32_56 = arith.constant 2 : i32
    %95 = arith.muli %arg0, %c2_i32_56 : i32
    %c1_i32_57 = arith.constant 1 : i32
    %96 = arith.addi %95, %c1_i32_57 : i32
    %97 = arith.index_cast %96 : i32 to index
    %c7_58 = arith.constant 7 : index
    %98 = memref.load %arg1[%97, %c7_58] : memref<4x8xf32, #tpu.memory_space<smem>>
    %99 = vector.broadcast %98 : f32 to vector<1x256xf32>
    %100 = tpu.concatenate %64, %69, %74, %79, %84, %89, %94, %99 in 0 : vector<1x256xf32>, vector<1x256xf32>, vector<1x256xf32>, vector<1x256xf32>, vector<1x256xf32>, vector<1x256xf32>, vector<1x256xf32>, vector<1x256xf32> -> vector<8x256xf32>
    %c16_59 = arith.constant 16 : index
    %c640_60 = arith.constant 640 : index
    %101 = vector.load %arg10[%c16_59, %c640_60] : memref<32x1024xf32, #tpu.memory_space<vmem>>, vector<8x256xf32>
    tpu.vector_store %arg10[%c16_59, %c640_60], %100 {strides = array<i32>} : memref<32x1024xf32, #tpu.memory_space<vmem>>, vector<8x256xf32>,
    %102 = tpu.iota {dimensions = array<i32: 1>} : vector<1x256xi32>
    %c16_i32 = arith.constant 16 : i32
    %c0_i32_61 = arith.constant 0 : i32
    %103 = arith.cmpi eq, %c16_i32, %c0_i32_61 : i32
    %c1_i32_62 = arith.constant 1 : i32
    %104 = arith.select %103, %c1_i32_62, %c16_i32 : i32
    %105 = vector.broadcast %104 : i32 to vector<1x256xi32>
    %106 = arith.remsi %102, %105 : vector<1x256xi32>
    %c0_i32_63 = arith.constant 0 : i32
    %107 = vector.broadcast %c0_i32_63 : i32 to vector<1x256xi32>
    %108 = arith.cmpi ne, %106, %107 : vector<1x256xi32>
    %c0_i32_64 = arith.constant 0 : i32
    %109 = vector.broadcast %c0_i32_64 : i32 to vector<1x256xi32>
    %110 = arith.cmpi slt, %106, %109 : vector<1x256xi32>
    %c0_i32_65 = arith.constant 0 : i32
    %111 = arith.cmpi slt, %104, %c0_i32_65 : i32
    %112 = vector.broadcast %111 : i1 to vector<1x256xi1>
    %113 = vector.broadcast %112 : vector<1x256xi1> to vector<1x256xi1>
    %114 = arith.xori %110, %113 : vector<1x256xi1>
    %115 = arith.andi %114, %108 : vector<1x256xi1>
    %116 = vector.broadcast %104 : i32 to vector<1x256xi32>
    %117 = arith.addi %106, %116 : vector<1x256xi32>
    %118 = arith.select %115, %117, %106 : vector<1x256xi1>, vector<1x256xi32>
    %c-1_i32 = arith.constant -1 : i32
    %119 = vector.broadcast %c-1_i32 : i32 to vector<1x256xi32>
    %120 = arith.addi %118, %119 : vector<1x256xi32>
    %c0_i32_66 = arith.constant 0 : i32
    %121 = vector.broadcast %c0_i32_66 : i32 to vector<1x256xi32>
    %122 = arith.cmpi sge, %120, %121 : vector<1x256xi32>
    %c-1_i32_67 = arith.constant -1 : i32
    %123 = vector.broadcast %c-1_i32_67 : i32 to vector<1x256xi32>
    %124 = arith.addi %118, %123 : vector<1x256xi32>
    %c16_i32_68 = arith.constant 16 : i32
    %125 = vector.broadcast %c16_i32_68 : i32 to vector<1x256xi32>
    %126 = arith.cmpi slt, %124, %125 : vector<1x256xi32>
    %127 = arith.andi %122, %126 : vector<1x256xi1>
    %c1_i32_69 = arith.constant 1 : i32
    %128 = vector.broadcast %c1_i32_69 : i32 to vector<1x256xi32>
    %129 = arith.addi %118, %128 : vector<1x256xi32>
    %c0_i32_70 = arith.constant 0 : i32
    %130 = vector.broadcast %c0_i32_70 : i32 to vector<1x256xi32>
    %131 = arith.cmpi sge, %129, %130 : vector<1x256xi32>
    %c1_i32_71 = arith.constant 1 : i32
    %132 = vector.broadcast %c1_i32_71 : i32 to vector<1x256xi32>
    %133 = arith.addi %118, %132 : vector<1x256xi32>
    %c16_i32_72 = arith.constant 16 : i32
    %134 = vector.broadcast %c16_i32_72 : i32 to vector<1x256xi32>
    %135 = arith.cmpi slt, %133, %134 : vector<1x256xi32>
    %136 = arith.andi %131, %135 : vector<1x256xi1>
    %c0_73 = arith.constant 0 : index
    %c111 = arith.constant 111 : index
    %137 = vector.load %arg10[%c0_73, %c111] : memref<32x1024xf32, #tpu.memory_space<vmem>>, vector<32x256xf32>
    %cst_74 = arith.constant 0.000000e+00 : f32
    %138 = vector.shape_cast %127 : vector<1x256xi1> to vector<1x256xi1>
    %139 = vector.broadcast %138 : vector<1x256xi1> to vector<32x256xi1>
    %140 = vector.broadcast %cst_74 : f32 to vector<32x256xf32>
    %141 = arith.select %139, %137, %140 : vector<32x256xi1>, vector<32x256xf32>
    %142 = arith.truncf %141 : vector<32x256xf32> to vector<32x256xbf16>
    %c0_75 = arith.constant 0 : index
    %c0_76 = arith.constant 0 : index
    %143 = vector.load %arg11[%c0_75, %c0_76] : memref<288x512xbf16, #tpu.memory_space<vmem>>, vector<32x256xbf16>
    tpu.vector_store %arg11[%c0_75, %c0_76], %142 {strides = array<i32>} : memref<288x512xbf16, #tpu.memory_space<vmem>>, vector<32x256xbf16>,
    %c0_77 = arith.constant 0 : index
    %c623 = arith.constant 623 : index
    %144 = vector.load %arg10[%c0_77, %c623] : memref<32x1024xf32, #tpu.memory_space<vmem>>, vector<32x256xf32>
    %cst_78 = arith.constant 0.000000e+00 : f32
    %145 = vector.shape_cast %127 : vector<1x256xi1> to vector<1x256xi1>
    %146 = vector.broadcast %145 : vector<1x256xi1> to vector<32x256xi1>
    %147 = vector.broadcast %cst_78 : f32 to vector<32x256xf32>
    %148 = arith.select %146, %144, %147 : vector<32x256xi1>, vector<32x256xf32>
    %149 = arith.truncf %148 : vector<32x256xf32> to vector<32x256xbf16>
    %c0_79 = arith.constant 0 : index
    %c256 = arith.constant 256 : index
    %150 = vector.load %arg11[%c0_79, %c256] : memref<288x512xbf16, #tpu.memory_space<vmem>>, vector<32x256xbf16>
    tpu.vector_store %arg11[%c0_79, %c256], %149 {strides = array<i32>} : memref<288x512xbf16, #tpu.memory_space<vmem>>, vector<32x256xbf16>,
    %c0_80 = arith.constant 0 : index
    %c112 = arith.constant 112 : index
    %151 = vector.load %arg10[%c0_80, %c112] : memref<32x1024xf32, #tpu.memory_space<vmem>>, vector<32x256xf32>
    %152 = arith.truncf %151 : vector<32x256xf32> to vector<32x256xbf16>
    %c32 = arith.constant 32 : index
    %c0_81 = arith.constant 0 : index
    %153 = vector.load %arg11[%c32, %c0_81] : memref<288x512xbf16, #tpu.memory_space<vmem>>, vector<32x256xbf16>
    tpu.vector_store %arg11[%c32, %c0_81], %152 {strides = array<i32>} : memref<288x512xbf16, #tpu.memory_space<vmem>>, vector<32x256xbf16>,
    %c0_82 = arith.constant 0 : index
    %c624 = arith.constant 624 : index
    %154 = vector.load %arg10[%c0_82, %c624] : memref<32x1024xf32, #tpu.memory_space<vmem>>, vector<32x256xf32>
    %155 = arith.truncf %154 : vector<32x256xf32> to vector<32x256xbf16>
    %c32_83 = arith.constant 32 : index
    %c256_84 = arith.constant 256 : index
    %156 = vector.load %arg11[%c32_83, %c256_84] : memref<288x512xbf16, #tpu.memory_space<vmem>>, vector<32x256xbf16>
    tpu.vector_store %arg11[%c32_83, %c256_84], %155 {strides = array<i32>} : memref<288x512xbf16, #tpu.memory_space<vmem>>, vector<32x256xbf16>,
    %c0_85 = arith.constant 0 : index
    %c113 = arith.constant 113 : index
    %157 = vector.load %arg10[%c0_85, %c113] : memref<32x1024xf32, #tpu.memory_space<vmem>>, vector<32x256xf32>
    %cst_86 = arith.constant 0.000000e+00 : f32
    %158 = vector.shape_cast %136 : vector<1x256xi1> to vector<1x256xi1>
    %159 = vector.broadcast %158 : vector<1x256xi1> to vector<32x256xi1>
    %160 = vector.broadcast %cst_86 : f32 to vector<32x256xf32>
    %161 = arith.select %159, %157, %160 : vector<32x256xi1>, vector<32x256xf32>
    %162 = arith.truncf %161 : vector<32x256xf32> to vector<32x256xbf16>
    %c64 = arith.constant 64 : index
    %c0_87 = arith.constant 0 : index
    %163 = vector.load %arg11[%c64, %c0_87] : memref<288x512xbf16, #tpu.memory_space<vmem>>, vector<32x256xbf16>
    tpu.vector_store %arg11[%c64, %c0_87], %162 {strides = array<i32>} : memref<288x512xbf16, #tpu.memory_space<vmem>>, vector<32x256xbf16>,
    %c0_88 = arith.constant 0 : index
    %c625 = arith.constant 625 : index
    %164 = vector.load %arg10[%c0_88, %c625] : memref<32x1024xf32, #tpu.memory_space<vmem>>, vector<32x256xf32>
    %cst_89 = arith.constant 0.000000e+00 : f32
    %165 = vector.shape_cast %136 : vector<1x256xi1> to vector<1x256xi1>
    %166 = vector.broadcast %165 : vector<1x256xi1> to vector<32x256xi1>
    %167 = vector.broadcast %cst_89 : f32 to vector<32x256xf32>
    %168 = arith.select %166, %164, %167 : vector<32x256xi1>, vector<32x256xf32>
    %169 = arith.truncf %168 : vector<32x256xf32> to vector<32x256xbf16>
    %c64_90 = arith.constant 64 : index
    %c256_91 = arith.constant 256 : index
    %170 = vector.load %arg11[%c64_90, %c256_91] : memref<288x512xbf16, #tpu.memory_space<vmem>>, vector<32x256xbf16>
    tpu.vector_store %arg11[%c64_90, %c256_91], %169 {strides = array<i32>} : memref<288x512xbf16, #tpu.memory_space<vmem>>, vector<32x256xbf16>,
    %c0_92 = arith.constant 0 : index
    %c127 = arith.constant 127 : index
    %171 = vector.load %arg10[%c0_92, %c127] : memref<32x1024xf32, #tpu.memory_space<vmem>>, vector<32x256xf32>
    %cst_93 = arith.constant 0.000000e+00 : f32
    %172 = vector.shape_cast %127 : vector<1x256xi1> to vector<1x256xi1>
    %173 = vector.broadcast %172 : vector<1x256xi1> to vector<32x256xi1>
    %174 = vector.broadcast %cst_93 : f32 to vector<32x256xf32>
    %175 = arith.select %173, %171, %174 : vector<32x256xi1>, vector<32x256xf32>
    %176 = arith.truncf %175 : vector<32x256xf32> to vector<32x256xbf16>
    %c96 = arith.constant 96 : index
    %c0_94 = arith.constant 0 : index
    %177 = vector.load %arg11[%c96, %c0_94] : memref<288x512xbf16, #tpu.memory_space<vmem>>, vector<32x256xbf16>
    tpu.vector_store %arg11[%c96, %c0_94], %176 {strides = array<i32>} : memref<288x512xbf16, #tpu.memory_space<vmem>>, vector<32x256xbf16>,
    %c0_95 = arith.constant 0 : index
    %c639 = arith.constant 639 : index
    %178 = vector.load %arg10[%c0_95, %c639] : memref<32x1024xf32, #tpu.memory_space<vmem>>, vector<32x256xf32>
    %cst_96 = arith.constant 0.000000e+00 : f32
    %179 = vector.shape_cast %127 : vector<1x256xi1> to vector<1x256xi1>
    %180 = vector.broadcast %179 : vector<1x256xi1> to vector<32x256xi1>
    %181 = vector.broadcast %cst_96 : f32 to vector<32x256xf32>
    %182 = arith.select %180, %178, %181 : vector<32x256xi1>, vector<32x256xf32>
    %183 = arith.truncf %182 : vector<32x256xf32> to vector<32x256xbf16>
    %c96_97 = arith.constant 96 : index
    %c256_98 = arith.constant 256 : index
    %184 = vector.load %arg11[%c96_97, %c256_98] : memref<288x512xbf16, #tpu.memory_space<vmem>>, vector<32x256xbf16>
    tpu.vector_store %arg11[%c96_97, %c256_98], %183 {strides = array<i32>} : memref<288x512xbf16, #tpu.memory_space<vmem>>, vector<32x256xbf16>,
    %c0_99 = arith.constant 0 : index
    %c128_100 = arith.constant 128 : index
    %185 = vector.load %arg10[%c0_99, %c128_100] : memref<32x1024xf32, #tpu.memory_space<vmem>>, vector<32x256xf32>
    %186 = arith.truncf %185 : vector<32x256xf32> to vector<32x256xbf16>
    %c128_101 = arith.constant 128 : index
    %c0_102 = arith.constant 0 : index
    %187 = vector.load %arg11[%c128_101, %c0_102] : memref<288x512xbf16, #tpu.memory_space<vmem>>, vector<32x256xbf16>
    tpu.vector_store %arg11[%c128_101, %c0_102], %186 {strides = array<i32>} : memref<288x512xbf16, #tpu.memory_space<vmem>>, vector<32x256xbf16>,
    %c0_103 = arith.constant 0 : index
    %c640_104 = arith.constant 640 : index
    %188 = vector.load %arg10[%c0_103, %c640_104] : memref<32x1024xf32, #tpu.memory_space<vmem>>, vector<32x256xf32>
    %189 = arith.truncf %188 : vector<32x256xf32> to vector<32x256xbf16>
    %c128_105 = arith.constant 128 : index
    %c256_106 = arith.constant 256 : index
    %190 = vector.load %arg11[%c128_105, %c256_106] : memref<288x512xbf16, #tpu.memory_space<vmem>>, vector<32x256xbf16>
    tpu.vector_store %arg11[%c128_105, %c256_106], %189 {strides = array<i32>} : memref<288x512xbf16, #tpu.memory_space<vmem>>, vector<32x256xbf16>,
    %c0_107 = arith.constant 0 : index
    %c129 = arith.constant 129 : index
    %191 = vector.load %arg10[%c0_107, %c129] : memref<32x1024xf32, #tpu.memory_space<vmem>>, vector<32x256xf32>
    %cst_108 = arith.constant 0.000000e+00 : f32
    %192 = vector.shape_cast %136 : vector<1x256xi1> to vector<1x256xi1>
    %193 = vector.broadcast %192 : vector<1x256xi1> to vector<32x256xi1>
    %194 = vector.broadcast %cst_108 : f32 to vector<32x256xf32>
    %195 = arith.select %193, %191, %194 : vector<32x256xi1>, vector<32x256xf32>
    %196 = arith.truncf %195 : vector<32x256xf32> to vector<32x256xbf16>
    %c160 = arith.constant 160 : index
    %c0_109 = arith.constant 0 : index
    %197 = vector.load %arg11[%c160, %c0_109] : memref<288x512xbf16, #tpu.memory_space<vmem>>, vector<32x256xbf16>
    tpu.vector_store %arg11[%c160, %c0_109], %196 {strides = array<i32>} : memref<288x512xbf16, #tpu.memory_space<vmem>>, vector<32x256xbf16>,
    %c0_110 = arith.constant 0 : index
    %c641 = arith.constant 641 : index
    %198 = vector.load %arg10[%c0_110, %c641] : memref<32x1024xf32, #tpu.memory_space<vmem>>, vector<32x256xf32>
    %cst_111 = arith.constant 0.000000e+00 : f32
    %199 = vector.shape_cast %136 : vector<1x256xi1> to vector<1x256xi1>
    %200 = vector.broadcast %199 : vector<1x256xi1> to vector<32x256xi1>
    %201 = vector.broadcast %cst_111 : f32 to vector<32x256xf32>
    %202 = arith.select %200, %198, %201 : vector<32x256xi1>, vector<32x256xf32>
    %203 = arith.truncf %202 : vector<32x256xf32> to vector<32x256xbf16>
    %c160_112 = arith.constant 160 : index
    %c256_113 = arith.constant 256 : index
    %204 = vector.load %arg11[%c160_112, %c256_113] : memref<288x512xbf16, #tpu.memory_space<vmem>>, vector<32x256xbf16>
    tpu.vector_store %arg11[%c160_112, %c256_113], %203 {strides = array<i32>} : memref<288x512xbf16, #tpu.memory_space<vmem>>, vector<32x256xbf16>,
    %c0_114 = arith.constant 0 : index
    %c143 = arith.constant 143 : index
    %205 = vector.load %arg10[%c0_114, %c143] : memref<32x1024xf32, #tpu.memory_space<vmem>>, vector<32x256xf32>
    %cst_115 = arith.constant 0.000000e+00 : f32
    %206 = vector.shape_cast %127 : vector<1x256xi1> to vector<1x256xi1>
    %207 = vector.broadcast %206 : vector<1x256xi1> to vector<32x256xi1>
    %208 = vector.broadcast %cst_115 : f32 to vector<32x256xf32>
    %209 = arith.select %207, %205, %208 : vector<32x256xi1>, vector<32x256xf32>
    %210 = arith.truncf %209 : vector<32x256xf32> to vector<32x256xbf16>
    %c192 = arith.constant 192 : index
    %c0_116 = arith.constant 0 : index
    %211 = vector.load %arg11[%c192, %c0_116] : memref<288x512xbf16, #tpu.memory_space<vmem>>, vector<32x256xbf16>
    tpu.vector_store %arg11[%c192, %c0_116], %210 {strides = array<i32>} : memref<288x512xbf16, #tpu.memory_space<vmem>>, vector<32x256xbf16>,
    %c0_117 = arith.constant 0 : index
    %c655 = arith.constant 655 : index
    %212 = vector.load %arg10[%c0_117, %c655] : memref<32x1024xf32, #tpu.memory_space<vmem>>, vector<32x256xf32>
    %cst_118 = arith.constant 0.000000e+00 : f32
    %213 = vector.shape_cast %127 : vector<1x256xi1> to vector<1x256xi1>
    %214 = vector.broadcast %213 : vector<1x256xi1> to vector<32x256xi1>
    %215 = vector.broadcast %cst_118 : f32 to vector<32x256xf32>
    %216 = arith.select %214, %212, %215 : vector<32x256xi1>, vector<32x256xf32>
    %217 = arith.truncf %216 : vector<32x256xf32> to vector<32x256xbf16>
    %c192_119 = arith.constant 192 : index
    %c256_120 = arith.constant 256 : index
    %218 = vector.load %arg11[%c192_119, %c256_120] : memref<288x512xbf16, #tpu.memory_space<vmem>>, vector<32x256xbf16>
    tpu.vector_store %arg11[%c192_119, %c256_120], %217 {strides = array<i32>} : memref<288x512xbf16, #tpu.memory_space<vmem>>, vector<32x256xbf16>,
    %c0_121 = arith.constant 0 : index
    %c144 = arith.constant 144 : index
    %219 = vector.load %arg10[%c0_121, %c144] : memref<32x1024xf32, #tpu.memory_space<vmem>>, vector<32x256xf32>
    %220 = arith.truncf %219 : vector<32x256xf32> to vector<32x256xbf16>
    %c224 = arith.constant 224 : index
    %c0_122 = arith.constant 0 : index
    %221 = vector.load %arg11[%c224, %c0_122] : memref<288x512xbf16, #tpu.memory_space<vmem>>, vector<32x256xbf16>
    tpu.vector_store %arg11[%c224, %c0_122], %220 {strides = array<i32>} : memref<288x512xbf16, #tpu.memory_space<vmem>>, vector<32x256xbf16>,
    %c0_123 = arith.constant 0 : index
    %c656 = arith.constant 656 : index
    %222 = vector.load %arg10[%c0_123, %c656] : memref<32x1024xf32, #tpu.memory_space<vmem>>, vector<32x256xf32>
    %223 = arith.truncf %222 : vector<32x256xf32> to vector<32x256xbf16>
    %c224_124 = arith.constant 224 : index
    %c256_125 = arith.constant 256 : index
    %224 = vector.load %arg11[%c224_124, %c256_125] : memref<288x512xbf16, #tpu.memory_space<vmem>>, vector<32x256xbf16>
    tpu.vector_store %arg11[%c224_124, %c256_125], %223 {strides = array<i32>} : memref<288x512xbf16, #tpu.memory_space<vmem>>, vector<32x256xbf16>,
    %c0_126 = arith.constant 0 : index
    %c145 = arith.constant 145 : index
    %225 = vector.load %arg10[%c0_126, %c145] : memref<32x1024xf32, #tpu.memory_space<vmem>>, vector<32x256xf32>
    %cst_127 = arith.constant 0.000000e+00 : f32
    %226 = vector.shape_cast %136 : vector<1x256xi1> to vector<1x256xi1>
    %227 = vector.broadcast %226 : vector<1x256xi1> to vector<32x256xi1>
    %228 = vector.broadcast %cst_127 : f32 to vector<32x256xf32>
    %229 = arith.select %227, %225, %228 : vector<32x256xi1>, vector<32x256xf32>
    %230 = arith.truncf %229 : vector<32x256xf32> to vector<32x256xbf16>
    %c256_128 = arith.constant 256 : index
    %c0_129 = arith.constant 0 : index
    %231 = vector.load %arg11[%c256_128, %c0_129] : memref<288x512xbf16, #tpu.memory_space<vmem>>, vector<32x256xbf16>
    tpu.vector_store %arg11[%c256_128, %c0_129], %230 {strides = array<i32>} : memref<288x512xbf16, #tpu.memory_space<vmem>>, vector<32x256xbf16>,
    %c0_130 = arith.constant 0 : index
    %c657 = arith.constant 657 : index
    %232 = vector.load %arg10[%c0_130, %c657] : memref<32x1024xf32, #tpu.memory_space<vmem>>, vector<32x256xf32>
    %cst_131 = arith.constant 0.000000e+00 : f32
    %233 = vector.shape_cast %136 : vector<1x256xi1> to vector<1x256xi1>
    %234 = vector.broadcast %233 : vector<1x256xi1> to vector<32x256xi1>
    %235 = vector.broadcast %cst_131 : f32 to vector<32x256xf32>
    %236 = arith.select %234, %232, %235 : vector<32x256xi1>, vector<32x256xf32>
    %237 = arith.truncf %236 : vector<32x256xf32> to vector<32x256xbf16>
    %c256_132 = arith.constant 256 : index
    %c256_133 = arith.constant 256 : index
    %238 = vector.load %arg11[%c256_132, %c256_133] : memref<288x512xbf16, #tpu.memory_space<vmem>>, vector<32x256xbf16>
    tpu.vector_store %arg11[%c256_132, %c256_133], %237 {strides = array<i32>} : memref<288x512xbf16, #tpu.memory_space<vmem>>, vector<32x256xbf16>,
    %c0_134 = arith.constant 0 : index
    %c0_135 = arith.constant 0 : index
    %239 = vector.load %arg3[%c0_134, %c0_135] : memref<16x288xbf16, #tpu.memory_space<vmem>>, vector<16x288xbf16>
    %c0_136 = arith.constant 0 : index
    %c0_137 = arith.constant 0 : index
    %240 = vector.load %arg11[%c0_136, %c0_137] : memref<288x512xbf16, #tpu.memory_space<vmem>>, vector<288x512xbf16>
    %cst_138 = arith.constant dense<0.000000e+00> : vector<16x512xf32>
    %241 = tpu.matmul %239, %240, %cst_138 {dimension_numbers = #tpu.dot_dimension_numbers<[1], [0], [0], [1], [0, 0, 1, 1], [], []>} : vector<16x288xbf16>, vector<288x512xbf16>, vector<16x512xf32> -> vector<16x512xf32>
    %c0_139 = arith.constant 0 : index
    %c0_140 = arith.constant 0 : index
    %242 = vector.load %arg4[%c0_139, %c0_140] : memref<16x1xf32, #tpu.memory_space<vmem>>, vector<16x1xf32>
    %243 = vector.broadcast %242 : vector<16x1xf32> to vector<16x512xf32>
    %244 = arith.addf %241, %243 : vector<16x512xf32>
    %cst_141 = arith.constant 0.000000e+00 : f32
    %245 = vector.broadcast %cst_141 : f32 to vector<16x512xf32>
    %246 = arith.maximumf %244, %245 : vector<16x512xf32>
    %247 = vector.extract_strided_slice %246 {offsets = [0, 0], sizes = [16, 256], strides = [1, 1]} : vector<16x512xf32> to vector<16x256xf32>
    %c0_142 = arith.constant 0 : index
    %c128_143 = arith.constant 128 : index
    %248 = vector.load %arg10[%c0_142, %c128_143] : memref<32x1024xf32, #tpu.memory_space<vmem>>, vector<16x256xf32>
    tpu.vector_store %arg10[%c0_142, %c128_143], %247 {strides = array<i32>} : memref<32x1024xf32, #tpu.memory_space<vmem>>, vector<16x256xf32>,
    %249 = vector.extract_strided_slice %246 {offsets = [0, 256], sizes = [16, 256], strides = [1, 1]} : vector<16x512xf32> to vector<16x256xf32>
    %c0_144 = arith.constant 0 : index
    %c640_145 = arith.constant 640 : index
    %250 = vector.load %arg10[%c0_144, %c640_145] : memref<32x1024xf32, #tpu.memory_space<vmem>>, vector<16x256xf32>
    tpu.vector_store %arg10[%c0_144, %c640_145], %249 {strides = array<i32>} : memref<32x1024xf32, #tpu.memory_space<vmem>>, vector<16x256xf32>,
    %c0_146 = arith.constant 0 : index
    %c111_147 = arith.constant 111 : index
    %251 = vector.load %arg10[%c0_146, %c111_147] : memref<32x1024xf32, #tpu.memory_space<vmem>>, vector<16x256xf32>
    %cst_148 = arith.constant 0.000000e+00 : f32
    %252 = vector.shape_cast %127 : vector<1x256xi1> to vector<1x256xi1>
    %253 = vector.broadcast %252 : vector<1x256xi1> to vector<16x256xi1>
    %254 = vector.broadcast %cst_148 : f32 to vector<16x256xf32>
    %255 = arith.select %253, %251, %254 : vector<16x256xi1>, vector<16x256xf32>
    %256 = arith.truncf %255 : vector<16x256xf32> to vector<16x256xbf16>
    %c0_149 = arith.constant 0 : index
    %c0_150 = arith.constant 0 : index
    %257 = vector.load %arg11[%c0_149, %c0_150] : memref<288x512xbf16, #tpu.memory_space<vmem>>, vector<16x256xbf16>
    tpu.vector_store %arg11[%c0_149, %c0_150], %256 {strides = array<i32>} : memref<288x512xbf16, #tpu.memory_space<vmem>>, vector<16x256xbf16>,
    %c0_151 = arith.constant 0 : index
    %c623_152 = arith.constant 623 : index
    %258 = vector.load %arg10[%c0_151, %c623_152] : memref<32x1024xf32, #tpu.memory_space<vmem>>, vector<16x256xf32>
    %cst_153 = arith.constant 0.000000e+00 : f32
    %259 = vector.shape_cast %127 : vector<1x256xi1> to vector<1x256xi1>
    %260 = vector.broadcast %259 : vector<1x256xi1> to vector<16x256xi1>
    %261 = vector.broadcast %cst_153 : f32 to vector<16x256xf32>
    %262 = arith.select %260, %258, %261 : vector<16x256xi1>, vector<16x256xf32>
    %263 = arith.truncf %262 : vector<16x256xf32> to vector<16x256xbf16>
    %c0_154 = arith.constant 0 : index
    %c256_155 = arith.constant 256 : index
    %264 = vector.load %arg11[%c0_154, %c256_155] : memref<288x512xbf16, #tpu.memory_space<vmem>>, vector<16x256xbf16>
    tpu.vector_store %arg11[%c0_154, %c256_155], %263 {strides = array<i32>} : memref<288x512xbf16, #tpu.memory_space<vmem>>, vector<16x256xbf16>,
    %c0_156 = arith.constant 0 : index
    %c112_157 = arith.constant 112 : index
    %265 = vector.load %arg10[%c0_156, %c112_157] : memref<32x1024xf32, #tpu.memory_space<vmem>>, vector<16x256xf32>
    %266 = arith.truncf %265 : vector<16x256xf32> to vector<16x256xbf16>
    %c16_158 = arith.constant 16 : index
    %c0_159 = arith.constant 0 : index
    %267 = vector.load %arg11[%c16_158, %c0_159] : memref<288x512xbf16, #tpu.memory_space<vmem>>, vector<16x256xbf16>
    tpu.vector_store %arg11[%c16_158, %c0_159], %266 {strides = array<i32>} : memref<288x512xbf16, #tpu.memory_space<vmem>>, vector<16x256xbf16>,
    %c0_160 = arith.constant 0 : index
    %c624_161 = arith.constant 624 : index
    %268 = vector.load %arg10[%c0_160, %c624_161] : memref<32x1024xf32, #tpu.memory_space<vmem>>, vector<16x256xf32>
    %269 = arith.truncf %268 : vector<16x256xf32> to vector<16x256xbf16>
    %c16_162 = arith.constant 16 : index
    %c256_163 = arith.constant 256 : index
    %270 = vector.load %arg11[%c16_162, %c256_163] : memref<288x512xbf16, #tpu.memory_space<vmem>>, vector<16x256xbf16>
    tpu.vector_store %arg11[%c16_162, %c256_163], %269 {strides = array<i32>} : memref<288x512xbf16, #tpu.memory_space<vmem>>, vector<16x256xbf16>,
    %c0_164 = arith.constant 0 : index
    %c113_165 = arith.constant 113 : index
    %271 = vector.load %arg10[%c0_164, %c113_165] : memref<32x1024xf32, #tpu.memory_space<vmem>>, vector<16x256xf32>
    %cst_166 = arith.constant 0.000000e+00 : f32
    %272 = vector.shape_cast %136 : vector<1x256xi1> to vector<1x256xi1>
    %273 = vector.broadcast %272 : vector<1x256xi1> to vector<16x256xi1>
    %274 = vector.broadcast %cst_166 : f32 to vector<16x256xf32>
    %275 = arith.select %273, %271, %274 : vector<16x256xi1>, vector<16x256xf32>
    %276 = arith.truncf %275 : vector<16x256xf32> to vector<16x256xbf16>
    %c32_167 = arith.constant 32 : index
    %c0_168 = arith.constant 0 : index
    %277 = vector.load %arg11[%c32_167, %c0_168] : memref<288x512xbf16, #tpu.memory_space<vmem>>, vector<16x256xbf16>
    tpu.vector_store %arg11[%c32_167, %c0_168], %276 {strides = array<i32>} : memref<288x512xbf16, #tpu.memory_space<vmem>>, vector<16x256xbf16>,
    %c0_169 = arith.constant 0 : index
    %c625_170 = arith.constant 625 : index
    %278 = vector.load %arg10[%c0_169, %c625_170] : memref<32x1024xf32, #tpu.memory_space<vmem>>, vector<16x256xf32>
    %cst_171 = arith.constant 0.000000e+00 : f32
    %279 = vector.shape_cast %136 : vector<1x256xi1> to vector<1x256xi1>
    %280 = vector.broadcast %279 : vector<1x256xi1> to vector<16x256xi1>
    %281 = vector.broadcast %cst_171 : f32 to vector<16x256xf32>
    %282 = arith.select %280, %278, %281 : vector<16x256xi1>, vector<16x256xf32>
    %283 = arith.truncf %282 : vector<16x256xf32> to vector<16x256xbf16>
    %c32_172 = arith.constant 32 : index
    %c256_173 = arith.constant 256 : index
    %284 = vector.load %arg11[%c32_172, %c256_173] : memref<288x512xbf16, #tpu.memory_space<vmem>>, vector<16x256xbf16>
    tpu.vector_store %arg11[%c32_172, %c256_173], %283 {strides = array<i32>} : memref<288x512xbf16, #tpu.memory_space<vmem>>, vector<16x256xbf16>,
    %c0_174 = arith.constant 0 : index
    %c127_175 = arith.constant 127 : index
    %285 = vector.load %arg10[%c0_174, %c127_175] : memref<32x1024xf32, #tpu.memory_space<vmem>>, vector<16x256xf32>
    %cst_176 = arith.constant 0.000000e+00 : f32
    %286 = vector.shape_cast %127 : vector<1x256xi1> to vector<1x256xi1>
    %287 = vector.broadcast %286 : vector<1x256xi1> to vector<16x256xi1>
    %288 = vector.broadcast %cst_176 : f32 to vector<16x256xf32>
    %289 = arith.select %287, %285, %288 : vector<16x256xi1>, vector<16x256xf32>
    %290 = arith.truncf %289 : vector<16x256xf32> to vector<16x256xbf16>
    %c48 = arith.constant 48 : index
    %c0_177 = arith.constant 0 : index
    %291 = vector.load %arg11[%c48, %c0_177] : memref<288x512xbf16, #tpu.memory_space<vmem>>, vector<16x256xbf16>
    tpu.vector_store %arg11[%c48, %c0_177], %290 {strides = array<i32>} : memref<288x512xbf16, #tpu.memory_space<vmem>>, vector<16x256xbf16>,
    %c0_178 = arith.constant 0 : index
    %c639_179 = arith.constant 639 : index
    %292 = vector.load %arg10[%c0_178, %c639_179] : memref<32x1024xf32, #tpu.memory_space<vmem>>, vector<16x256xf32>
    %cst_180 = arith.constant 0.000000e+00 : f32
    %293 = vector.shape_cast %127 : vector<1x256xi1> to vector<1x256xi1>
    %294 = vector.broadcast %293 : vector<1x256xi1> to vector<16x256xi1>
    %295 = vector.broadcast %cst_180 : f32 to vector<16x256xf32>
    %296 = arith.select %294, %292, %295 : vector<16x256xi1>, vector<16x256xf32>
    %297 = arith.truncf %296 : vector<16x256xf32> to vector<16x256xbf16>
    %c48_181 = arith.constant 48 : index
    %c256_182 = arith.constant 256 : index
    %298 = vector.load %arg11[%c48_181, %c256_182] : memref<288x512xbf16, #tpu.memory_space<vmem>>, vector<16x256xbf16>
    tpu.vector_store %arg11[%c48_181, %c256_182], %297 {strides = array<i32>} : memref<288x512xbf16, #tpu.memory_space<vmem>>, vector<16x256xbf16>,
    %c0_183 = arith.constant 0 : index
    %c128_184 = arith.constant 128 : index
    %299 = vector.load %arg10[%c0_183, %c128_184] : memref<32x1024xf32, #tpu.memory_space<vmem>>, vector<16x256xf32>
    %300 = arith.truncf %299 : vector<16x256xf32> to vector<16x256xbf16>
    %c64_185 = arith.constant 64 : index
    %c0_186 = arith.constant 0 : index
    %301 = vector.load %arg11[%c64_185, %c0_186] : memref<288x512xbf16, #tpu.memory_space<vmem>>, vector<16x256xbf16>
    tpu.vector_store %arg11[%c64_185, %c0_186], %300 {strides = array<i32>} : memref<288x512xbf16, #tpu.memory_space<vmem>>, vector<16x256xbf16>,
    %c0_187 = arith.constant 0 : index
    %c640_188 = arith.constant 640 : index
    %302 = vector.load %arg10[%c0_187, %c640_188] : memref<32x1024xf32, #tpu.memory_space<vmem>>, vector<16x256xf32>
    %303 = arith.truncf %302 : vector<16x256xf32> to vector<16x256xbf16>
    %c64_189 = arith.constant 64 : index
    %c256_190 = arith.constant 256 : index
    %304 = vector.load %arg11[%c64_189, %c256_190] : memref<288x512xbf16, #tpu.memory_space<vmem>>, vector<16x256xbf16>
    tpu.vector_store %arg11[%c64_189, %c256_190], %303 {strides = array<i32>} : memref<288x512xbf16, #tpu.memory_space<vmem>>, vector<16x256xbf16>,
    %c0_191 = arith.constant 0 : index
    %c129_192 = arith.constant 129 : index
    %305 = vector.load %arg10[%c0_191, %c129_192] : memref<32x1024xf32, #tpu.memory_space<vmem>>, vector<16x256xf32>
    %cst_193 = arith.constant 0.000000e+00 : f32
    %306 = vector.shape_cast %136 : vector<1x256xi1> to vector<1x256xi1>
    %307 = vector.broadcast %306 : vector<1x256xi1> to vector<16x256xi1>
    %308 = vector.broadcast %cst_193 : f32 to vector<16x256xf32>
    %309 = arith.select %307, %305, %308 : vector<16x256xi1>, vector<16x256xf32>
    %310 = arith.truncf %309 : vector<16x256xf32> to vector<16x256xbf16>
    %c80 = arith.constant 80 : index
    %c0_194 = arith.constant 0 : index
    %311 = vector.load %arg11[%c80, %c0_194] : memref<288x512xbf16, #tpu.memory_space<vmem>>, vector<16x256xbf16>
    tpu.vector_store %arg11[%c80, %c0_194], %310 {strides = array<i32>} : memref<288x512xbf16, #tpu.memory_space<vmem>>, vector<16x256xbf16>,
    %c0_195 = arith.constant 0 : index
    %c641_196 = arith.constant 641 : index
    %312 = vector.load %arg10[%c0_195, %c641_196] : memref<32x1024xf32, #tpu.memory_space<vmem>>, vector<16x256xf32>
    %cst_197 = arith.constant 0.000000e+00 : f32
    %313 = vector.shape_cast %136 : vector<1x256xi1> to vector<1x256xi1>
    %314 = vector.broadcast %313 : vector<1x256xi1> to vector<16x256xi1>
    %315 = vector.broadcast %cst_197 : f32 to vector<16x256xf32>
    %316 = arith.select %314, %312, %315 : vector<16x256xi1>, vector<16x256xf32>
    %317 = arith.truncf %316 : vector<16x256xf32> to vector<16x256xbf16>
    %c80_198 = arith.constant 80 : index
    %c256_199 = arith.constant 256 : index
    %318 = vector.load %arg11[%c80_198, %c256_199] : memref<288x512xbf16, #tpu.memory_space<vmem>>, vector<16x256xbf16>
    tpu.vector_store %arg11[%c80_198, %c256_199], %317 {strides = array<i32>} : memref<288x512xbf16, #tpu.memory_space<vmem>>, vector<16x256xbf16>,
    %c0_200 = arith.constant 0 : index
    %c143_201 = arith.constant 143 : index
    %319 = vector.load %arg10[%c0_200, %c143_201] : memref<32x1024xf32, #tpu.memory_space<vmem>>, vector<16x256xf32>
    %cst_202 = arith.constant 0.000000e+00 : f32
    %320 = vector.shape_cast %127 : vector<1x256xi1> to vector<1x256xi1>
    %321 = vector.broadcast %320 : vector<1x256xi1> to vector<16x256xi1>
    %322 = vector.broadcast %cst_202 : f32 to vector<16x256xf32>
    %323 = arith.select %321, %319, %322 : vector<16x256xi1>, vector<16x256xf32>
    %324 = arith.truncf %323 : vector<16x256xf32> to vector<16x256xbf16>
    %c96_203 = arith.constant 96 : index
    %c0_204 = arith.constant 0 : index
    %325 = vector.load %arg11[%c96_203, %c0_204] : memref<288x512xbf16, #tpu.memory_space<vmem>>, vector<16x256xbf16>
    tpu.vector_store %arg11[%c96_203, %c0_204], %324 {strides = array<i32>} : memref<288x512xbf16, #tpu.memory_space<vmem>>, vector<16x256xbf16>,
    %c0_205 = arith.constant 0 : index
    %c655_206 = arith.constant 655 : index
    %326 = vector.load %arg10[%c0_205, %c655_206] : memref<32x1024xf32, #tpu.memory_space<vmem>>, vector<16x256xf32>
    %cst_207 = arith.constant 0.000000e+00 : f32
    %327 = vector.shape_cast %127 : vector<1x256xi1> to vector<1x256xi1>
    %328 = vector.broadcast %327 : vector<1x256xi1> to vector<16x256xi1>
    %329 = vector.broadcast %cst_207 : f32 to vector<16x256xf32>
    %330 = arith.select %328, %326, %329 : vector<16x256xi1>, vector<16x256xf32>
    %331 = arith.truncf %330 : vector<16x256xf32> to vector<16x256xbf16>
    %c96_208 = arith.constant 96 : index
    %c256_209 = arith.constant 256 : index
    %332 = vector.load %arg11[%c96_208, %c256_209] : memref<288x512xbf16, #tpu.memory_space<vmem>>, vector<16x256xbf16>
    tpu.vector_store %arg11[%c96_208, %c256_209], %331 {strides = array<i32>} : memref<288x512xbf16, #tpu.memory_space<vmem>>, vector<16x256xbf16>,
    %c0_210 = arith.constant 0 : index
    %c144_211 = arith.constant 144 : index
    %333 = vector.load %arg10[%c0_210, %c144_211] : memref<32x1024xf32, #tpu.memory_space<vmem>>, vector<16x256xf32>
    %334 = arith.truncf %333 : vector<16x256xf32> to vector<16x256xbf16>
    %c112_212 = arith.constant 112 : index
    %c0_213 = arith.constant 0 : index
    %335 = vector.load %arg11[%c112_212, %c0_213] : memref<288x512xbf16, #tpu.memory_space<vmem>>, vector<16x256xbf16>
    tpu.vector_store %arg11[%c112_212, %c0_213], %334 {strides = array<i32>} : memref<288x512xbf16, #tpu.memory_space<vmem>>, vector<16x256xbf16>,
    %c0_214 = arith.constant 0 : index
    %c656_215 = arith.constant 656 : index
    %336 = vector.load %arg10[%c0_214, %c656_215] : memref<32x1024xf32, #tpu.memory_space<vmem>>, vector<16x256xf32>
    %337 = arith.truncf %336 : vector<16x256xf32> to vector<16x256xbf16>
    %c112_216 = arith.constant 112 : index
    %c256_217 = arith.constant 256 : index
    %338 = vector.load %arg11[%c112_216, %c256_217] : memref<288x512xbf16, #tpu.memory_space<vmem>>, vector<16x256xbf16>
    tpu.vector_store %arg11[%c112_216, %c256_217], %337 {strides = array<i32>} : memref<288x512xbf16, #tpu.memory_space<vmem>>, vector<16x256xbf16>,
    %c0_218 = arith.constant 0 : index
    %c145_219 = arith.constant 145 : index
    %339 = vector.load %arg10[%c0_218, %c145_219] : memref<32x1024xf32, #tpu.memory_space<vmem>>, vector<16x256xf32>
    %cst_220 = arith.constant 0.000000e+00 : f32
    %340 = vector.shape_cast %136 : vector<1x256xi1> to vector<1x256xi1>
    %341 = vector.broadcast %340 : vector<1x256xi1> to vector<16x256xi1>
    %342 = vector.broadcast %cst_220 : f32 to vector<16x256xf32>
    %343 = arith.select %341, %339, %342 : vector<16x256xi1>, vector<16x256xf32>
    %344 = arith.truncf %343 : vector<16x256xf32> to vector<16x256xbf16>
    %c128_221 = arith.constant 128 : index
    %c0_222 = arith.constant 0 : index
    %345 = vector.load %arg11[%c128_221, %c0_222] : memref<288x512xbf16, #tpu.memory_space<vmem>>, vector<16x256xbf16>
    tpu.vector_store %arg11[%c128_221, %c0_222], %344 {strides = array<i32>} : memref<288x512xbf16, #tpu.memory_space<vmem>>, vector<16x256xbf16>,
    %c0_223 = arith.constant 0 : index
    %c657_224 = arith.constant 657 : index
    %346 = vector.load %arg10[%c0_223, %c657_224] : memref<32x1024xf32, #tpu.memory_space<vmem>>, vector<16x256xf32>
    %cst_225 = arith.constant 0.000000e+00 : f32
    %347 = vector.shape_cast %136 : vector<1x256xi1> to vector<1x256xi1>
    %348 = vector.broadcast %347 : vector<1x256xi1> to vector<16x256xi1>
    %349 = vector.broadcast %cst_225 : f32 to vector<16x256xf32>
    %350 = arith.select %348, %346, %349 : vector<16x256xi1>, vector<16x256xf32>
    %351 = arith.truncf %350 : vector<16x256xf32> to vector<16x256xbf16>
    %c128_226 = arith.constant 128 : index
    %c256_227 = arith.constant 256 : index
    %352 = vector.load %arg11[%c128_226, %c256_227] : memref<288x512xbf16, #tpu.memory_space<vmem>>, vector<16x256xbf16>
    tpu.vector_store %arg11[%c128_226, %c256_227], %351 {strides = array<i32>} : memref<288x512xbf16, #tpu.memory_space<vmem>>, vector<16x256xbf16>,
    %c0_228 = arith.constant 0 : index
    %c0_229 = arith.constant 0 : index
    %353 = vector.load %arg5[%c0_228, %c0_229] : memref<16x144xbf16, #tpu.memory_space<vmem>>, vector<16x144xbf16>
    %c0_230 = arith.constant 0 : index
    %c0_231 = arith.constant 0 : index
    %354 = vector.load %arg11[%c0_230, %c0_231] : memref<288x512xbf16, #tpu.memory_space<vmem>>, vector<144x512xbf16>
    %cst_232 = arith.constant dense<0.000000e+00> : vector<16x512xf32>
    %355 = tpu.matmul %353, %354, %cst_232 {dimension_numbers = #tpu.dot_dimension_numbers<[1], [0], [0], [1], [0, 0, 1, 1], [], []>} : vector<16x144xbf16>, vector<144x512xbf16>, vector<16x512xf32> -> vector<16x512xf32>
    %c0_233 = arith.constant 0 : index
    %c0_234 = arith.constant 0 : index
    %356 = vector.load %arg6[%c0_233, %c0_234] : memref<16x1xf32, #tpu.memory_space<vmem>>, vector<16x1xf32>
    %357 = vector.broadcast %356 : vector<16x1xf32> to vector<16x512xf32>
    %358 = arith.addf %355, %357 : vector<16x512xf32>
    %cst_235 = arith.constant 0.000000e+00 : f32
    %359 = vector.broadcast %cst_235 : f32 to vector<16x512xf32>
    %360 = arith.maximumf %358, %359 : vector<16x512xf32>
    %361 = vector.extract_strided_slice %360 {offsets = [0, 0], sizes = [16, 256], strides = [1, 1]} : vector<16x512xf32> to vector<16x256xf32>
    %c0_236 = arith.constant 0 : index
    %c128_237 = arith.constant 128 : index
    %362 = vector.load %arg10[%c0_236, %c128_237] : memref<32x1024xf32, #tpu.memory_space<vmem>>, vector<16x256xf32>
    tpu.vector_store %arg10[%c0_236, %c128_237], %361 {strides = array<i32>} : memref<32x1024xf32, #tpu.memory_space<vmem>>, vector<16x256xf32>,
    %363 = vector.extract_strided_slice %360 {offsets = [0, 256], sizes = [16, 256], strides = [1, 1]} : vector<16x512xf32> to vector<16x256xf32>
    %c0_238 = arith.constant 0 : index
    %c640_239 = arith.constant 640 : index
    %364 = vector.load %arg10[%c0_238, %c640_239] : memref<32x1024xf32, #tpu.memory_space<vmem>>, vector<16x256xf32>
    tpu.vector_store %arg10[%c0_238, %c640_239], %363 {strides = array<i32>} : memref<32x1024xf32, #tpu.memory_space<vmem>>, vector<16x256xf32>,
    %c0_240 = arith.constant 0 : index
    %c111_241 = arith.constant 111 : index
    %365 = vector.load %arg10[%c0_240, %c111_241] : memref<32x1024xf32, #tpu.memory_space<vmem>>, vector<16x256xf32>
    %cst_242 = arith.constant 0.000000e+00 : f32
    %366 = vector.shape_cast %127 : vector<1x256xi1> to vector<1x256xi1>
    %367 = vector.broadcast %366 : vector<1x256xi1> to vector<16x256xi1>
    %368 = vector.broadcast %cst_242 : f32 to vector<16x256xf32>
    %369 = arith.select %367, %365, %368 : vector<16x256xi1>, vector<16x256xf32>
    %370 = arith.truncf %369 : vector<16x256xf32> to vector<16x256xbf16>
    %c0_243 = arith.constant 0 : index
    %c0_244 = arith.constant 0 : index
    %371 = vector.load %arg11[%c0_243, %c0_244] : memref<288x512xbf16, #tpu.memory_space<vmem>>, vector<16x256xbf16>
    tpu.vector_store %arg11[%c0_243, %c0_244], %370 {strides = array<i32>} : memref<288x512xbf16, #tpu.memory_space<vmem>>, vector<16x256xbf16>,
    %c0_245 = arith.constant 0 : index
    %c623_246 = arith.constant 623 : index
    %372 = vector.load %arg10[%c0_245, %c623_246] : memref<32x1024xf32, #tpu.memory_space<vmem>>, vector<16x256xf32>
    %cst_247 = arith.constant 0.000000e+00 : f32
    %373 = vector.shape_cast %127 : vector<1x256xi1> to vector<1x256xi1>
    %374 = vector.broadcast %373 : vector<1x256xi1> to vector<16x256xi1>
    %375 = vector.broadcast %cst_247 : f32 to vector<16x256xf32>
    %376 = arith.select %374, %372, %375 : vector<16x256xi1>, vector<16x256xf32>
    %377 = arith.truncf %376 : vector<16x256xf32> to vector<16x256xbf16>
    %c0_248 = arith.constant 0 : index
    %c256_249 = arith.constant 256 : index
    %378 = vector.load %arg11[%c0_248, %c256_249] : memref<288x512xbf16, #tpu.memory_space<vmem>>, vector<16x256xbf16>
    tpu.vector_store %arg11[%c0_248, %c256_249], %377 {strides = array<i32>} : memref<288x512xbf16, #tpu.memory_space<vmem>>, vector<16x256xbf16>,
    %c0_250 = arith.constant 0 : index
    %c112_251 = arith.constant 112 : index
    %379 = vector.load %arg10[%c0_250, %c112_251] : memref<32x1024xf32, #tpu.memory_space<vmem>>, vector<16x256xf32>
    %380 = arith.truncf %379 : vector<16x256xf32> to vector<16x256xbf16>
    %c16_252 = arith.constant 16 : index
    %c0_253 = arith.constant 0 : index
    %381 = vector.load %arg11[%c16_252, %c0_253] : memref<288x512xbf16, #tpu.memory_space<vmem>>, vector<16x256xbf16>
    tpu.vector_store %arg11[%c16_252, %c0_253], %380 {strides = array<i32>} : memref<288x512xbf16, #tpu.memory_space<vmem>>, vector<16x256xbf16>,
    %c0_254 = arith.constant 0 : index
    %c624_255 = arith.constant 624 : index
    %382 = vector.load %arg10[%c0_254, %c624_255] : memref<32x1024xf32, #tpu.memory_space<vmem>>, vector<16x256xf32>
    %383 = arith.truncf %382 : vector<16x256xf32> to vector<16x256xbf16>
    %c16_256 = arith.constant 16 : index
    %c256_257 = arith.constant 256 : index
    %384 = vector.load %arg11[%c16_256, %c256_257] : memref<288x512xbf16, #tpu.memory_space<vmem>>, vector<16x256xbf16>
    tpu.vector_store %arg11[%c16_256, %c256_257], %383 {strides = array<i32>} : memref<288x512xbf16, #tpu.memory_space<vmem>>, vector<16x256xbf16>,
    %c0_258 = arith.constant 0 : index
    %c113_259 = arith.constant 113 : index
    %385 = vector.load %arg10[%c0_258, %c113_259] : memref<32x1024xf32, #tpu.memory_space<vmem>>, vector<16x256xf32>
    %cst_260 = arith.constant 0.000000e+00 : f32
    %386 = vector.shape_cast %136 : vector<1x256xi1> to vector<1x256xi1>
    %387 = vector.broadcast %386 : vector<1x256xi1> to vector<16x256xi1>
    %388 = vector.broadcast %cst_260 : f32 to vector<16x256xf32>
    %389 = arith.select %387, %385, %388 : vector<16x256xi1>, vector<16x256xf32>
    %390 = arith.truncf %389 : vector<16x256xf32> to vector<16x256xbf16>
    %c32_261 = arith.constant 32 : index
    %c0_262 = arith.constant 0 : index
    %391 = vector.load %arg11[%c32_261, %c0_262] : memref<288x512xbf16, #tpu.memory_space<vmem>>, vector<16x256xbf16>
    tpu.vector_store %arg11[%c32_261, %c0_262], %390 {strides = array<i32>} : memref<288x512xbf16, #tpu.memory_space<vmem>>, vector<16x256xbf16>,
    %c0_263 = arith.constant 0 : index
    %c625_264 = arith.constant 625 : index
    %392 = vector.load %arg10[%c0_263, %c625_264] : memref<32x1024xf32, #tpu.memory_space<vmem>>, vector<16x256xf32>
    %cst_265 = arith.constant 0.000000e+00 : f32
    %393 = vector.shape_cast %136 : vector<1x256xi1> to vector<1x256xi1>
    %394 = vector.broadcast %393 : vector<1x256xi1> to vector<16x256xi1>
    %395 = vector.broadcast %cst_265 : f32 to vector<16x256xf32>
    %396 = arith.select %394, %392, %395 : vector<16x256xi1>, vector<16x256xf32>
    %397 = arith.truncf %396 : vector<16x256xf32> to vector<16x256xbf16>
    %c32_266 = arith.constant 32 : index
    %c256_267 = arith.constant 256 : index
    %398 = vector.load %arg11[%c32_266, %c256_267] : memref<288x512xbf16, #tpu.memory_space<vmem>>, vector<16x256xbf16>
    tpu.vector_store %arg11[%c32_266, %c256_267], %397 {strides = array<i32>} : memref<288x512xbf16, #tpu.memory_space<vmem>>, vector<16x256xbf16>,
    %c0_268 = arith.constant 0 : index
    %c127_269 = arith.constant 127 : index
    %399 = vector.load %arg10[%c0_268, %c127_269] : memref<32x1024xf32, #tpu.memory_space<vmem>>, vector<16x256xf32>
    %cst_270 = arith.constant 0.000000e+00 : f32
    %400 = vector.shape_cast %127 : vector<1x256xi1> to vector<1x256xi1>
    %401 = vector.broadcast %400 : vector<1x256xi1> to vector<16x256xi1>
    %402 = vector.broadcast %cst_270 : f32 to vector<16x256xf32>
    %403 = arith.select %401, %399, %402 : vector<16x256xi1>, vector<16x256xf32>
    %404 = arith.truncf %403 : vector<16x256xf32> to vector<16x256xbf16>
    %c48_271 = arith.constant 48 : index
    %c0_272 = arith.constant 0 : index
    %405 = vector.load %arg11[%c48_271, %c0_272] : memref<288x512xbf16, #tpu.memory_space<vmem>>, vector<16x256xbf16>
    tpu.vector_store %arg11[%c48_271, %c0_272], %404 {strides = array<i32>} : memref<288x512xbf16, #tpu.memory_space<vmem>>, vector<16x256xbf16>,
    %c0_273 = arith.constant 0 : index
    %c639_274 = arith.constant 639 : index
    %406 = vector.load %arg10[%c0_273, %c639_274] : memref<32x1024xf32, #tpu.memory_space<vmem>>, vector<16x256xf32>
    %cst_275 = arith.constant 0.000000e+00 : f32
    %407 = vector.shape_cast %127 : vector<1x256xi1> to vector<1x256xi1>
    %408 = vector.broadcast %407 : vector<1x256xi1> to vector<16x256xi1>
    %409 = vector.broadcast %cst_275 : f32 to vector<16x256xf32>
    %410 = arith.select %408, %406, %409 : vector<16x256xi1>, vector<16x256xf32>
    %411 = arith.truncf %410 : vector<16x256xf32> to vector<16x256xbf16>
    %c48_276 = arith.constant 48 : index
    %c256_277 = arith.constant 256 : index
    %412 = vector.load %arg11[%c48_276, %c256_277] : memref<288x512xbf16, #tpu.memory_space<vmem>>, vector<16x256xbf16>
    tpu.vector_store %arg11[%c48_276, %c256_277], %411 {strides = array<i32>} : memref<288x512xbf16, #tpu.memory_space<vmem>>, vector<16x256xbf16>,
    %c0_278 = arith.constant 0 : index
    %c128_279 = arith.constant 128 : index
    %413 = vector.load %arg10[%c0_278, %c128_279] : memref<32x1024xf32, #tpu.memory_space<vmem>>, vector<16x256xf32>
    %414 = arith.truncf %413 : vector<16x256xf32> to vector<16x256xbf16>
    %c64_280 = arith.constant 64 : index
    %c0_281 = arith.constant 0 : index
    %415 = vector.load %arg11[%c64_280, %c0_281] : memref<288x512xbf16, #tpu.memory_space<vmem>>, vector<16x256xbf16>
    tpu.vector_store %arg11[%c64_280, %c0_281], %414 {strides = array<i32>} : memref<288x512xbf16, #tpu.memory_space<vmem>>, vector<16x256xbf16>,
    %c0_282 = arith.constant 0 : index
    %c640_283 = arith.constant 640 : index
    %416 = vector.load %arg10[%c0_282, %c640_283] : memref<32x1024xf32, #tpu.memory_space<vmem>>, vector<16x256xf32>
    %417 = arith.truncf %416 : vector<16x256xf32> to vector<16x256xbf16>
    %c64_284 = arith.constant 64 : index
    %c256_285 = arith.constant 256 : index
    %418 = vector.load %arg11[%c64_284, %c256_285] : memref<288x512xbf16, #tpu.memory_space<vmem>>, vector<16x256xbf16>
    tpu.vector_store %arg11[%c64_284, %c256_285], %417 {strides = array<i32>} : memref<288x512xbf16, #tpu.memory_space<vmem>>, vector<16x256xbf16>,
    %c0_286 = arith.constant 0 : index
    %c129_287 = arith.constant 129 : index
    %419 = vector.load %arg10[%c0_286, %c129_287] : memref<32x1024xf32, #tpu.memory_space<vmem>>, vector<16x256xf32>
    %cst_288 = arith.constant 0.000000e+00 : f32
    %420 = vector.shape_cast %136 : vector<1x256xi1> to vector<1x256xi1>
    %421 = vector.broadcast %420 : vector<1x256xi1> to vector<16x256xi1>
    %422 = vector.broadcast %cst_288 : f32 to vector<16x256xf32>
    %423 = arith.select %421, %419, %422 : vector<16x256xi1>, vector<16x256xf32>
    %424 = arith.truncf %423 : vector<16x256xf32> to vector<16x256xbf16>
    %c80_289 = arith.constant 80 : index
    %c0_290 = arith.constant 0 : index
    %425 = vector.load %arg11[%c80_289, %c0_290] : memref<288x512xbf16, #tpu.memory_space<vmem>>, vector<16x256xbf16>
    tpu.vector_store %arg11[%c80_289, %c0_290], %424 {strides = array<i32>} : memref<288x512xbf16, #tpu.memory_space<vmem>>, vector<16x256xbf16>,
    %c0_291 = arith.constant 0 : index
    %c641_292 = arith.constant 641 : index
    %426 = vector.load %arg10[%c0_291, %c641_292] : memref<32x1024xf32, #tpu.memory_space<vmem>>, vector<16x256xf32>
    %cst_293 = arith.constant 0.000000e+00 : f32
    %427 = vector.shape_cast %136 : vector<1x256xi1> to vector<1x256xi1>
    %428 = vector.broadcast %427 : vector<1x256xi1> to vector<16x256xi1>
    %429 = vector.broadcast %cst_293 : f32 to vector<16x256xf32>
    %430 = arith.select %428, %426, %429 : vector<16x256xi1>, vector<16x256xf32>
    %431 = arith.truncf %430 : vector<16x256xf32> to vector<16x256xbf16>
    %c80_294 = arith.constant 80 : index
    %c256_295 = arith.constant 256 : index
    %432 = vector.load %arg11[%c80_294, %c256_295] : memref<288x512xbf16, #tpu.memory_space<vmem>>, vector<16x256xbf16>
    tpu.vector_store %arg11[%c80_294, %c256_295], %431 {strides = array<i32>} : memref<288x512xbf16, #tpu.memory_space<vmem>>, vector<16x256xbf16>,
    %c0_296 = arith.constant 0 : index
    %c143_297 = arith.constant 143 : index
    %433 = vector.load %arg10[%c0_296, %c143_297] : memref<32x1024xf32, #tpu.memory_space<vmem>>, vector<16x256xf32>
    %cst_298 = arith.constant 0.000000e+00 : f32
    %434 = vector.shape_cast %127 : vector<1x256xi1> to vector<1x256xi1>
    %435 = vector.broadcast %434 : vector<1x256xi1> to vector<16x256xi1>
    %436 = vector.broadcast %cst_298 : f32 to vector<16x256xf32>
    %437 = arith.select %435, %433, %436 : vector<16x256xi1>, vector<16x256xf32>
    %438 = arith.truncf %437 : vector<16x256xf32> to vector<16x256xbf16>
    %c96_299 = arith.constant 96 : index
    %c0_300 = arith.constant 0 : index
    %439 = vector.load %arg11[%c96_299, %c0_300] : memref<288x512xbf16, #tpu.memory_space<vmem>>, vector<16x256xbf16>
    tpu.vector_store %arg11[%c96_299, %c0_300], %438 {strides = array<i32>} : memref<288x512xbf16, #tpu.memory_space<vmem>>, vector<16x256xbf16>,
    %c0_301 = arith.constant 0 : index
    %c655_302 = arith.constant 655 : index
    %440 = vector.load %arg10[%c0_301, %c655_302] : memref<32x1024xf32, #tpu.memory_space<vmem>>, vector<16x256xf32>
    %cst_303 = arith.constant 0.000000e+00 : f32
    %441 = vector.shape_cast %127 : vector<1x256xi1> to vector<1x256xi1>
    %442 = vector.broadcast %441 : vector<1x256xi1> to vector<16x256xi1>
    %443 = vector.broadcast %cst_303 : f32 to vector<16x256xf32>
    %444 = arith.select %442, %440, %443 : vector<16x256xi1>, vector<16x256xf32>
    %445 = arith.truncf %444 : vector<16x256xf32> to vector<16x256xbf16>
    %c96_304 = arith.constant 96 : index
    %c256_305 = arith.constant 256 : index
    %446 = vector.load %arg11[%c96_304, %c256_305] : memref<288x512xbf16, #tpu.memory_space<vmem>>, vector<16x256xbf16>
    tpu.vector_store %arg11[%c96_304, %c256_305], %445 {strides = array<i32>} : memref<288x512xbf16, #tpu.memory_space<vmem>>, vector<16x256xbf16>,
    %c0_306 = arith.constant 0 : index
    %c144_307 = arith.constant 144 : index
    %447 = vector.load %arg10[%c0_306, %c144_307] : memref<32x1024xf32, #tpu.memory_space<vmem>>, vector<16x256xf32>
    %448 = arith.truncf %447 : vector<16x256xf32> to vector<16x256xbf16>
    %c112_308 = arith.constant 112 : index
    %c0_309 = arith.constant 0 : index
    %449 = vector.load %arg11[%c112_308, %c0_309] : memref<288x512xbf16, #tpu.memory_space<vmem>>, vector<16x256xbf16>
    tpu.vector_store %arg11[%c112_308, %c0_309], %448 {strides = array<i32>} : memref<288x512xbf16, #tpu.memory_space<vmem>>, vector<16x256xbf16>,
    %c0_310 = arith.constant 0 : index
    %c656_311 = arith.constant 656 : index
    %450 = vector.load %arg10[%c0_310, %c656_311] : memref<32x1024xf32, #tpu.memory_space<vmem>>, vector<16x256xf32>
    %451 = arith.truncf %450 : vector<16x256xf32> to vector<16x256xbf16>
    %c112_312 = arith.constant 112 : index
    %c256_313 = arith.constant 256 : index
    %452 = vector.load %arg11[%c112_312, %c256_313] : memref<288x512xbf16, #tpu.memory_space<vmem>>, vector<16x256xbf16>
    tpu.vector_store %arg11[%c112_312, %c256_313], %451 {strides = array<i32>} : memref<288x512xbf16, #tpu.memory_space<vmem>>, vector<16x256xbf16>,
    %c0_314 = arith.constant 0 : index
    %c145_315 = arith.constant 145 : index
    %453 = vector.load %arg10[%c0_314, %c145_315] : memref<32x1024xf32, #tpu.memory_space<vmem>>, vector<16x256xf32>
    %cst_316 = arith.constant 0.000000e+00 : f32
    %454 = vector.shape_cast %136 : vector<1x256xi1> to vector<1x256xi1>
    %455 = vector.broadcast %454 : vector<1x256xi1> to vector<16x256xi1>
    %456 = vector.broadcast %cst_316 : f32 to vector<16x256xf32>
    %457 = arith.select %455, %453, %456 : vector<16x256xi1>, vector<16x256xf32>
    %458 = arith.truncf %457 : vector<16x256xf32> to vector<16x256xbf16>
    %c128_317 = arith.constant 128 : index
    %c0_318 = arith.constant 0 : index
    %459 = vector.load %arg11[%c128_317, %c0_318] : memref<288x512xbf16, #tpu.memory_space<vmem>>, vector<16x256xbf16>
    tpu.vector_store %arg11[%c128_317, %c0_318], %458 {strides = array<i32>} : memref<288x512xbf16, #tpu.memory_space<vmem>>, vector<16x256xbf16>,
    %c0_319 = arith.constant 0 : index
    %c657_320 = arith.constant 657 : index
    %460 = vector.load %arg10[%c0_319, %c657_320] : memref<32x1024xf32, #tpu.memory_space<vmem>>, vector<16x256xf32>
    %cst_321 = arith.constant 0.000000e+00 : f32
    %461 = vector.shape_cast %136 : vector<1x256xi1> to vector<1x256xi1>
    %462 = vector.broadcast %461 : vector<1x256xi1> to vector<16x256xi1>
    %463 = vector.broadcast %cst_321 : f32 to vector<16x256xf32>
    %464 = arith.select %462, %460, %463 : vector<16x256xi1>, vector<16x256xf32>
    %465 = arith.truncf %464 : vector<16x256xf32> to vector<16x256xbf16>
    %c128_322 = arith.constant 128 : index
    %c256_323 = arith.constant 256 : index
    %466 = vector.load %arg11[%c128_322, %c256_323] : memref<288x512xbf16, #tpu.memory_space<vmem>>, vector<16x256xbf16>
    tpu.vector_store %arg11[%c128_322, %c256_323], %465 {strides = array<i32>} : memref<288x512xbf16, #tpu.memory_space<vmem>>, vector<16x256xbf16>,
    %c0_324 = arith.constant 0 : index
    %c0_325 = arith.constant 0 : index
    %467 = vector.load %arg7[%c0_324, %c0_325] : memref<2x144xbf16, #tpu.memory_space<vmem>>, vector<2x144xbf16>
    %c0_326 = arith.constant 0 : index
    %c0_327 = arith.constant 0 : index
    %468 = vector.load %arg11[%c0_326, %c0_327] : memref<288x512xbf16, #tpu.memory_space<vmem>>, vector<144x512xbf16>
    %cst_328 = arith.constant dense<0.000000e+00> : vector<2x512xf32>
    %469 = tpu.matmul %467, %468, %cst_328 {dimension_numbers = #tpu.dot_dimension_numbers<[1], [0], [0], [1], [0, 0, 1, 1], [], []>} : vector<2x144xbf16>, vector<144x512xbf16>, vector<2x512xf32> -> vector<2x512xf32>
    %c0_329 = arith.constant 0 : index
    %c0_330 = arith.constant 0 : index
    %470 = vector.load %arg8[%c0_329, %c0_330] : memref<2x1xf32, #tpu.memory_space<vmem>>, vector<2x1xf32>
    %471 = vector.broadcast %470 : vector<2x1xf32> to vector<2x512xf32>
    %472 = arith.addf %469, %471 : vector<2x512xf32>
    %473 = vector.extract_strided_slice %472 {offsets = [0, 0], sizes = [1, 512], strides = [1, 1]} : vector<2x512xf32> to vector<1x512xf32>
    %474 = vector.extract_strided_slice %472 {offsets = [1, 0], sizes = [1, 512], strides = [1, 1]} : vector<2x512xf32> to vector<1x512xf32>
    %475 = arith.maximumf %473, %474 : vector<1x512xf32>
    %476 = vector.broadcast %475 : vector<1x512xf32> to vector<2x512xf32>
    %477 = arith.subf %472, %476 : vector<2x512xf32>
    %478 = math.exp %477 : vector<2x512xf32>
    %479 = vector.extract_strided_slice %478 {offsets = [0, 0], sizes = [1, 512], strides = [1, 1]} : vector<2x512xf32> to vector<1x512xf32>
    %480 = vector.extract_strided_slice %478 {offsets = [1, 0], sizes = [1, 512], strides = [1, 1]} : vector<2x512xf32> to vector<1x512xf32>
    %481 = arith.addf %479, %480 : vector<1x512xf32>
    %482 = vector.broadcast %481 : vector<1x512xf32> to vector<2x512xf32>
    %483 = arith.divf %478, %482 : vector<2x512xf32>
    %484 = vector.extract_strided_slice %483 {offsets = [0, 0], sizes = [2, 256], strides = [1, 1]} : vector<2x512xf32> to vector<2x256xf32>
    %c0_331 = arith.constant 0 : index
    %c0_332 = arith.constant 0 : index
    %c0_333 = arith.constant 0 : index
    %485 = vector.load %arg9[%c0_331, %c0_332, %c0_333] : memref<2x2x256xf32, #tpu.memory_space<vmem>>, vector<1x2x256xf32>
    %486 = vector.shape_cast %485 : vector<1x2x256xf32> to vector<2x256xf32>
    %487 = vector.shape_cast %484 : vector<2x256xf32> to vector<1x2x256xf32>
    tpu.vector_store %arg9[%c0_331, %c0_332, %c0_333], %487 {strides = array<i32>} : memref<2x2x256xf32, #tpu.memory_space<vmem>>, vector<1x2x256xf32>,
    %488 = vector.extract_strided_slice %483 {offsets = [0, 256], sizes = [2, 256], strides = [1, 1]} : vector<2x512xf32> to vector<2x256xf32>
    %c1_334 = arith.constant 1 : index
    %c0_335 = arith.constant 0 : index
    %c0_336 = arith.constant 0 : index
    %489 = vector.load %arg9[%c1_334, %c0_335, %c0_336] : memref<2x2x256xf32, #tpu.memory_space<vmem>>, vector<1x2x256xf32>
    %490 = vector.shape_cast %489 : vector<1x2x256xf32> to vector<2x256xf32>
    %491 = vector.shape_cast %488 : vector<2x256xf32> to vector<1x2x256xf32>
    tpu.vector_store %arg9[%c1_334, %c0_335, %c0_336], %491 {strides = array<i32>} : memref<2x2x256xf32, #tpu.memory_space<vmem>>, vector<1x2x256xf32>,
    return
  }
  func.func @transform_0(%arg0: i32, %arg1: memref<4x8xf32, #tpu.memory_space<smem>>) -> (i32, i32, i32) {
    %c0_i32 = arith.constant 0 : i32
    %c0_i32_0 = arith.constant 0 : i32
    %c0_i32_1 = arith.constant 0 : i32
    return %arg0, %c0_i32, %c0_i32_0 : i32, i32, i32
  }
  func.func @transform_1(%arg0: i32, %arg1: memref<4x8xf32, #tpu.memory_space<smem>>) -> (i32, i32) {
    %c0_i32 = arith.constant 0 : i32
    %c0_i32_0 = arith.constant 0 : i32
    %c0_i32_1 = arith.constant 0 : i32
    return %c0_i32, %c0_i32_0 : i32, i32
  }
  func.func @transform_2(%arg0: i32, %arg1: memref<4x8xf32, #tpu.memory_space<smem>>) -> (i32, i32) {
    %c0_i32 = arith.constant 0 : i32
    %c0_i32_0 = arith.constant 0 : i32
    %c0_i32_1 = arith.constant 0 : i32
    return %c0_i32, %c0_i32_0 : i32, i32
  }
  func.func @transform_3(%arg0: i32, %arg1: memref<4x8xf32, #tpu.memory_space<smem>>) -> (i32, i32) {
    %c0_i32 = arith.constant 0 : i32
    %c0_i32_0 = arith.constant 0 : i32
    %c0_i32_1 = arith.constant 0 : i32
    return %c0_i32, %c0_i32_0 : i32, i32
  }
  func.func @transform_4(%arg0: i32, %arg1: memref<4x8xf32, #tpu.memory_space<smem>>) -> (i32, i32) {
    %c0_i32 = arith.constant 0 : i32
    %c0_i32_0 = arith.constant 0 : i32
    %c0_i32_1 = arith.constant 0 : i32
    return %c0_i32, %c0_i32_0 : i32, i32
  }
  func.func @transform_5(%arg0: i32, %arg1: memref<4x8xf32, #tpu.memory_space<smem>>) -> (i32, i32) {
    %c0_i32 = arith.constant 0 : i32
    %c0_i32_0 = arith.constant 0 : i32
    %c0_i32_1 = arith.constant 0 : i32
    return %c0_i32, %c0_i32_0 : i32, i32
  }
  func.func @transform_6(%arg0: i32, %arg1: memref<4x8xf32, #tpu.memory_space<smem>>) -> (i32, i32) {
    %c0_i32 = arith.constant 0 : i32
    %c0_i32_0 = arith.constant 0 : i32
    %c0_i32_1 = arith.constant 0 : i32
    return %c0_i32, %c0_i32_0 : i32, i32
  }
  func.func @transform_7(%arg0: i32, %arg1: memref<4x8xf32, #tpu.memory_space<smem>>) -> (i32, i32, i32) {
    %c0_i32 = arith.constant 0 : i32
    %c0_i32_0 = arith.constant 0 : i32
    %c0_i32_1 = arith.constant 0 : i32
    return %arg0, %c0_i32, %c0_i32_0 : i32, i32, i32
  }
}

</mosaic_0001>

<llo_original>
// kernel: tpu_custom_call.1
$region0: #{tpu_custom_call.1}
  #allocation0 [shape = 'u32[]', space=smem, size = 0x4, offset = 0x4, fixed_abs, tag = 'smem constant byte address 0x4 - core index']
  #allocation1 [shape = 'u32[144,128]{1,0:T(1,128)}', space=vmem, size = 0x12000, scoped, tag = 'internal scratch']
  #allocation2 [shape = 'f32[32,1024]{1,0:T(8,128)}', space=vmem, size = 0x20000, scoped, tag = 'scratch operand']
  #allocation3 [shape = 'bf16[288,512]{1,0:T(8,128)(2,1)}', space=vmem, size = 0x48000, scoped, tag = 'scratch operand']
  #allocation4 [shape = 's32[1]{0}', space=sflag, size = 0x4, scoped, tag = 'scoped memory for tpu_custom_call.1']
  #allocation5 [shape = 'u8[2048]{0}', space=smem, size = 0x800, scoped, tag = 'prefetched SMEM operand 0']
  %s0 = inlined_call_operand.hbm [shape: f32[4,8], index: 0, kind: input, shape index: {}]
  %s1 = inlined_call_operand.hbm [shape: f32[4,16,256], index: 1, kind: input, shape index: {}]
  %s2 = inlined_call_operand.vmem [shape: bf16[16,288], index: 2, kind: input, shape index: {}]
  %s3 = inlined_call_operand.vmem [shape: f32[16,1], index: 3, kind: input, shape index: {}]
  %s4 = inlined_call_operand.vmem [shape: bf16[16,144], index: 4, kind: input, shape index: {}]
  %s5 = inlined_call_operand.vmem [shape: f32[16,1], index: 5, kind: input, shape index: {}]
  %s6 = inlined_call_operand.vmem [shape: bf16[2,144], index: 6, kind: input, shape index: {}]
  %s7 = inlined_call_operand.vmem [shape: f32[2,1], index: 7, kind: input, shape index: {}]
  %s8 = inlined_call_operand.hbm [shape: f32[4,2,256], index: 8, kind: output, shape index: {}]
  %s9 = sld [smem:[#allocation0]]
  $region65: #{tpu_custom_call.1} parent=0
    _
  %s11 = ssub.s32 1, %s9
  %s12 = scalar_select 0, %s11, %s9
  %14 = dma.hbm_to_smem %s0, 64, [#allocation5], [#allocation4]
  %15 = dma.done [#allocation4], 64
  %16 = sfence
  $region1: #{tpu_custom_call.1} parent=0
    #allocation6 [shape = 'u8[65536]{0}', space=vmem, size = 0x10000, scoped, tag = 'input window, operand 1']
    #allocation7 [shape = 's32[2]{0}', space=sflag, size = 0x8, scoped, tag = 'scoped memory for tpu_custom_call.1']
    #allocation8 [shape = 's32[2]{0}', space=sflag, size = 0x8, scoped, tag = 'scoped memory for tpu_custom_call.1']
    #allocation9 [shape = 'u8[8192]{0}', space=vmem, size = 0x2000, scoped, tag = 'output window, operand 0']
    %17 = vsyncpa [#allocation7], 0
    %s18 = scalar_lea.sflag [#allocation7], 1
    %19 = vsyncpa %s18, 0
    %20 = vsyncpa [#allocation8], 0
    %s21 = scalar_lea.sflag [#allocation8], 1
    %22 = vsyncpa %s21, 0
    loop: start=0, step=1, limit=4
    $region2: #{tpu_custom_call.1} parent=1 // loop_pre_header
      _
    $region3: #{tpu_custom_call.1} parent=1 // loop_header
      %s24 = sphi 0, %s28
      %p25 = scmp.ge.s32.totalorder %s24, 4
      %s34 = sphi 0, %s36
      %s37 = sphi 0, %s34
      %s38 = sphi 0, %s37
      %s54 = sphi 0, %s38
      %s58 = sphi 0, %s58
      %s60 = sphi 0, %s58
      %s61 = sphi 0, %s60
      %s75 = sphi 0, %s61
      %s79 = sphi 0, %s79
      %s81 = sphi 0, %s79
      %s82 = sphi 0, %s81
      %s96 = sphi 0, %s82
      %s100 = sphi 0, %s100
      %s102 = sphi 0, %s100
      %s103 = sphi 0, %s102
      %s117 = sphi 0, %s103
      %s121 = sphi 0, %s121
      %s123 = sphi 0, %s121
      %s124 = sphi 0, %s123
      %s138 = sphi 0, %s124
      %s142 = sphi 0, %s142
      %s144 = sphi 0, %s142
      %s145 = sphi 0, %s144
      %s159 = sphi 0, %s145
      %s163 = sphi 0, %s163
      %s165 = sphi 0, %s163
      %s166 = sphi 0, %s165
      %s180 = sphi 0, %s166
      %s186 = sphi 0, %s188
      %s189 = sphi 0, %s186
      %s190 = sphi 0, %s189
      %s206 = sphi 0, %s190
    $region4: #{tpu_custom_call.1} parent=1 // loop_header_branch
      %27 = sbr.rel (%p25) target = $region8
    $region5: #{tpu_custom_call.1} parent=1 // loop_body
      %s29 = ssub.s32 %s24, 1
      %s30 = ssub.s32 %s24, 2
      %s31 = sadd.s32 %s24, 1
      %s32 = ssub.s32 %s24, %s31
      %p33 = scmp.eq.s32.totalorder %s32, 0
      %s35 = sadd.s32 %s34, 1
      %s36 = scalar_select %p33, %s34, %s35
      %p39 = pneg %p33
      %p40 = scmp.eq.s32.totalorder %s24, 1
      %p41 = por %p39, %p40
      %p42 = scmp.ne.s32.totalorder %s34, %s37
      %p43 = scmp.eq.s32.totalorder %s24, 0
      %p44 = por %p42, %p43
      %p45 = scmp.ne.s32.totalorder %s34, %s37
      %p46 = scmp.eq.s32.totalorder %s29, 1
      %p47 = por %p45, %p46
      %p48 = scmp.ne.s32.totalorder %s37, %s38
      %p49 = scmp.eq.s32.totalorder %s29, 0
      %p50 = por %p48, %p49
      %p51 = scmp.ne.s32.totalorder %s37, %s38
      %p52 = scmp.eq.s32.totalorder %s30, 1
      %p53 = por %p51, %p52
      %p55 = scmp.ne.s32.totalorder %s38, %s54
      %p56 = scmp.eq.s32.totalorder %s30, 0
      %p57 = por %p55, %p56
      %s59 = sadd.s32 %s58, 1
      %p62 = scmp.eq.s32.totalorder %s24, 1
      %p63 = scmp.ne.s32.totalorder %s58, %s60
      %p64 = scmp.eq.s32.totalorder %s24, 0
      %p65 = por %p63, %p64
      %p66 = scmp.ne.s32.totalorder %s58, %s60
      %p67 = scmp.eq.s32.totalorder %s29, 1
      %p68 = por %p66, %p67
      %p69 = scmp.ne.s32.totalorder %s60, %s61
      %p70 = scmp.eq.s32.totalorder %s29, 0
      %p71 = por %p69, %p70
      %p72 = scmp.ne.s32.totalorder %s60, %s61
      %p73 = scmp.eq.s32.totalorder %s30, 1
      %p74 = por %p72, %p73
      %p76 = scmp.ne.s32.totalorder %s61, %s75
      %p77 = scmp.eq.s32.totalorder %s30, 0
      %p78 = por %p76, %p77
      %s80 = sadd.s32 %s79, 1
      %p83 = scmp.eq.s32.totalorder %s24, 1
      %p84 = scmp.ne.s32.totalorder %s79, %s81
      %p85 = scmp.eq.s32.totalorder %s24, 0
      %p86 = por %p84, %p85
      %p87 = scmp.ne.s32.totalorder %s79, %s81
      %p88 = scmp.eq.s32.totalorder %s29, 1
      %p89 = por %p87, %p88
      %p90 = scmp.ne.s32.totalorder %s81, %s82
      %p91 = scmp.eq.s32.totalorder %s29, 0
      %p92 = por %p90, %p91
      %p93 = scmp.ne.s32.totalorder %s81, %s82
      %p94 = scmp.eq.s32.totalorder %s30, 1
      %p95 = por %p93, %p94
      %p97 = scmp.ne.s32.totalorder %s82, %s96
      %p98 = scmp.eq.s32.totalorder %s30, 0
      %p99 = por %p97, %p98
      %s101 = sadd.s32 %s100, 1
      %p104 = scmp.eq.s32.totalorder %s24, 1
      %p105 = scmp.ne.s32.totalorder %s100, %s102
      %p106 = scmp.eq.s32.totalorder %s24, 0
      %p107 = por %p105, %p106
      %p108 = scmp.ne.s32.totalorder %s100, %s102
      %p109 = scmp.eq.s32.totalorder %s29, 1
      %p110 = por %p108, %p109
      %p111 = scmp.ne.s32.totalorder %s102, %s103
      %p112 = scmp.eq.s32.totalorder %s29, 0
      %p113 = por %p111, %p112
      %p114 = scmp.ne.s32.totalorder %s102, %s103
      %p115 = scmp.eq.s32.totalorder %s30, 1
      %p116 = por %p114, %p115
      %p118 = scmp.ne.s32.totalorder %s103, %s117
      %p119 = scmp.eq.s32.totalorder %s30, 0
      %p120 = por %p118, %p119
      %s122 = sadd.s32 %s121, 1
      %p125 = scmp.eq.s32.totalorder %s24, 1
      %p126 = scmp.ne.s32.totalorder %s121, %s123
      %p127 = scmp.eq.s32.totalorder %s24, 0
      %p128 = por %p126, %p127
      %p129 = scmp.ne.s32.totalorder %s121, %s123
      %p130 = scmp.eq.s32.totalorder %s29, 1
      %p131 = por %p129, %p130
      %p132 = scmp.ne.s32.totalorder %s123, %s124
      %p133 = scmp.eq.s32.totalorder %s29, 0
      %p134 = por %p132, %p133
      %p135 = scmp.ne.s32.totalorder %s123, %s124
      %p136 = scmp.eq.s32.totalorder %s30, 1
      %p137 = por %p135, %p136
      %p139 = scmp.ne.s32.totalorder %s124, %s138
      %p140 = scmp.eq.s32.totalorder %s30, 0
      %p141 = por %p139, %p140
      %s143 = sadd.s32 %s142, 1
      %p146 = scmp.eq.s32.totalorder %s24, 1
      %p147 = scmp.ne.s32.totalorder %s142, %s144
      %p148 = scmp.eq.s32.totalorder %s24, 0
      %p149 = por %p147, %p148
      %p150 = scmp.ne.s32.totalorder %s142, %s144
      %p151 = scmp.eq.s32.totalorder %s29, 1
      %p152 = por %p150, %p151
      %p153 = scmp.ne.s32.totalorder %s144, %s145
      %p154 = scmp.eq.s32.totalorder %s29, 0
      %p155 = por %p153, %p154
      %p156 = scmp.ne.s32.totalorder %s144, %s145
      %p157 = scmp.eq.s32.totalorder %s30, 1
      %p158 = por %p156, %p157
      %p160 = scmp.ne.s32.totalorder %s145, %s159
      %p161 = scmp.eq.s32.totalorder %s30, 0
      %p162 = por %p160, %p161
      %s164 = sadd.s32 %s163, 1
      %p167 = scmp.eq.s32.totalorder %s24, 1
      %p168 = scmp.ne.s32.totalorder %s163, %s165
      %p169 = scmp.eq.s32.totalorder %s24, 0
      %p170 = por %p168, %p169
      %p171 = scmp.ne.s32.totalorder %s163, %s165
      %p172 = scmp.eq.s32.totalorder %s29, 1
      %p173 = por %p171, %p172
      %p174 = scmp.ne.s32.totalorder %s165, %s166
      %p175 = scmp.eq.s32.totalorder %s29, 0
      %p176 = por %p174, %p175
      %p177 = scmp.ne.s32.totalorder %s165, %s166
      %p178 = scmp.eq.s32.totalorder %s30, 1
      %p179 = por %p177, %p178
      %p181 = scmp.ne.s32.totalorder %s166, %s180
      %p182 = scmp.eq.s32.totalorder %s30, 0
      %p183 = por %p181, %p182
      %s184 = ssub.s32 %s24, %s31
      %p185 = scmp.eq.s32.totalorder %s184, 0
      %s187 = sadd.s32 %s186, 1
      %s188 = scalar_select %p185, %s186, %s187
      %p191 = pneg %p185
      %p192 = scmp.eq.s32.totalorder %s24, 1
      %p193 = por %p191, %p192
      %p194 = scmp.ne.s32.totalorder %s186, %s189
      %p195 = scmp.eq.s32.totalorder %s24, 0
      %p196 = por %p194, %p195
      %p197 = scmp.ne.s32.totalorder %s186, %s189
      %p198 = scmp.eq.s32.totalorder %s29, 1
      %p199 = por %p197, %p198
      %p200 = scmp.ne.s32.totalorder %s189, %s190
      %p201 = scmp.eq.s32.totalorder %s29, 0
      %p202 = por %p200, %p201
      %p203 = scmp.ne.s32.totalorder %s189, %s190
      %p204 = scmp.eq.s32.totalorder %s30, 1
      %p205 = por %p203, %p204
      %p207 = scmp.ne.s32.totalorder %s190, %s206
      %p208 = scmp.eq.s32.totalorder %s30, 0
      %p209 = por %p207, %p208
      %p210 = scmp.le.s32.totalorder 1, %s24
      %p211 = scmp.lt.s32.totalorder %s24, 3
      %p212 = pnand %p210, %p211
      %p213 = pneg %p212
      // Predicated region
      $region9: #{tpu_custom_call.1} parent=5 // pred_check
        _
      $region10: #{tpu_custom_call.1} parent=5 // pred_check_branch
        %215 = sbr.rel (%p212) target = $region12
      $region11: #{tpu_custom_call.1} parent=5 // pred_region
        %s216 = ssub.s32 %s24, 1
        // Predicated region
        $region13: #{tpu_custom_call.1} parent=11 // pred_check
          %p217 = pneg %p71
        $region14: #{tpu_custom_call.1} parent=11 // pred_check_branch
          %219 = sbr.rel (%p217) target = $region16
        $region15: #{tpu_custom_call.1} parent=11 // pred_region
          _
        $region16: #{tpu_custom_call.1} parent=11 // pred_fallthru
          _
        // Predicated region
        $region17: #{tpu_custom_call.1} parent=11 // pred_check
          %p220 = pneg %p92
        $region18: #{tpu_custom_call.1} parent=11 // pred_check_branch
          %222 = sbr.rel (%p220) target = $region20
        $region19: #{tpu_custom_call.1} parent=11 // pred_region
          _
        $region20: #{tpu_custom_call.1} parent=11 // pred_fallthru
          _
        // Predicated region
        $region21: #{tpu_custom_call.1} parent=11 // pred_check
          %p223 = pneg %p113
        $region22: #{tpu_custom_call.1} parent=11 // pred_check_branch
          %225 = sbr.rel (%p223) target = $region24
        $region23: #{tpu_custom_call.1} parent=11 // pred_region
          _
        $region24: #{tpu_custom_call.1} parent=11 // pred_fallthru
          _
        // Predicated region
        $region25: #{tpu_custom_call.1} parent=11 // pred_check
          %p226 = pneg %p134
        $region26: #{tpu_custom_call.1} parent=11 // pred_check_branch
          %228 = sbr.rel (%p226) target = $region28
        $region27: #{tpu_custom_call.1} parent=11 // pred_region
          _
        $region28: #{tpu_custom_call.1} parent=11 // pred_fallthru
          _
        // Predicated region
        $region29: #{tpu_custom_call.1} parent=11 // pred_check
          %p229 = pneg %p155
        $region30: #{tpu_custom_call.1} parent=11 // pred_check_branch
          %231 = sbr.rel (%p229) target = $region32
        $region31: #{tpu_custom_call.1} parent=11 // pred_region
          _
        $region32: #{tpu_custom_call.1} parent=11 // pred_fallthru
          _
        // Predicated region
        $region33: #{tpu_custom_call.1} parent=11 // pred_check
          %p232 = pneg %p176
        $region34: #{tpu_custom_call.1} parent=11 // pred_check_branch
          %234 = sbr.rel (%p232) target = $region36
        $region35: #{tpu_custom_call.1} parent=11 // pred_region
          _
        $region36: #{tpu_custom_call.1} parent=11 // pred_fallthru
          _
      $region12: #{tpu_custom_call.1} parent=5 // pred_fallthru
        _
      %p235 = scmp.lt.s32.totalorder %s24, 2
      // Predicated region
      $region37: #{tpu_custom_call.1} parent=5 // pred_check
        %p236 = pneg %p235
      $region38: #{tpu_custom_call.1} parent=5 // pred_check_branch
        %238 = sbr.rel (%p236) target = $region40
      $region39: #{tpu_custom_call.1} parent=5 // pred_region
        // Predicated region
        $region41: #{tpu_custom_call.1} parent=39 // pred_check
          %p239 = pneg %p44
        $region42: #{tpu_custom_call.1} parent=39 // pred_check_branch
          %241 = sbr.rel (%p239) target = $region44
        $region43: #{tpu_custom_call.1} parent=39 // pred_region
          %s242 = sand.u32 %s34, 1
          %s243 = scalar_lea.sflag [#allocation7], %s242
          %s244 = sand.u32 %s34, 1
          %s245 = smul.addr %s244, 64
          %s246 = scalar_lea.vmem [#allocation6], %s245
          %s247 = smul.u32 2, %s24
          %s249 = ssub.s32 1024, 1024
          %250 = vsyncadd %s243, %s249
          %s251 = smul.addr %s247, 4
          %s252 = smul.addr %s251, 128
          %s253 = scalar_lea.hbm %s1, %s252
          %s254 = sshll.u32 %s246, 4
          %s255 = int_to_ptr.vmem [resolvable:$true] %s254
          %260 = dma.hbm_to_vmem [thread:$0]  %s253, 1024, %s255, %s243, 256, 256, 16
        $region44: #{tpu_custom_call.1} parent=39 // pred_fallthru
          _
      $region40: #{tpu_custom_call.1} parent=5 // pred_fallthru
        _
      %p261 = scmp.le.s32.totalorder 1, %s24
      %p262 = scmp.lt.s32.totalorder %s24, 3
      %p263 = pnand %p261, %p262
      %p264 = pneg %p263
      // Predicated region
      $region45: #{tpu_custom_call.1} parent=5 // pred_check
        _
      $region46: #{tpu_custom_call.1} parent=5 // pred_check_branch
        %266 = sbr.rel (%p263) target = $region48
      $region47: #{tpu_custom_call.1} parent=5 // pred_region
        %s267 = ssub.s32 %s24, 1
        %s268 = sand.u32 %s37, 1
        %s269 = scalar_lea.sflag [#allocation7], %s268
        %s270 = sand.u32 %s37, 1
        %s271 = smul.addr %s270, 64
        %s272 = scalar_lea.vmem [#allocation6], %s271
        // Predicated region
        $region49: #{tpu_custom_call.1} parent=47 // pred_check
          %p273 = pneg %p50
        $region50: #{tpu_custom_call.1} parent=47 // pred_check_branch
          %275 = sbr.rel (%p273) target = $region52
        $region51: #{tpu_custom_call.1} parent=47 // pred_region
          %276 = dma.done %s269, 1024
        $region52: #{tpu_custom_call.1} parent=47 // pred_fallthru
          _
        %s277 = sand.u32 %s37, 1
        %s278 = scalar_lea.sflag [#allocation7], %s277
        %s279 = sand.u32 %s37, 1
        %s280 = smul.addr %s279, 64
        %s281 = scalar_lea.vmem [#allocation6], %s280
        %p282 = pneg %p50
        %p283 = pneg %p47
        %p284 = pneg %p71
        %p285 = pneg %p68
        %p286 = pneg %p92
        %p287 = pneg %p89
        %p288 = pneg %p113
        %p289 = pneg %p110
        %p290 = pneg %p134
        %p291 = pneg %p131
        %p292 = pneg %p155
        %p293 = pneg %p152
        %p294 = pneg %p176
        %p295 = pneg %p173
        %p296 = pneg %p202
        %p297 = pneg %p199
        %s298 = sand.u32 %s189, 1
        %s299 = scalar_lea.sflag [#allocation8], %s298
        %s300 = sand.u32 %s189, 1
        %s301 = smul.addr %s300, 8
        %s302 = scalar_lea.vmem [#allocation9], %s301
        %s303 = smul.u32 2, %s29
        %s304 = smul.u32 2, %s29
        %306 = vst [vmem:[#allocation2] sm:$0xff] 0.0
        %307 = vst [vmem:[#allocation2 + $0x40] sm:$0xff] 0.0
        %308 = vst [vmem:[#allocation2 + $0x80] sm:$0xff] 0.0
        %309 = vst [vmem:[#allocation2 + $0xc0] sm:$0xff] 0.0
        %310 = vst [vmem:[#allocation2 + $0x18] sm:$0xff] 0.0
        %311 = vst [vmem:[#allocation2 + $0x58] sm:$0xff] 0.0
        %312 = vst [vmem:[#allocation2 + $0x98] sm:$0xff] 0.0
        %313 = vst [vmem:[#allocation2 + $0xd8] sm:$0xff] 0.0
        %314 = vst [vmem:[#allocation2 + $0xc8] sm:$0xff] 0.0
        %315 = vst [vmem:[#allocation2 + $0xd0] sm:$0xff] 0.0
        %v316 = vld [vmem:[%s272] sm:$0xff]
        %v317 = vld [vmem:[%s272 + $0x8] sm:$0xff]
        %v318 = vld [vmem:[%s272 + $0x10] sm:$0xff]
        %v319 = vld [vmem:[%s272 + $0x18] sm:$0xff]
        %320 = vst [vmem:[#allocation2 + $0x8] sm:$0xff] %v316
        %321 = vst [vmem:[#allocation2 + $0x10] sm:$0xff] %v317
        %322 = vst [vmem:[#allocation2 + $0x48] sm:$0xff] %v318
        %323 = vst [vmem:[#allocation2 + $0x50] sm:$0xff] %v319
        %s324 = smul.u32 %s29, 2
        %s325 = smul.u32 %s324, 128
        %s326 = sld [smem:[#allocation5 + %s325]]
        %v327 = vstv %s326
        %s328 = sadd.s32 %s325, 1
        %s329 = sld [smem:[#allocation5 + %s328]]
        %v330 = vstv %s329
        %s331 = sadd.s32 %s325, 2
        %s332 = sld [smem:[#allocation5 + %s331]]
        %v333 = vstv %s332
        %s334 = sadd.s32 %s325, 3
        %s335 = sld [smem:[#allocation5 + %s334]]
        %v336 = vstv %s335
        %s337 = sadd.s32 %s325, 4
        %s338 = sld [smem:[#allocation5 + %s337]]
        %v339 = vstv %s338
        %s340 = sadd.s32 %s325, 5
        %s341 = sld [smem:[#allocation5 + %s340]]
        %v342 = vstv %s341
        %s343 = sadd.s32 %s325, 6
        %s344 = sld [smem:[#allocation5 + %s343]]
        %v345 = vstv %s344
        %s346 = sadd.s32 %s325, 7
        %s347 = sld [smem:[#allocation5 + %s346]]
        %v348 = vstv %s347
        %vm349 = vcmask 1040384
        %v350 = vsel %vm349, %v327, %v330
        %vm351 = vcmask 1041408
        %v352 = vsel %vm351, %v350, %v333
        %vm353 = vcmask 1042432
        %v354 = vsel %vm353, %v352, %v336
        %vm355 = vcmask 1043456
        %v356 = vsel %vm355, %v354, %v339
        %vm357 = vcmask 1044480
        %v358 = vsel %vm357, %v356, %v342
        %vm359 = vcmask 1045504
        %v360 = vsel %vm359, %v358, %v345
        %vm361 = vcmask 1046528
        %v362 = vsel %vm361, %v360, %v348
        %363 = vst [vmem:[#allocation2 + $0x88] sm:$0xff] %v362
        %364 = vst [vmem:[#allocation2 + $0x90] sm:$0xff] %v362
        %365 = vst [vmem:[#allocation2 + $0x20] sm:$0xff] 0.0
        %366 = vst [vmem:[#allocation2 + $0x60] sm:$0xff] 0.0
        %367 = vst [vmem:[#allocation2 + $0xa0] sm:$0xff] 0.0
        %368 = vst [vmem:[#allocation2 + $0xe0] sm:$0xff] 0.0
        %369 = vst [vmem:[#allocation2 + $0x38] sm:$0xff] 0.0
        %370 = vst [vmem:[#allocation2 + $0x78] sm:$0xff] 0.0
        %371 = vst [vmem:[#allocation2 + $0xb8] sm:$0xff] 0.0
        %372 = vst [vmem:[#allocation2 + $0xf8] sm:$0xff] 0.0
        %373 = vst [vmem:[#allocation2 + $0xe8] sm:$0xff] 0.0
        %374 = vst [vmem:[#allocation2 + $0xf0] sm:$0xff] 0.0
        %s375 = scalar_lea.vmem %s272, 32 [#allocation6]
        %v376 = vld [vmem:[%s375] sm:$0xff]
        %v377 = vld [vmem:[%s375 + $0x8] sm:$0xff]
        %v378 = vld [vmem:[%s375 + $0x10] sm:$0xff]
        %v379 = vld [vmem:[%s375 + $0x18] sm:$0xff]
        %380 = vst [vmem:[#allocation2 + $0x28] sm:$0xff] %v376
        %381 = vst [vmem:[#allocation2 + $0x30] sm:$0xff] %v377
        %382 = vst [vmem:[#allocation2 + $0x68] sm:$0xff] %v378
        %383 = vst [vmem:[#allocation2 + $0x70] sm:$0xff] %v379
        %s384 = sadd.s32 %s324, 1
        %s385 = smul.u32 %s384, 128
        %s386 = sld [smem:[#allocation5 + %s385]]
        %v387 = vstv %s386
        %s388 = sadd.s32 %s385, 1
        %s389 = sld [smem:[#allocation5 + %s388]]
        %v390 = vstv %s389
        %s391 = sadd.s32 %s385, 2
        %s392 = sld [smem:[#allocation5 + %s391]]
        %v393 = vstv %s392
        %s394 = sadd.s32 %s385, 3
        %s395 = sld [smem:[#allocation5 + %s394]]
        %v396 = vstv %s395
        %s397 = sadd.s32 %s385, 4
        %s398 = sld [smem:[#allocation5 + %s397]]
        %v399 = vstv %s398
        %s400 = sadd.s32 %s385, 5
        %s401 = sld [smem:[#allocation5 + %s400]]
        %v402 = vstv %s401
        %s403 = sadd.s32 %s385, 6
        %s404 = sld [smem:[#allocation5 + %s403]]
        %v405 = vstv %s404
        %s406 = sadd.s32 %s385, 7
        %s407 = sld [smem:[#allocation5 + %s406]]
        %v408 = vstv %s407
        %v409 = vsel %vm349, %v387, %v390
        %v410 = vsel %vm351, %v409, %v393
        %v411 = vsel %vm353, %v410, %v396
        %v412 = vsel %vm355, %v411, %v399
        %v413 = vsel %vm357, %v412, %v402
        %v414 = vsel %vm359, %v413, %v405
        %v415 = vsel %vm361, %v414, %v408
        %416 = vst [vmem:[#allocation2 + $0xa8] sm:$0xff] %v415
        %417 = vst [vmem:[#allocation2 + $0xb0] sm:$0xff] %v415
        %v418 = vlaneseq
        %v419 = vand.u32 %v418, 127
        %v420 = vadd.s32 %v419, 128
        %vm421 = vcmp.lt.s32.totalorder %v419, 0
        %v422 = vsub.s32 0, %v419
        %v423 = vsel %vm421, %v422, %v419
        %v424 = vshrl.u32 %v423, 4
        %v425 = vand.u32 %v423, 15
        %v426 = vsub.s32 0, %v425
        %v427 = vsel %vm421, %v426, %v425
        %vm428 = vcmp.lt.s32.totalorder %v420, 0
        %v429 = vsub.s32 0, %v420
        %v430 = vsel %vm428, %v429, %v420
        %v431 = vshrl.u32 %v430, 4
        %v432 = vand.u32 %v430, 15
        %v433 = vsub.s32 0, %v432
        %v434 = vsel %vm428, %v433, %v432
        %vm435 = vcmp.ne.s32.totalorder %v427, 0
        %vm436 = vcmp.ne.s32.totalorder %v434, 0
        %vm437 = vcmp.lt.s32.totalorder %v427, 0
        %vm438 = vcmp.lt.s32.totalorder %v434, 0
        %vm439 = vmand %vm437, %vm435
        %vm440 = vmand %vm438, %vm436
        %v441 = vadd.s32 %v427, 16
        %v442 = vadd.s32 %v434, 16
        %v443 = vsel %vm439, %v441, %v427
        %v444 = vsel %vm440, %v442, %v434
        %v445 = vadd.s32 %v443, 4294967295
        %v446 = vadd.s32 %v444, 4294967295
        %vm447 = vcmp.ge.s32.totalorder %v445, 0
        %vm448 = vcmp.ge.s32.totalorder %v446, 0
        %vm449 = vcmp.lt.s32.totalorder %v445, 16
        %vm450 = vcmp.lt.s32.totalorder %v446, 16
        %vm451 = vmand %vm447, %vm449
        %vm452 = vmand %vm448, %vm450
        %v453 = vadd.s32 %v443, 1
        %v454 = vadd.s32 %v444, 1
        %vm455 = vcmp.ge.s32.totalorder %v453, 0
        %vm456 = vcmp.ge.s32.totalorder %v454, 0
        %vm457 = vcmp.lt.s32.totalorder %v453, 16
        %vm458 = vcmp.lt.s32.totalorder %v454, 16
        %vm459 = vmand %vm455, %vm457
        %vm460 = vmand %vm456, %vm458
        %v461 = vld [vmem:[#allocation2] sm:$0xff]
        %v462 = vld [vmem:[#allocation2 + $0x8] sm:$0xff]
        %v463 = vld [vmem:[#allocation2 + $0x10] sm:$0xff]
        %v464 = vld [vmem:[#allocation2 + $0x40] sm:$0xff]
        %v465 = vld [vmem:[#allocation2 + $0x48] sm:$0xff]
        %v466 = vld [vmem:[#allocation2 + $0x50] sm:$0xff]
        %v467 = vld [vmem:[#allocation2 + $0x80] sm:$0xff]
        %v468 = vld [vmem:[#allocation2 + $0x88] sm:$0xff]
        %v469 = vld [vmem:[#allocation2 + $0x90] sm:$0xff]
        %v470 = vld [vmem:[#allocation2 + $0xc0] sm:$0xff]
        %v471 = vld [vmem:[#allocation2 + $0xc8] sm:$0xff]
        %v472 = vld [vmem:[#allocation2 + $0xd0] sm:$0xff]
        %v473 = vsel %vm451, 1, 0
        %v474 = vsel %vm452, 1, 0
        %vm475 = vcmp.eq.s32.totalorder %v473, 1
        %vm476 = vcmp.eq.s32.totalorder %v474, 1
        %489 = vrot.lane.b32.xlu0 %v461, 17
        %v490 = vpop.permute.xlu0 %489
        %491 = vrot.lane.b32.xlu0 %v462, 17
        %v492 = vpop.permute.xlu0 %491
        %493 = vrot.lane.b32.xlu0 %v463, 17
        %v494 = vpop.permute.xlu0 %493
        %495 = vrot.lane.b32.xlu0 %v464, 17
        %v496 = vpop.permute.xlu0 %495
        %497 = vrot.lane.b32.xlu0 %v465, 17
        %v498 = vpop.permute.xlu0 %497
        %499 = vrot.lane.b32.xlu0 %v466, 17
        %v500 = vpop.permute.xlu0 %499
        %501 = vrot.lane.b32.xlu0 %v467, 17
        %v502 = vpop.permute.xlu0 %501
        %503 = vrot.lane.b32.xlu0 %v468, 17
        %v504 = vpop.permute.xlu0 %503
        %505 = vrot.lane.b32.xlu0 %v469, 17
        %v506 = vpop.permute.xlu0 %505
        %507 = vrot.lane.b32.xlu0 %v470, 17
        %v508 = vpop.permute.xlu0 %507
        %509 = vrot.lane.b32.xlu0 %v471, 17
        %v510 = vpop.permute.xlu0 %509
        %511 = vrot.lane.b32.xlu0 %v472, 17
        %v512 = vpop.permute.xlu0 %511
        %vm513 = vcmask 138240
        %v514 = vsel %vm513, %v490, %v492
        %v515 = vsel %vm513, %v492, %v494
        %v516 = vsel %vm513, %v496, %v498
        %v517 = vsel %vm513, %v498, %v500
        %v518 = vsel %vm513, %v502, %v504
        %v519 = vsel %vm513, %v504, %v506
        %v520 = vsel %vm513, %v508, %v510
        %v521 = vsel %vm513, %v510, %v512
        %v530 = vsel %vm475, %v514, 0.0
        %v531 = vsel %vm476, %v515, 0.0
        %v532 = vsel %vm475, %v516, 0.0
        %v533 = vsel %vm476, %v517, 0.0
        %v534 = vsel %vm475, %v518, 0.0
        %v535 = vsel %vm476, %v519, 0.0
        %v536 = vsel %vm475, %v520, 0.0
        %v537 = vsel %vm476, %v521, 0.0
        %v538 = vpack.c.bf16 %v532, %v530
        %v539 = vpack.c.bf16 %v533, %v531
        %v540 = vpack.c.bf16 %v536, %v534
        %v541 = vpack.c.bf16 %v537, %v535
        %v546 = vunpack.c.l.b16 %v538
        %v547 = vunpack.c.l.b16 %v539
        %v548 = vunpack.c.h.b16 %v538
        %v549 = vunpack.c.h.b16 %v539
        %v550 = vunpack.c.l.b16 %v540
        %v551 = vunpack.c.l.b16 %v541
        %v552 = vunpack.c.h.b16 %v540
        %v553 = vunpack.c.h.b16 %v541
        %v554 = vpack.c.b16 %v547, %v546
        %v555 = vpack.c.b16 %v549, %v548
        %v556 = vpack.c.b16 %v551, %v550
        %v557 = vpack.c.b16 %v553, %v552
        %562 = vst [vmem:[#allocation3] sm:$0xff] %v554
        %563 = vst [vmem:[#allocation3 + $0x10] sm:$0xff] %v555
        %564 = vst [vmem:[#allocation3 + $0x20] sm:$0xff] %v556
        %565 = vst [vmem:[#allocation3 + $0x30] sm:$0xff] %v557
        %v566 = vld [vmem:[#allocation2 + $0x20] sm:$0xff]
        %v567 = vld [vmem:[#allocation2 + $0x28] sm:$0xff]
        %v568 = vld [vmem:[#allocation2 + $0x30] sm:$0xff]
        %v569 = vld [vmem:[#allocation2 + $0x60] sm:$0xff]
        %v570 = vld [vmem:[#allocation2 + $0x68] sm:$0xff]
        %v571 = vld [vmem:[#allocation2 + $0x70] sm:$0xff]
        %v572 = vld [vmem:[#allocation2 + $0xa0] sm:$0xff]
        %v573 = vld [vmem:[#allocation2 + $0xa8] sm:$0xff]
        %v574 = vld [vmem:[#allocation2 + $0xb0] sm:$0xff]
        %v575 = vld [vmem:[#allocation2 + $0xe0] sm:$0xff]
        %v576 = vld [vmem:[#allocation2 + $0xe8] sm:$0xff]
        %v577 = vld [vmem:[#allocation2 + $0xf0] sm:$0xff]
        %590 = vrot.lane.b32.xlu0 %v566, 17
        %v591 = vpop.permute.xlu0 %590
        %592 = vrot.lane.b32.xlu0 %v567, 17
        %v593 = vpop.permute.xlu0 %592
        %594 = vrot.lane.b32.xlu0 %v568, 17
        %v595 = vpop.permute.xlu0 %594
        %596 = vrot.lane.b32.xlu0 %v569, 17
        %v597 = vpop.permute.xlu0 %596
        %598 = vrot.lane.b32.xlu0 %v570, 17
        %v599 = vpop.permute.xlu0 %598
        %600 = vrot.lane.b32.xlu0 %v571, 17
        %v601 = vpop.permute.xlu0 %600
        %602 = vrot.lane.b32.xlu0 %v572, 17
        %v603 = vpop.permute.xlu0 %602
        %604 = vrot.lane.b32.xlu0 %v573, 17
        %v605 = vpop.permute.xlu0 %604
        %606 = vrot.lane.b32.xlu0 %v574, 17
        %v607 = vpop.permute.xlu0 %606
        %608 = vrot.lane.b32.xlu0 %v575, 17
        %v609 = vpop.permute.xlu0 %608
        %610 = vrot.lane.b32.xlu0 %v576, 17
        %v611 = vpop.permute.xlu0 %610
        %612 = vrot.lane.b32.xlu0 %v577, 17
        %v613 = vpop.permute.xlu0 %612
        %v614 = vsel %vm513, %v591, %v593
        %v615 = vsel %vm513, %v593, %v595
        %v616 = vsel %vm513, %v597, %v599
        %v617 = vsel %vm513, %v599, %v601
        %v618 = vsel %vm513, %v603, %v605
        %v619 = vsel %vm513, %v605, %v607
        %v620 = vsel %vm513, %v609, %v611
        %v621 = vsel %vm513, %v611, %v613
        %v630 = vsel %vm475, %v614, 0.0
        %v631 = vsel %vm476, %v615, 0.0
        %v632 = vsel %vm475, %v616, 0.0
        %v633 = vsel %vm476, %v617, 0.0
        %v634 = vsel %vm475, %v618, 0.0
        %v635 = vsel %vm476, %v619, 0.0
        %v636 = vsel %vm475, %v620, 0.0
        %v637 = vsel %vm476, %v621, 0.0
        %v638 = vpack.c.bf16 %v632, %v630
        %v639 = vpack.c.bf16 %v633, %v631
        %v640 = vpack.c.bf16 %v636, %v634
        %v641 = vpack.c.bf16 %v637, %v635
        %v646 = vunpack.c.l.b16 %v638
        %v647 = vunpack.c.l.b16 %v639
        %v648 = vunpack.c.h.b16 %v638
        %v649 = vunpack.c.h.b16 %v639
        %v650 = vunpack.c.l.b16 %v640
        %v651 = vunpack.c.l.b16 %v641
        %v652 = vunpack.c.h.b16 %v640
        %v653 = vunpack.c.h.b16 %v641
        %v654 = vpack.c.b16 %v647, %v646
        %v655 = vpack.c.b16 %v649, %v648
        %v656 = vpack.c.b16 %v651, %v650
        %v657 = vpack.c.b16 %v653, %v652
        %662 = vst [vmem:[#allocation3 + $0x8] sm:$0xff] %v654
        %663 = vst [vmem:[#allocation3 + $0x18] sm:$0xff] %v655
        %664 = vst [vmem:[#allocation3 + $0x28] sm:$0xff] %v656
        %665 = vst [vmem:[#allocation3 + $0x38] sm:$0xff] %v657
        %v666 = vld [vmem:[#allocation2] sm:$0xff]
        %v667 = vld [vmem:[#allocation2 + $0x8] sm:$0xff]
        %v668 = vld [vmem:[#allocation2 + $0x10] sm:$0xff]
        %v669 = vld [vmem:[#allocation2 + $0x40] sm:$0xff]
        %v670 = vld [vmem:[#allocation2 + $0x48] sm:$0xff]
        %v671 = vld [vmem:[#allocation2 + $0x50] sm:$0xff]
        %v672 = vld [vmem:[#allocation2 + $0x80] sm:$0xff]
        %v673 = vld [vmem:[#allocation2 + $0x88] sm:$0xff]
        %v674 = vld [vmem:[#allocation2 + $0x90] sm:$0xff]
        %v675 = vld [vmem:[#allocation2 + $0xc0] sm:$0xff]
        %v676 = vld [vmem:[#allocation2 + $0xc8] sm:$0xff]
        %v677 = vld [vmem:[#allocation2 + $0xd0] sm:$0xff]
        %v678 = vpack.c.bf16 %v669, %v666
        %v679 = vpack.c.bf16 %v670, %v667
        %v680 = vpack.c.bf16 %v671, %v668
        %v681 = vpack.c.bf16 %v675, %v672
        %v682 = vpack.c.bf16 %v676, %v673
        %v683 = vpack.c.bf16 %v677, %v674
        %v690 = vunpack.c.l.b16 %v678
        %v691 = vunpack.c.l.b16 %v679
        %v692 = vunpack.c.l.b16 %v680
        %v693 = vunpack.c.h.b16 %v678
        %v694 = vunpack.c.h.b16 %v679
        %v695 = vunpack.c.h.b16 %v680
        %v696 = vunpack.c.l.b16 %v681
        %v697 = vunpack.c.l.b16 %v682
        %v698 = vunpack.c.l.b16 %v683
        %v699 = vunpack.c.h.b16 %v681
        %v700 = vunpack.c.h.b16 %v682
        %v701 = vunpack.c.h.b16 %v683
        %v702 = vpack.c.b16 %v691, %v690
        %v703 = vpack.c.b16 %v692, %v692
        %v704 = vpack.c.b16 %v694, %v693
        %v705 = vpack.c.b16 %v695, %v695
        %v706 = vpack.c.b16 %v697, %v696
        %v707 = vpack.c.b16 %v698, %v698
        %v708 = vpack.c.b16 %v700, %v699
        %v709 = vpack.c.b16 %v701, %v701
        %710 = vrot.lane.b32.xlu0 %v702, 16
        %v711 = vpop.permute.xlu0 %710
        %712 = vrot.lane.b32.xlu0 %v703, 16
        %v713 = vpop.permute.xlu0 %712
        %714 = vrot.lane.b32.xlu0 %v704, 16
        %v715 = vpop.permute.xlu0 %714
        %716 = vrot.lane.b32.xlu0 %v705, 16
        %v717 = vpop.permute.xlu0 %716
        %718 = vrot.lane.b32.xlu0 %v706, 16
        %v719 = vpop.permute.xlu0 %718
        %720 = vrot.lane.b32.xlu0 %v707, 16
        %v721 = vpop.permute.xlu0 %720
        %722 = vrot.lane.b32.xlu0 %v708, 16
        %v723 = vpop.permute.xlu0 %722
        %724 = vrot.lane.b32.xlu0 %v709, 16
        %v725 = vpop.permute.xlu0 %724
        %v726 = vrot.slane %v711, 4
        %v727 = vrot.slane %v713, 4
        %v728 = vrot.slane %v715, 4
        %v729 = vrot.slane %v717, 4
        %v730 = vrot.slane %v719, 4
        %v731 = vrot.slane %v721, 4
        %v732 = vrot.slane %v723, 4
        %v733 = vrot.slane %v725, 4
        %vm734 = vcmask 1043456
        %v735 = vsel %vm734, %v726, %v727
        %vm736 = vcmask 130048
        %v737 = vsel %vm736, %v711, %v735
        %v738 = vsel %vm734, %v728, %v729
        %v739 = vsel %vm736, %v715, %v738
        %v740 = vsel %vm734, %v730, %v731
        %v741 = vsel %vm736, %v719, %v740
        %v742 = vsel %vm734, %v732, %v733
        %v743 = vsel %vm736, %v723, %v742
        %748 = vst [vmem:[#allocation3 + $0x40] sm:$0xff] %v737
        %749 = vst [vmem:[#allocation3 + $0x50] sm:$0xff] %v739
        %750 = vst [vmem:[#allocation3 + $0x60] sm:$0xff] %v741
        %751 = vst [vmem:[#allocation3 + $0x70] sm:$0xff] %v743
        %v752 = vld [vmem:[#allocation2 + $0x20] sm:$0xff]
        %v753 = vld [vmem:[#allocation2 + $0x28] sm:$0xff]
        %v754 = vld [vmem:[#allocation2 + $0x30] sm:$0xff]
        %v755 = vld [vmem:[#allocation2 + $0x60] sm:$0xff]
        %v756 = vld [vmem:[#allocation2 + $0x68] sm:$0xff]
        %v757 = vld [vmem:[#allocation2 + $0x70] sm:$0xff]
        %v758 = vld [vmem:[#allocation2 + $0xa0] sm:$0xff]
        %v759 = vld [vmem:[#allocation2 + $0xa8] sm:$0xff]
        %v760 = vld [vmem:[#allocation2 + $0xb0] sm:$0xff]
        %v761 = vld [vmem:[#allocation2 + $0xe0] sm:$0xff]
        %v762 = vld [vmem:[#allocation2 + $0xe8] sm:$0xff]
        %v763 = vld [vmem:[#allocation2 + $0xf0] sm:$0xff]
        %v764 = vpack.c.bf16 %v755, %v752
        %v765 = vpack.c.bf16 %v756, %v753
        %v766 = vpack.c.bf16 %v757, %v754
        %v767 = vpack.c.bf16 %v761, %v758
        %v768 = vpack.c.bf16 %v762, %v759
        %v769 = vpack.c.bf16 %v763, %v760
        %v776 = vunpack.c.l.b16 %v764
        %v777 = vunpack.c.l.b16 %v765
        %v778 = vunpack.c.l.b16 %v766
        %v779 = vunpack.c.h.b16 %v764
        %v780 = vunpack.c.h.b16 %v765
        %v781 = vunpack.c.h.b16 %v766
        %v782 = vunpack.c.l.b16 %v767
        %v783 = vunpack.c.l.b16 %v768
        %v784 = vunpack.c.l.b16 %v769
        %v785 = vunpack.c.h.b16 %v767
        %v786 = vunpack.c.h.b16 %v768
        %v787 = vunpack.c.h.b16 %v769
        %v788 = vpack.c.b16 %v777, %v776
        %v789 = vpack.c.b16 %v778, %v778
        %v790 = vpack.c.b16 %v780, %v779
        %v791 = vpack.c.b16 %v781, %v781
        %v792 = vpack.c.b16 %v783, %v782
        %v793 = vpack.c.b16 %v784, %v784
        %v794 = vpack.c.b16 %v786, %v785
        %v795 = vpack.c.b16 %v787, %v787
        %796 = vrot.lane.b32.xlu0 %v788, 16
        %v797 = vpop.permute.xlu0 %796
        %798 = vrot.lane.b32.xlu0 %v789, 16
        %v799 = vpop.permute.xlu0 %798
        %800 = vrot.lane.b32.xlu0 %v790, 16
        %v801 = vpop.permute.xlu0 %800
        %802 = vrot.lane.b32.xlu0 %v791, 16
        %v803 = vpop.permute.xlu0 %802
        %804 = vrot.lane.b32.xlu0 %v792, 16
        %v805 = vpop.permute.xlu0 %804
        %806 = vrot.lane.b32.xlu0 %v793, 16
        %v807 = vpop.permute.xlu0 %806
        %808 = vrot.lane.b32.xlu0 %v794, 16
        %v809 = vpop.permute.xlu0 %808
        %810 = vrot.lane.b32.xlu0 %v795, 16
        %v811 = vpop.permute.xlu0 %810
        %v812 = vrot.slane %v797, 4
        %v813 = vrot.slane %v799, 4
        %v814 = vrot.slane %v801, 4
        %v815 = vrot.slane %v803, 4
        %v816 = vrot.slane %v805, 4
        %v817 = vrot.slane %v807, 4
        %v818 = vrot.slane %v809, 4
        %v819 = vrot.slane %v811, 4
        %v820 = vsel %vm734, %v812, %v813
        %v821 = vsel %vm736, %v797, %v820
        %v822 = vsel %vm734, %v814, %v815
        %v823 = vsel %vm736, %v801, %v822
        %v824 = vsel %vm734, %v816, %v817
        %v825 = vsel %vm736, %v805, %v824
        %v826 = vsel %vm734, %v818, %v819
        %v827 = vsel %vm736, %v809, %v826
        %832 = vst [vmem:[#allocation3 + $0x48] sm:$0xff] %v821
        %833 = vst [vmem:[#allocation3 + $0x58] sm:$0xff] %v823
        %834 = vst [vmem:[#allocation3 + $0x68] sm:$0xff] %v825
        %835 = vst [vmem:[#allocation3 + $0x78] sm:$0xff] %v827
        %v836 = vld [vmem:[#allocation2] sm:$0xff]
        %v837 = vld [vmem:[#allocation2 + $0x8] sm:$0xff]
        %v838 = vld [vmem:[#allocation2 + $0x10] sm:$0xff]
        %v839 = vld [vmem:[#allocation2 + $0x40] sm:$0xff]
        %v840 = vld [vmem:[#allocation2 + $0x48] sm:$0xff]
        %v841 = vld [vmem:[#allocation2 + $0x50] sm:$0xff]
        %v842 = vld [vmem:[#allocation2 + $0x80] sm:$0xff]
        %v843 = vld [vmem:[#allocation2 + $0x88] sm:$0xff]
        %v844 = vld [vmem:[#allocation2 + $0x90] sm:$0xff]
        %v845 = vld [vmem:[#allocation2 + $0xc0] sm:$0xff]
        %v846 = vld [vmem:[#allocation2 + $0xc8] sm:$0xff]
        %v847 = vld [vmem:[#allocation2 + $0xd0] sm:$0xff]
        %v848 = vsel %vm459, 1, 0
        %v849 = vsel %vm460, 1, 0
        %vm850 = vcmp.eq.s32.totalorder %v848, 1
        %vm851 = vcmp.eq.s32.totalorder %v849, 1
        %864 = vrot.lane.b32.xlu0 %v836, 15
        %v865 = vpop.permute.xlu0 %864
        %866 = vrot.lane.b32.xlu0 %v837, 15
        %v867 = vpop.permute.xlu0 %866
        %868 = vrot.lane.b32.xlu0 %v838, 15
        %v869 = vpop.permute.xlu0 %868
        %870 = vrot.lane.b32.xlu0 %v839, 15
        %v871 = vpop.permute.xlu0 %870
        %872 = vrot.lane.b32.xlu0 %v840, 15
        %v873 = vpop.permute.xlu0 %872
        %874 = vrot.lane.b32.xlu0 %v841, 15
        %v875 = vpop.permute.xlu0 %874
        %876 = vrot.lane.b32.xlu0 %v842, 15
        %v877 = vpop.permute.xlu0 %876
        %878 = vrot.lane.b32.xlu0 %v843, 15
        %v879 = vpop.permute.xlu0 %878
        %880 = vrot.lane.b32.xlu0 %v844, 15
        %v881 = vpop.permute.xlu0 %880
        %882 = vrot.lane.b32.xlu0 %v845, 15
        %v883 = vpop.permute.xlu0 %882
        %884 = vrot.lane.b32.xlu0 %v846, 15
        %v885 = vpop.permute.xlu0 %884
        %886 = vrot.lane.b32.xlu0 %v847, 15
        %v887 = vpop.permute.xlu0 %886
        %vm888 = vcmask 121856
        %v889 = vsel %vm888, %v865, %v867
        %v890 = vsel %vm888, %v867, %v869
        %v891 = vsel %vm888, %v871, %v873
        %v892 = vsel %vm888, %v873, %v875
        %v893 = vsel %vm888, %v877, %v879
        %v894 = vsel %vm888, %v879, %v881
        %v895 = vsel %vm888, %v883, %v885
        %v896 = vsel %vm888, %v885, %v887
        %v905 = vsel %vm850, %v889, 0.0
        %v906 = vsel %vm851, %v890, 0.0
        %v907 = vsel %vm850, %v891, 0.0
        %v908 = vsel %vm851, %v892, 0.0
        %v909 = vsel %vm850, %v893, 0.0
        %v910 = vsel %vm851, %v894, 0.0
        %v911 = vsel %vm850, %v895, 0.0
        %v912 = vsel %vm851, %v896, 0.0
        %v913 = vpack.c.bf16 %v907, %v905
        %v914 = vpack.c.bf16 %v908, %v906
        %v915 = vpack.c.bf16 %v911, %v909
        %v916 = vpack.c.bf16 %v912, %v910
        %v921 = vunpack.c.l.b16 %v913
        %v922 = vunpack.c.l.b16 %v914
        %v923 = vunpack.c.h.b16 %v913
        %v924 = vunpack.c.h.b16 %v914
        %v925 = vunpack.c.l.b16 %v915
        %v926 = vunpack.c.l.b16 %v916
        %v927 = vunpack.c.h.b16 %v915
        %v928 = vunpack.c.h.b16 %v916
        %v929 = vpack.c.b16 %v922, %v921
        %v930 = vpack.c.b16 %v924, %v923
        %v931 = vpack.c.b16 %v926, %v925
        %v932 = vpack.c.b16 %v928, %v927
        %937 = vst [vmem:[#allocation3 + $0x80] sm:$0xff] %v929
        %938 = vst [vmem:[#allocation3 + $0x90] sm:$0xff] %v930
        %939 = vst [vmem:[#allocation3 + $0xa0] sm:$0xff] %v931
        %940 = vst [vmem:[#allocation3 + $0xb0] sm:$0xff] %v932
        %v941 = vld [vmem:[#allocation2 + $0x20] sm:$0xff]
        %v942 = vld [vmem:[#allocation2 + $0x28] sm:$0xff]
        %v943 = vld [vmem:[#allocation2 + $0x30] sm:$0xff]
        %v944 = vld [vmem:[#allocation2 + $0x60] sm:$0xff]
        %v945 = vld [vmem:[#allocation2 + $0x68] sm:$0xff]
        %v946 = vld [vmem:[#allocation2 + $0x70] sm:$0xff]
        %v947 = vld [vmem:[#allocation2 + $0xa0] sm:$0xff]
        %v948 = vld [vmem:[#allocation2 + $0xa8] sm:$0xff]
        %v949 = vld [vmem:[#allocation2 + $0xb0] sm:$0xff]
        %v950 = vld [vmem:[#allocation2 + $0xe0] sm:$0xff]
        %v951 = vld [vmem:[#allocation2 + $0xe8] sm:$0xff]
        %v952 = vld [vmem:[#allocation2 + $0xf0] sm:$0xff]
        %965 = vrot.lane.b32.xlu0 %v941, 15
        %v966 = vpop.permute.xlu0 %965
        %967 = vrot.lane.b32.xlu0 %v942, 15
        %v968 = vpop.permute.xlu0 %967
        %969 = vrot.lane.b32.xlu0 %v943, 15
        %v970 = vpop.permute.xlu0 %969
        %971 = vrot.lane.b32.xlu0 %v944, 15
        %v972 = vpop.permute.xlu0 %971
        %973 = vrot.lane.b32.xlu0 %v945, 15
        %v974 = vpop.permute.xlu0 %973
        %975 = vrot.lane.b32.xlu0 %v946, 15
        %v976 = vpop.permute.xlu0 %975
        %977 = vrot.lane.b32.xlu0 %v947, 15
        %v978 = vpop.permute.xlu0 %977
        %979 = vrot.lane.b32.xlu0 %v948, 15
        %v980 = vpop.permute.xlu0 %979
        %981 = vrot.lane.b32.xlu0 %v949, 15
        %v982 = vpop.permute.xlu0 %981
        %983 = vrot.lane.b32.xlu0 %v950, 15
        %v984 = vpop.permute.xlu0 %983
        %985 = vrot.lane.b32.xlu0 %v951, 15
        %v986 = vpop.permute.xlu0 %985
        %987 = vrot.lane.b32.xlu0 %v952, 15
        %v988 = vpop.permute.xlu0 %987
        %v989 = vsel %vm888, %v966, %v968
        %v990 = vsel %vm888, %v968, %v970
        %v991 = vsel %vm888, %v972, %v974
        %v992 = vsel %vm888, %v974, %v976
        %v993 = vsel %vm888, %v978, %v980
        %v994 = vsel %vm888, %v980, %v982
        %v995 = vsel %vm888, %v984, %v986
        %v996 = vsel %vm888, %v986, %v988
        %v1005 = vsel %vm850, %v989, 0.0
        %v1006 = vsel %vm851, %v990, 0.0
        %v1007 = vsel %vm850, %v991, 0.0
        %v1008 = vsel %vm851, %v992, 0.0
        %v1009 = vsel %vm850, %v993, 0.0
        %v1010 = vsel %vm851, %v994, 0.0
        %v1011 = vsel %vm850, %v995, 0.0
        %v1012 = vsel %vm851, %v996, 0.0
        %v1013 = vpack.c.bf16 %v1007, %v1005
        %v1014 = vpack.c.bf16 %v1008, %v1006
        %v1015 = vpack.c.bf16 %v1011, %v1009
        %v1016 = vpack.c.bf16 %v1012, %v1010
        %v1021 = vunpack.c.l.b16 %v1013
        %v1022 = vunpack.c.l.b16 %v1014
        %v1023 = vunpack.c.h.b16 %v1013
        %v1024 = vunpack.c.h.b16 %v1014
        %v1025 = vunpack.c.l.b16 %v1015
        %v1026 = vunpack.c.l.b16 %v1016
        %v1027 = vunpack.c.h.b16 %v1015
        %v1028 = vunpack.c.h.b16 %v1016
        %v1029 = vpack.c.b16 %v1022, %v1021
        %v1030 = vpack.c.b16 %v1024, %v1023
        %v1031 = vpack.c.b16 %v1026, %v1025
        %v1032 = vpack.c.b16 %v1028, %v1027
        %1037 = vst [vmem:[#allocation3 + $0x88] sm:$0xff] %v1029
        %1038 = vst [vmem:[#allocation3 + $0x98] sm:$0xff] %v1030
        %1039 = vst [vmem:[#allocation3 + $0xa8] sm:$0xff] %v1031
        %1040 = vst [vmem:[#allocation3 + $0xb8] sm:$0xff] %v1032
        %v1041 = vld [vmem:[#allocation2] sm:$0xff]
        %v1042 = vld [vmem:[#allocation2 + $0x8] sm:$0xff]
        %v1043 = vld [vmem:[#allocation2 + $0x10] sm:$0xff]
        %v1044 = vld [vmem:[#allocation2 + $0x40] sm:$0xff]
        %v1045 = vld [vmem:[#allocation2 + $0x48] sm:$0xff]
        %v1046 = vld [vmem:[#allocation2 + $0x50] sm:$0xff]
        %v1047 = vld [vmem:[#allocation2 + $0x80] sm:$0xff]
        %v1048 = vld [vmem:[#allocation2 + $0x88] sm:$0xff]
        %v1049 = vld [vmem:[#allocation2 + $0x90] sm:$0xff]
        %v1050 = vld [vmem:[#allocation2 + $0xc0] sm:$0xff]
        %v1051 = vld [vmem:[#allocation2 + $0xc8] sm:$0xff]
        %v1052 = vld [vmem:[#allocation2 + $0xd0] sm:$0xff]
        %1065 = vrot.lane.b32.xlu0 %v1041, 1
        %v1066 = vpop.permute.xlu0 %1065
        %1067 = vrot.lane.b32.xlu0 %v1042, 1
        %v1068 = vpop.permute.xlu0 %1067
        %1069 = vrot.lane.b32.xlu0 %v1043, 1
        %v1070 = vpop.permute.xlu0 %1069
        %1071 = vrot.lane.b32.xlu0 %v1044, 1
        %v1072 = vpop.permute.xlu0 %1071
        %1073 = vrot.lane.b32.xlu0 %v1045, 1
        %v1074 = vpop.permute.xlu0 %1073
        %1075 = vrot.lane.b32.xlu0 %v1046, 1
        %v1076 = vpop.permute.xlu0 %1075
        %1077 = vrot.lane.b32.xlu0 %v1047, 1
        %v1078 = vpop.permute.xlu0 %1077
        %1079 = vrot.lane.b32.xlu0 %v1048, 1
        %v1080 = vpop.permute.xlu0 %1079
        %1081 = vrot.lane.b32.xlu0 %v1049, 1
        %v1082 = vpop.permute.xlu0 %1081
        %1083 = vrot.lane.b32.xlu0 %v1050, 1
        %v1084 = vpop.permute.xlu0 %1083
        %1085 = vrot.lane.b32.xlu0 %v1051, 1
        %v1086 = vpop.permute.xlu0 %1085
        %1087 = vrot.lane.b32.xlu0 %v1052, 1
        %v1088 = vpop.permute.xlu0 %1087
        %vm1089 = vcmask 7168
        %v1090 = vsel %vm1089, %v1066, %v1068
        %v1091 = vsel %vm1089, %v1068, %v1070
        %v1092 = vsel %vm1089, %v1072, %v1074
        %v1093 = vsel %vm1089, %v1074, %v1076
        %v1094 = vsel %vm1089, %v1078, %v1080
        %v1095 = vsel %vm1089, %v1080, %v1082
        %v1096 = vsel %vm1089, %v1084, %v1086
        %v1097 = vsel %vm1089, %v1086, %v1088
        %v1106 = vsel %vm475, %v1090, 0.0
        %v1107 = vsel %vm476, %v1091, 0.0
        %v1108 = vsel %vm475, %v1092, 0.0
        %v1109 = vsel %vm476, %v1093, 0.0
        %v1110 = vsel %vm475, %v1094, 0.0
        %v1111 = vsel %vm476, %v1095, 0.0
        %v1112 = vsel %vm475, %v1096, 0.0
        %v1113 = vsel %vm476, %v1097, 0.0
        %v1114 = vpack.c.bf16 %v1108, %v1106
        %v1115 = vpack.c.bf16 %v1109, %v1107
        %v1116 = vpack.c.bf16 %v1112, %v1110
        %v1117 = vpack.c.bf16 %v1113, %v1111
        %v1122 = vunpack.c.l.b16 %v1114
        %v1123 = vunpack.c.l.b16 %v1115
        %v1124 = vunpack.c.h.b16 %v1114
        %v1125 = vunpack.c.h.b16 %v1115
        %v1126 = vunpack.c.l.b16 %v1116
        %v1127 = vunpack.c.l.b16 %v1117
        %v1128 = vunpack.c.h.b16 %v1116
        %v1129 = vunpack.c.h.b16 %v1117
        %v1130 = vpack.c.b16 %v1123, %v1122
        %v1131 = vpack.c.b16 %v1125, %v1124
        %v1132 = vpack.c.b16 %v1127, %v1126
        %v1133 = vpack.c.b16 %v1129, %v1128
        %1138 = vst [vmem:[#allocation3 + $0xc0] sm:$0xff] %v1130
        %1139 = vst [vmem:[#allocation3 + $0xd0] sm:$0xff] %v1131
        %1140 = vst [vmem:[#allocation3 + $0xe0] sm:$0xff] %v1132
        %1141 = vst [vmem:[#allocation3 + $0xf0] sm:$0xff] %v1133
        %v1142 = vld [vmem:[#allocation2 + $0x20] sm:$0xff]
        %v1143 = vld [vmem:[#allocation2 + $0x28] sm:$0xff]
        %v1144 = vld [vmem:[#allocation2 + $0x30] sm:$0xff]
        %v1145 = vld [vmem:[#allocation2 + $0x60] sm:$0xff]
        %v1146 = vld [vmem:[#allocation2 + $0x68] sm:$0xff]
        %v1147 = vld [vmem:[#allocation2 + $0x70] sm:$0xff]
        %v1148 = vld [vmem:[#allocation2 + $0xa0] sm:$0xff]
        %v1149 = vld [vmem:[#allocation2 + $0xa8] sm:$0xff]
        %v1150 = vld [vmem:[#allocation2 + $0xb0] sm:$0xff]
        %v1151 = vld [vmem:[#allocation2 + $0xe0] sm:$0xff]
        %v1152 = vld [vmem:[#allocation2 + $0xe8] sm:$0xff]
        %v1153 = vld [vmem:[#allocation2 + $0xf0] sm:$0xff]
        %1166 = vrot.lane.b32.xlu0 %v1142, 1
        %v1167 = vpop.permute.xlu0 %1166
        %1168 = vrot.lane.b32.xlu0 %v1143, 1
        %v1169 = vpop.permute.xlu0 %1168
        %1170 = vrot.lane.b32.xlu0 %v1144, 1
        %v1171 = vpop.permute.xlu0 %1170
        %1172 = vrot.lane.b32.xlu0 %v1145, 1
        %v1173 = vpop.permute.xlu0 %1172
        %1174 = vrot.lane.b32.xlu0 %v1146, 1
        %v1175 = vpop.permute.xlu0 %1174
        %1176 = vrot.lane.b32.xlu0 %v1147, 1
        %v1177 = vpop.permute.xlu0 %1176
        %1178 = vrot.lane.b32.xlu0 %v1148, 1
        %v1179 = vpop.permute.xlu0 %1178
        %1180 = vrot.lane.b32.xlu0 %v1149, 1
        %v1181 = vpop.permute.xlu0 %1180
        %1182 = vrot.lane.b32.xlu0 %v1150, 1
        %v1183 = vpop.permute.xlu0 %1182
        %1184 = vrot.lane.b32.xlu0 %v1151, 1
        %v1185 = vpop.permute.xlu0 %1184
        %1186 = vrot.lane.b32.xlu0 %v1152, 1
        %v1187 = vpop.permute.xlu0 %1186
        %1188 = vrot.lane.b32.xlu0 %v1153, 1
        %v1189 = vpop.permute.xlu0 %1188
        %v1190 = vsel %vm1089, %v1167, %v1169
        %v1191 = vsel %vm1089, %v1169, %v1171
        %v1192 = vsel %vm1089, %v1173, %v1175
        %v1193 = vsel %vm1089, %v1175, %v1177
        %v1194 = vsel %vm1089, %v1179, %v1181
        %v1195 = vsel %vm1089, %v1181, %v1183
        %v1196 = vsel %vm1089, %v1185, %v1187
        %v1197 = vsel %vm1089, %v1187, %v1189
        %v1206 = vsel %vm475, %v1190, 0.0
        %v1207 = vsel %vm476, %v1191, 0.0
        %v1208 = vsel %vm475, %v1192, 0.0
        %v1209 = vsel %vm476, %v1193, 0.0
        %v1210 = vsel %vm475, %v1194, 0.0
        %v1211 = vsel %vm476, %v1195, 0.0
        %v1212 = vsel %vm475, %v1196, 0.0
        %v1213 = vsel %vm476, %v1197, 0.0
        %v1214 = vpack.c.bf16 %v1208, %v1206
        %v1215 = vpack.c.bf16 %v1209, %v1207
        %v1216 = vpack.c.bf16 %v1212, %v1210
        %v1217 = vpack.c.bf16 %v1213, %v1211
        %v1222 = vunpack.c.l.b16 %v1214
        %v1223 = vunpack.c.l.b16 %v1215
        %v1224 = vunpack.c.h.b16 %v1214
        %v1225 = vunpack.c.h.b16 %v1215
        %v1226 = vunpack.c.l.b16 %v1216
        %v1227 = vunpack.c.l.b16 %v1217
        %v1228 = vunpack.c.h.b16 %v1216
        %v1229 = vunpack.c.h.b16 %v1217
        %v1230 = vpack.c.b16 %v1223, %v1222
        %v1231 = vpack.c.b16 %v1225, %v1224
        %v1232 = vpack.c.b16 %v1227, %v1226
        %v1233 = vpack.c.b16 %v1229, %v1228
        %1238 = vst [vmem:[#allocation3 + $0xc8] sm:$0xff] %v1230
        %1239 = vst [vmem:[#allocation3 + $0xd8] sm:$0xff] %v1231
        %1240 = vst [vmem:[#allocation3 + $0xe8] sm:$0xff] %v1232
        %1241 = vst [vmem:[#allocation3 + $0xf8] sm:$0xff] %v1233
        %v1242 = vld [vmem:[#allocation2 + $0x8] sm:$0xff]
        %v1243 = vld [vmem:[#allocation2 + $0x10] sm:$0xff]
        %v1244 = vld [vmem:[#allocation2 + $0x48] sm:$0xff]
        %v1245 = vld [vmem:[#allocation2 + $0x50] sm:$0xff]
        %v1246 = vld [vmem:[#allocation2 + $0x88] sm:$0xff]
        %v1247 = vld [vmem:[#allocation2 + $0x90] sm:$0xff]
        %v1248 = vld [vmem:[#allocation2 + $0xc8] sm:$0xff]
        %v1249 = vld [vmem:[#allocation2 + $0xd0] sm:$0xff]
        %v1250 = vpack.c.bf16 %v1244, %v1242
        %v1251 = vpack.c.bf16 %v1245, %v1243
        %v1252 = vpack.c.bf16 %v1248, %v1246
        %v1253 = vpack.c.bf16 %v1249, %v1247
        %v1258 = vunpack.c.l.b16 %v1250
        %v1259 = vunpack.c.l.b16 %v1251
        %v1260 = vunpack.c.h.b16 %v1250
        %v1261 = vunpack.c.h.b16 %v1251
        %v1262 = vunpack.c.l.b16 %v1252
        %v1263 = vunpack.c.l.b16 %v1253
        %v1264 = vunpack.c.h.b16 %v1252
        %v1265 = vunpack.c.h.b16 %v1253
        %v1266 = vpack.c.b16 %v1259, %v1258
        %v1267 = vpack.c.b16 %v1261, %v1260
        %v1268 = vpack.c.b16 %v1263, %v1262
        %v1269 = vpack.c.b16 %v1265, %v1264
        %1274 = vst [vmem:[#allocation3 + $0x100] sm:$0xff] %v1266
        %1275 = vst [vmem:[#allocation3 + $0x110] sm:$0xff] %v1267
        %1276 = vst [vmem:[#allocation3 + $0x120] sm:$0xff] %v1268
        %1277 = vst [vmem:[#allocation3 + $0x130] sm:$0xff] %v1269
        %v1278 = vld [vmem:[#allocation2 + $0x28] sm:$0xff]
        %v1279 = vld [vmem:[#allocation2 + $0x30] sm:$0xff]
        %v1280 = vld [vmem:[#allocation2 + $0x68] sm:$0xff]
        %v1281 = vld [vmem:[#allocation2 + $0x70] sm:$0xff]
        %v1282 = vld [vmem:[#allocation2 + $0xa8] sm:$0xff]
        %v1283 = vld [vmem:[#allocation2 + $0xb0] sm:$0xff]
        %v1284 = vld [vmem:[#allocation2 + $0xe8] sm:$0xff]
        %v1285 = vld [vmem:[#allocation2 + $0xf0] sm:$0xff]
        %v1286 = vpack.c.bf16 %v1280, %v1278
        %v1287 = vpack.c.bf16 %v1281, %v1279
        %v1288 = vpack.c.bf16 %v1284, %v1282
        %v1289 = vpack.c.bf16 %v1285, %v1283
        %v1294 = vunpack.c.l.b16 %v1286
        %v1295 = vunpack.c.l.b16 %v1287
        %v1296 = vunpack.c.h.b16 %v1286
        %v1297 = vunpack.c.h.b16 %v1287
        %v1298 = vunpack.c.l.b16 %v1288
        %v1299 = vunpack.c.l.b16 %v1289
        %v1300 = vunpack.c.h.b16 %v1288
        %v1301 = vunpack.c.h.b16 %v1289
        %v1302 = vpack.c.b16 %v1295, %v1294
        %v1303 = vpack.c.b16 %v1297, %v1296
        %v1304 = vpack.c.b16 %v1299, %v1298
        %v1305 = vpack.c.b16 %v1301, %v1300
        %1310 = vst [vmem:[#allocation3 + $0x108] sm:$0xff] %v1302
        %1311 = vst [vmem:[#allocation3 + $0x118] sm:$0xff] %v1303
        %1312 = vst [vmem:[#allocation3 + $0x128] sm:$0xff] %v1304
        %1313 = vst [vmem:[#allocation3 + $0x138] sm:$0xff] %v1305
        %v1314 = vld [vmem:[#allocation2 + $0x8] sm:$0xff]
        %v1315 = vld [vmem:[#allocation2 + $0x10] sm:$0xff]
        %v1316 = vld [vmem:[#allocation2 + $0x18] sm:$0xff]
        %v1317 = vld [vmem:[#allocation2 + $0x48] sm:$0xff]
        %v1318 = vld [vmem:[#allocation2 + $0x50] sm:$0xff]
        %v1319 = vld [vmem:[#allocation2 + $0x58] sm:$0xff]
        %v1320 = vld [vmem:[#allocation2 + $0x88] sm:$0xff]
        %v1321 = vld [vmem:[#allocation2 + $0x90] sm:$0xff]
        %v1322 = vld [vmem:[#allocation2 + $0x98] sm:$0xff]
        %v1323 = vld [vmem:[#allocation2 + $0xc8] sm:$0xff]
        %v1324 = vld [vmem:[#allocation2 + $0xd0] sm:$0xff]
        %v1325 = vld [vmem:[#allocation2 + $0xd8] sm:$0xff]
        %1338 = vrot.lane.b32.xlu0 %v1314, 127
        %v1339 = vpop.permute.xlu0 %1338
        %1340 = vrot.lane.b32.xlu0 %v1315, 127
        %v1341 = vpop.permute.xlu0 %1340
        %1342 = vrot.lane.b32.xlu0 %v1316, 127
        %v1343 = vpop.permute.xlu0 %1342
        %1344 = vrot.lane.b32.xlu0 %v1317, 127
        %v1345 = vpop.permute.xlu0 %1344
        %1346 = vrot.lane.b32.xlu0 %v1318, 127
        %v1347 = vpop.permute.xlu0 %1346
        %1348 = vrot.lane.b32.xlu0 %v1319, 127
        %v1349 = vpop.permute.xlu0 %1348
        %1350 = vrot.lane.b32.xlu0 %v1320, 127
        %v1351 = vpop.permute.xlu0 %1350
        %1352 = vrot.lane.b32.xlu0 %v1321, 127
        %v1353 = vpop.permute.xlu0 %1352
        %1354 = vrot.lane.b32.xlu0 %v1322, 127
        %v1355 = vpop.permute.xlu0 %1354
        %1356 = vrot.lane.b32.xlu0 %v1323, 127
        %v1357 = vpop.permute.xlu0 %1356
        %1358 = vrot.lane.b32.xlu0 %v1324, 127
        %v1359 = vpop.permute.xlu0 %1358
        %1360 = vrot.lane.b32.xlu0 %v1325, 127
        %v1361 = vpop.permute.xlu0 %1360
        %vm1362 = vcmask 1039360
        %v1363 = vsel %vm1362, %v1339, %v1341
        %v1364 = vsel %vm1362, %v1341, %v1343
        %v1365 = vsel %vm1362, %v1345, %v1347
        %v1366 = vsel %vm1362, %v1347, %v1349
        %v1367 = vsel %vm1362, %v1351, %v1353
        %v1368 = vsel %vm1362, %v1353, %v1355
        %v1369 = vsel %vm1362, %v1357, %v1359
        %v1370 = vsel %vm1362, %v1359, %v1361
        %v1379 = vsel %vm850, %v1363, 0.0
        %v1380 = vsel %vm851, %v1364, 0.0
        %v1381 = vsel %vm850, %v1365, 0.0
        %v1382 = vsel %vm851, %v1366, 0.0
        %v1383 = vsel %vm850, %v1367, 0.0
        %v1384 = vsel %vm851, %v1368, 0.0
        %v1385 = vsel %vm850, %v1369, 0.0
        %v1386 = vsel %vm851, %v1370, 0.0
        %v1387 = vpack.c.bf16 %v1381, %v1379
        %v1388 = vpack.c.bf16 %v1382, %v1380
        %v1389 = vpack.c.bf16 %v1385, %v1383
        %v1390 = vpack.c.bf16 %v1386, %v1384
        %v1395 = vunpack.c.l.b16 %v1387
        %v1396 = vunpack.c.l.b16 %v1388
        %v1397 = vunpack.c.h.b16 %v1387
        %v1398 = vunpack.c.h.b16 %v1388
        %v1399 = vunpack.c.l.b16 %v1389
        %v1400 = vunpack.c.l.b16 %v1390
        %v1401 = vunpack.c.h.b16 %v1389
        %v1402 = vunpack.c.h.b16 %v1390
        %v1403 = vpack.c.b16 %v1396, %v1395
        %v1404 = vpack.c.b16 %v1398, %v1397
        %v1405 = vpack.c.b16 %v1400, %v1399
        %v1406 = vpack.c.b16 %v1402, %v1401
        %1411 = vst [vmem:[#allocation3 + $0x140] sm:$0xff] %v1403
        %1412 = vst [vmem:[#allocation3 + $0x150] sm:$0xff] %v1404
        %1413 = vst [vmem:[#allocation3 + $0x160] sm:$0xff] %v1405
        %1414 = vst [vmem:[#allocation3 + $0x170] sm:$0xff] %v1406
        %v1415 = vld [vmem:[#allocation2 + $0x28] sm:$0xff]
        %v1416 = vld [vmem:[#allocation2 + $0x30] sm:$0xff]
        %v1417 = vld [vmem:[#allocation2 + $0x38] sm:$0xff]
        %v1418 = vld [vmem:[#allocation2 + $0x68] sm:$0xff]
        %v1419 = vld [vmem:[#allocation2 + $0x70] sm:$0xff]
        %v1420 = vld [vmem:[#allocation2 + $0x78] sm:$0xff]
        %v1421 = vld [vmem:[#allocation2 + $0xa8] sm:$0xff]
        %v1422 = vld [vmem:[#allocation2 + $0xb0] sm:$0xff]
        %v1423 = vld [vmem:[#allocation2 + $0xb8] sm:$0xff]
        %v1424 = vld [vmem:[#allocation2 + $0xe8] sm:$0xff]
        %v1425 = vld [vmem:[#allocation2 + $0xf0] sm:$0xff]
        %v1426 = vld [vmem:[#allocation2 + $0xf8] sm:$0xff]
        %1439 = vrot.lane.b32.xlu0 %v1415, 127
        %v1440 = vpop.permute.xlu0 %1439
        %1441 = vrot.lane.b32.xlu0 %v1416, 127
        %v1442 = vpop.permute.xlu0 %1441
        %1443 = vrot.lane.b32.xlu0 %v1417, 127
        %v1444 = vpop.permute.xlu0 %1443
        %1445 = vrot.lane.b32.xlu0 %v1418, 127
        %v1446 = vpop.permute.xlu0 %1445
        %1447 = vrot.lane.b32.xlu0 %v1419, 127
        %v1448 = vpop.permute.xlu0 %1447
        %1449 = vrot.lane.b32.xlu0 %v1420, 127
        %v1450 = vpop.permute.xlu0 %1449
        %1451 = vrot.lane.b32.xlu0 %v1421, 127
        %v1452 = vpop.permute.xlu0 %1451
        %1453 = vrot.lane.b32.xlu0 %v1422, 127
        %v1454 = vpop.permute.xlu0 %1453
        %1455 = vrot.lane.b32.xlu0 %v1423, 127
        %v1456 = vpop.permute.xlu0 %1455
        %1457 = vrot.lane.b32.xlu0 %v1424, 127
        %v1458 = vpop.permute.xlu0 %1457
        %1459 = vrot.lane.b32.xlu0 %v1425, 127
        %v1460 = vpop.permute.xlu0 %1459
        %1461 = vrot.lane.b32.xlu0 %v1426, 127
        %v1462 = vpop.permute.xlu0 %1461
        %v1463 = vsel %vm1362, %v1440, %v1442
        %v1464 = vsel %vm1362, %v1442, %v1444
        %v1465 = vsel %vm1362, %v1446, %v1448
        %v1466 = vsel %vm1362, %v1448, %v1450
        %v1467 = vsel %vm1362, %v1452, %v1454
        %v1468 = vsel %vm1362, %v1454, %v1456
        %v1469 = vsel %vm1362, %v1458, %v1460
        %v1470 = vsel %vm1362, %v1460, %v1462
        %v1479 = vsel %vm850, %v1463, 0.0
        %v1480 = vsel %vm851, %v1464, 0.0
        %v1481 = vsel %vm850, %v1465, 0.0
        %v1482 = vsel %vm851, %v1466, 0.0
        %v1483 = vsel %vm850, %v1467, 0.0
        %v1484 = vsel %vm851, %v1468, 0.0
        %v1485 = vsel %vm850, %v1469, 0.0
        %v1486 = vsel %vm851, %v1470, 0.0
        %v1487 = vpack.c.bf16 %v1481, %v1479
        %v1488 = vpack.c.bf16 %v1482, %v1480
        %v1489 = vpack.c.bf16 %v1485, %v1483
        %v1490 = vpack.c.bf16 %v1486, %v1484
        %v1495 = vunpack.c.l.b16 %v1487
        %v1496 = vunpack.c.l.b16 %v1488
        %v1497 = vunpack.c.h.b16 %v1487
        %v1498 = vunpack.c.h.b16 %v1488
        %v1499 = vunpack.c.l.b16 %v1489
        %v1500 = vunpack.c.l.b16 %v1490
        %v1501 = vunpack.c.h.b16 %v1489
        %v1502 = vunpack.c.h.b16 %v1490
        %v1503 = vpack.c.b16 %v1496, %v1495
        %v1504 = vpack.c.b16 %v1498, %v1497
        %v1505 = vpack.c.b16 %v1500, %v1499
        %v1506 = vpack.c.b16 %v1502, %v1501
        %1511 = vst [vmem:[#allocation3 + $0x148] sm:$0xff] %v1503
        %1512 = vst [vmem:[#allocation3 + $0x158] sm:$0xff] %v1504
        %1513 = vst [vmem:[#allocation3 + $0x168] sm:$0xff] %v1505
        %1514 = vst [vmem:[#allocation3 + $0x178] sm:$0xff] %v1506
        %v1515 = vld [vmem:[#allocation2 + $0x8] sm:$0xff]
        %v1516 = vld [vmem:[#allocation2 + $0x10] sm:$0xff]
        %v1517 = vld [vmem:[#allocation2 + $0x18] sm:$0xff]
        %v1518 = vld [vmem:[#allocation2 + $0x48] sm:$0xff]
        %v1519 = vld [vmem:[#allocation2 + $0x50] sm:$0xff]
        %v1520 = vld [vmem:[#allocation2 + $0x58] sm:$0xff]
        %v1521 = vld [vmem:[#allocation2 + $0x88] sm:$0xff]
        %v1522 = vld [vmem:[#allocation2 + $0x90] sm:$0xff]
        %v1523 = vld [vmem:[#allocation2 + $0x98] sm:$0xff]
        %v1524 = vld [vmem:[#allocation2 + $0xc8] sm:$0xff]
        %v1525 = vld [vmem:[#allocation2 + $0xd0] sm:$0xff]
        %v1526 = vld [vmem:[#allocation2 + $0xd8] sm:$0xff]
        %1539 = vrot.lane.b32.xlu0 %v1515, 113
        %v1540 = vpop.permute.xlu0 %1539
        %1541 = vrot.lane.b32.xlu0 %v1516, 113
        %v1542 = vpop.permute.xlu0 %1541
        %1543 = vrot.lane.b32.xlu0 %v1517, 113
        %v1544 = vpop.permute.xlu0 %1543
        %1545 = vrot.lane.b32.xlu0 %v1518, 113
        %v1546 = vpop.permute.xlu0 %1545
        %1547 = vrot.lane.b32.xlu0 %v1519, 113
        %v1548 = vpop.permute.xlu0 %1547
        %1549 = vrot.lane.b32.xlu0 %v1520, 113
        %v1550 = vpop.permute.xlu0 %1549
        %1551 = vrot.lane.b32.xlu0 %v1521, 113
        %v1552 = vpop.permute.xlu0 %1551
        %1553 = vrot.lane.b32.xlu0 %v1522, 113
        %v1554 = vpop.permute.xlu0 %1553
        %1555 = vrot.lane.b32.xlu0 %v1523, 113
        %v1556 = vpop.permute.xlu0 %1555
        %1557 = vrot.lane.b32.xlu0 %v1524, 113
        %v1558 = vpop.permute.xlu0 %1557
        %1559 = vrot.lane.b32.xlu0 %v1525, 113
        %v1560 = vpop.permute.xlu0 %1559
        %1561 = vrot.lane.b32.xlu0 %v1526, 113
        %v1562 = vpop.permute.xlu0 %1561
        %vm1563 = vcmask 924672
        %v1564 = vsel %vm1563, %v1540, %v1542
        %v1565 = vsel %vm1563, %v1542, %v1544
        %v1566 = vsel %vm1563, %v1546, %v1548
        %v1567 = vsel %vm1563, %v1548, %v1550
        %v1568 = vsel %vm1563, %v1552, %v1554
        %v1569 = vsel %vm1563, %v1554, %v1556
        %v1570 = vsel %vm1563, %v1558, %v1560
        %v1571 = vsel %vm1563, %v1560, %v1562
        %v1580 = vsel %vm475, %v1564, 0.0
        %v1581 = vsel %vm476, %v1565, 0.0
        %v1582 = vsel %vm475, %v1566, 0.0
        %v1583 = vsel %vm476, %v1567, 0.0
        %v1584 = vsel %vm475, %v1568, 0.0
        %v1585 = vsel %vm476, %v1569, 0.0
        %v1586 = vsel %vm475, %v1570, 0.0
        %v1587 = vsel %vm476, %v1571, 0.0
        %v1588 = vpack.c.bf16 %v1582, %v1580
        %v1589 = vpack.c.bf16 %v1583, %v1581
        %v1590 = vpack.c.bf16 %v1586, %v1584
        %v1591 = vpack.c.bf16 %v1587, %v1585
        %v1596 = vunpack.c.l.b16 %v1588
        %v1597 = vunpack.c.l.b16 %v1589
        %v1598 = vunpack.c.h.b16 %v1588
        %v1599 = vunpack.c.h.b16 %v1589
        %v1600 = vunpack.c.l.b16 %v1590
        %v1601 = vunpack.c.l.b16 %v1591
        %v1602 = vunpack.c.h.b16 %v1590
        %v1603 = vunpack.c.h.b16 %v1591
        %v1604 = vpack.c.b16 %v1597, %v1596
        %v1605 = vpack.c.b16 %v1599, %v1598
        %v1606 = vpack.c.b16 %v1601, %v1600
        %v1607 = vpack.c.b16 %v1603, %v1602
        %1612 = vst [vmem:[#allocation3 + $0x180] sm:$0xff] %v1604
        %1613 = vst [vmem:[#allocation3 + $0x190] sm:$0xff] %v1605
        %1614 = vst [vmem:[#allocation3 + $0x1a0] sm:$0xff] %v1606
        %1615 = vst [vmem:[#allocation3 + $0x1b0] sm:$0xff] %v1607
        %v1616 = vld [vmem:[#allocation2 + $0x28] sm:$0xff]
        %v1617 = vld [vmem:[#allocation2 + $0x30] sm:$0xff]
        %v1618 = vld [vmem:[#allocation2 + $0x38] sm:$0xff]
        %v1619 = vld [vmem:[#allocation2 + $0x68] sm:$0xff]
        %v1620 = vld [vmem:[#allocation2 + $0x70] sm:$0xff]
        %v1621 = vld [vmem:[#allocation2 + $0x78] sm:$0xff]
        %v1622 = vld [vmem:[#allocation2 + $0xa8] sm:$0xff]
        %v1623 = vld [vmem:[#allocation2 + $0xb0] sm:$0xff]
        %v1624 = vld [vmem:[#allocation2 + $0xb8] sm:$0xff]
        %v1625 = vld [vmem:[#allocation2 + $0xe8] sm:$0xff]
        %v1626 = vld [vmem:[#allocation2 + $0xf0] sm:$0xff]
        %v1627 = vld [vmem:[#allocation2 + $0xf8] sm:$0xff]
        %1640 = vrot.lane.b32.xlu0 %v1616, 113
        %v1641 = vpop.permute.xlu0 %1640
        %1642 = vrot.lane.b32.xlu0 %v1617, 113
        %v1643 = vpop.permute.xlu0 %1642
        %1644 = vrot.lane.b32.xlu0 %v1618, 113
        %v1645 = vpop.permute.xlu0 %1644
        %1646 = vrot.lane.b32.xlu0 %v1619, 113
        %v1647 = vpop.permute.xlu0 %1646
        %1648 = vrot.lane.b32.xlu0 %v1620, 113
        %v1649 = vpop.permute.xlu0 %1648
        %1650 = vrot.lane.b32.xlu0 %v1621, 113
        %v1651 = vpop.permute.xlu0 %1650
        %1652 = vrot.lane.b32.xlu0 %v1622, 113
        %v1653 = vpop.permute.xlu0 %1652
        %1654 = vrot.lane.b32.xlu0 %v1623, 113
        %v1655 = vpop.permute.xlu0 %1654
        %1656 = vrot.lane.b32.xlu0 %v1624, 113
        %v1657 = vpop.permute.xlu0 %1656
        %1658 = vrot.lane.b32.xlu0 %v1625, 113
        %v1659 = vpop.permute.xlu0 %1658
        %1660 = vrot.lane.b32.xlu0 %v1626, 113
        %v1661 = vpop.permute.xlu0 %1660
        %1662 = vrot.lane.b32.xlu0 %v1627, 113
        %v1663 = vpop.permute.xlu0 %1662
        %v1664 = vsel %vm1563, %v1641, %v1643
        %v1665 = vsel %vm1563, %v1643, %v1645
        %v1666 = vsel %vm1563, %v1647, %v1649
        %v1667 = vsel %vm1563, %v1649, %v1651
        %v1668 = vsel %vm1563, %v1653, %v1655
        %v1669 = vsel %vm1563, %v1655, %v1657
        %v1670 = vsel %vm1563, %v1659, %v1661
        %v1671 = vsel %vm1563, %v1661, %v1663
        %v1680 = vsel %vm475, %v1664, 0.0
        %v1681 = vsel %vm476, %v1665, 0.0
        %v1682 = vsel %vm475, %v1666, 0.0
        %v1683 = vsel %vm476, %v1667, 0.0
        %v1684 = vsel %vm475, %v1668, 0.0
        %v1685 = vsel %vm476, %v1669, 0.0
        %v1686 = vsel %vm475, %v1670, 0.0
        %v1687 = vsel %vm476, %v1671, 0.0
        %v1688 = vpack.c.bf16 %v1682, %v1680
        %v1689 = vpack.c.bf16 %v1683, %v1681
        %v1690 = vpack.c.bf16 %v1686, %v1684
        %v1691 = vpack.c.bf16 %v1687, %v1685
        %v1696 = vunpack.c.l.b16 %v1688
        %v1697 = vunpack.c.l.b16 %v1689
        %v1698 = vunpack.c.h.b16 %v1688
        %v1699 = vunpack.c.h.b16 %v1689
        %v1700 = vunpack.c.l.b16 %v1690
        %v1701 = vunpack.c.l.b16 %v1691
        %v1702 = vunpack.c.h.b16 %v1690
        %v1703 = vunpack.c.h.b16 %v1691
        %v1704 = vpack.c.b16 %v1697, %v1696
        %v1705 = vpack.c.b16 %v1699, %v1698
        %v1706 = vpack.c.b16 %v1701, %v1700
        %v1707 = vpack.c.b16 %v1703, %v1702
        %1712 = vst [vmem:[#allocation3 + $0x188] sm:$0xff] %v1704
        %1713 = vst [vmem:[#allocation3 + $0x198] sm:$0xff] %v1705
        %1714 = vst [vmem:[#allocation3 + $0x1a8] sm:$0xff] %v1706
        %1715 = vst [vmem:[#allocation3 + $0x1b8] sm:$0xff] %v1707
        %v1716 = vld [vmem:[#allocation2 + $0x8] sm:$0xff]
        %v1717 = vld [vmem:[#allocation2 + $0x10] sm:$0xff]
        %v1718 = vld [vmem:[#allocation2 + $0x18] sm:$0xff]
        %v1719 = vld [vmem:[#allocation2 + $0x48] sm:$0xff]
        %v1720 = vld [vmem:[#allocation2 + $0x50] sm:$0xff]
        %v1721 = vld [vmem:[#allocation2 + $0x58] sm:$0xff]
        %v1722 = vld [vmem:[#allocation2 + $0x88] sm:$0xff]
        %v1723 = vld [vmem:[#allocation2 + $0x90] sm:$0xff]
        %v1724 = vld [vmem:[#allocation2 + $0x98] sm:$0xff]
        %v1725 = vld [vmem:[#allocation2 + $0xc8] sm:$0xff]
        %v1726 = vld [vmem:[#allocation2 + $0xd0] sm:$0xff]
        %v1727 = vld [vmem:[#allocation2 + $0xd8] sm:$0xff]
        %v1728 = vpack.c.bf16 %v1719, %v1716
        %v1729 = vpack.c.bf16 %v1720, %v1717
        %v1730 = vpack.c.bf16 %v1721, %v1718
        %v1731 = vpack.c.bf16 %v1725, %v1722
        %v1732 = vpack.c.bf16 %v1726, %v1723
        %v1733 = vpack.c.bf16 %v1727, %v1724
        %v1740 = vunpack.c.l.b16 %v1728
        %v1741 = vunpack.c.l.b16 %v1729
        %v1742 = vunpack.c.l.b16 %v1730
        %v1743 = vunpack.c.h.b16 %v1728
        %v1744 = vunpack.c.h.b16 %v1729
        %v1745 = vunpack.c.h.b16 %v1730
        %v1746 = vunpack.c.l.b16 %v1731
        %v1747 = vunpack.c.l.b16 %v1732
        %v1748 = vunpack.c.l.b16 %v1733
        %v1749 = vunpack.c.h.b16 %v1731
        %v1750 = vunpack.c.h.b16 %v1732
        %v1751 = vunpack.c.h.b16 %v1733
        %v1752 = vpack.c.b16 %v1741, %v1740
        %v1753 = vpack.c.b16 %v1742, %v1742
        %v1754 = vpack.c.b16 %v1744, %v1743
        %v1755 = vpack.c.b16 %v1745, %v1745
        %v1756 = vpack.c.b16 %v1747, %v1746
        %v1757 = vpack.c.b16 %v1748, %v1748
        %v1758 = vpack.c.b16 %v1750, %v1749
        %v1759 = vpack.c.b16 %v1751, %v1751
        %1760 = vrot.lane.b32.xlu0 %v1752, 112
        %v1761 = vpop.permute.xlu0 %1760
        %1762 = vrot.lane.b32.xlu0 %v1753, 112
        %v1763 = vpop.permute.xlu0 %1762
        %1764 = vrot.lane.b32.xlu0 %v1754, 112
        %v1765 = vpop.permute.xlu0 %1764
        %1766 = vrot.lane.b32.xlu0 %v1755, 112
        %v1767 = vpop.permute.xlu0 %1766
        %1768 = vrot.lane.b32.xlu0 %v1756, 112
        %v1769 = vpop.permute.xlu0 %1768
        %1770 = vrot.lane.b32.xlu0 %v1757, 112
        %v1771 = vpop.permute.xlu0 %1770
        %1772 = vrot.lane.b32.xlu0 %v1758, 112
        %v1773 = vpop.permute.xlu0 %1772
        %1774 = vrot.lane.b32.xlu0 %v1759, 112
        %v1775 = vpop.permute.xlu0 %1774
        %v1776 = vrot.slane %v1761, 4
        %v1777 = vrot.slane %v1763, 4
        %v1778 = vrot.slane %v1765, 4
        %v1779 = vrot.slane %v1767, 4
        %v1780 = vrot.slane %v1769, 4
        %v1781 = vrot.slane %v1771, 4
        %v1782 = vrot.slane %v1773, 4
        %v1783 = vrot.slane %v1775, 4
        %v1784 = vsel %vm734, %v1776, %v1777
        %vm1785 = vcmask 916480
        %v1786 = vsel %vm1785, %v1761, %v1784
        %v1787 = vsel %vm734, %v1778, %v1779
        %v1788 = vsel %vm1785, %v1765, %v1787
        %v1789 = vsel %vm734, %v1780, %v1781
        %v1790 = vsel %vm1785, %v1769, %v1789
        %v1791 = vsel %vm734, %v1782, %v1783
        %v1792 = vsel %vm1785, %v1773, %v1791
        %1797 = vst [vmem:[#allocation3 + $0x1c0] sm:$0xff] %v1786
        %1798 = vst [vmem:[#allocation3 + $0x1d0] sm:$0xff] %v1788
        %1799 = vst [vmem:[#allocation3 + $0x1e0] sm:$0xff] %v1790
        %1800 = vst [vmem:[#allocation3 + $0x1f0] sm:$0xff] %v1792
        %v1801 = vld [vmem:[#allocation2 + $0x28] sm:$0xff]
        %v1802 = vld [vmem:[#allocation2 + $0x30] sm:$0xff]
        %v1803 = vld [vmem:[#allocation2 + $0x38] sm:$0xff]
        %v1804 = vld [vmem:[#allocation2 + $0x68] sm:$0xff]
        %v1805 = vld [vmem:[#allocation2 + $0x70] sm:$0xff]
        %v1806 = vld [vmem:[#allocation2 + $0x78] sm:$0xff]
        %v1807 = vld [vmem:[#allocation2 + $0xa8] sm:$0xff]
        %v1808 = vld [vmem:[#allocation2 + $0xb0] sm:$0xff]
        %v1809 = vld [vmem:[#allocation2 + $0xb8] sm:$0xff]
        %v1810 = vld [vmem:[#allocation2 + $0xe8] sm:$0xff]
        %v1811 = vld [vmem:[#allocation2 + $0xf0] sm:$0xff]
        %v1812 = vld [vmem:[#allocation2 + $0xf8] sm:$0xff]
        %v1813 = vpack.c.bf16 %v1804, %v1801
        %v1814 = vpack.c.bf16 %v1805, %v1802
        %v1815 = vpack.c.bf16 %v1806, %v1803
        %v1816 = vpack.c.bf16 %v1810, %v1807
        %v1817 = vpack.c.bf16 %v1811, %v1808
        %v1818 = vpack.c.bf16 %v1812, %v1809
        %v1825 = vunpack.c.l.b16 %v1813
        %v1826 = vunpack.c.l.b16 %v1814
        %v1827 = vunpack.c.l.b16 %v1815
        %v1828 = vunpack.c.h.b16 %v1813
        %v1829 = vunpack.c.h.b16 %v1814
        %v1830 = vunpack.c.h.b16 %v1815
        %v1831 = vunpack.c.l.b16 %v1816
        %v1832 = vunpack.c.l.b16 %v1817
        %v1833 = vunpack.c.l.b16 %v1818
        %v1834 = vunpack.c.h.b16 %v1816
        %v1835 = vunpack.c.h.b16 %v1817
        %v1836 = vunpack.c.h.b16 %v1818
        %v1837 = vpack.c.b16 %v1826, %v1825
        %v1838 = vpack.c.b16 %v1827, %v1827
        %v1839 = vpack.c.b16 %v1829, %v1828
        %v1840 = vpack.c.b16 %v1830, %v1830
        %v1841 = vpack.c.b16 %v1832, %v1831
        %v1842 = vpack.c.b16 %v1833, %v1833
        %v1843 = vpack.c.b16 %v1835, %v1834
        %v1844 = vpack.c.b16 %v1836, %v1836
        %1845 = vrot.lane.b32.xlu0 %v1837, 112
        %v1846 = vpop.permute.xlu0 %1845
        %1847 = vrot.lane.b32.xlu0 %v1838, 112
        %v1848 = vpop.permute.xlu0 %1847
        %1849 = vrot.lane.b32.xlu0 %v1839, 112
        %v1850 = vpop.permute.xlu0 %1849
        %1851 = vrot.lane.b32.xlu0 %v1840, 112
        %v1852 = vpop.permute.xlu0 %1851
        %1853 = vrot.lane.b32.xlu0 %v1841, 112
        %v1854 = vpop.permute.xlu0 %1853
        %1855 = vrot.lane.b32.xlu0 %v1842, 112
        %v1856 = vpop.permute.xlu0 %1855
        %1857 = vrot.lane.b32.xlu0 %v1843, 112
        %v1858 = vpop.permute.xlu0 %1857
        %1859 = vrot.lane.b32.xlu0 %v1844, 112
        %v1860 = vpop.permute.xlu0 %1859
        %v1861 = vrot.slane %v1846, 4
        %v1862 = vrot.slane %v1848, 4
        %v1863 = vrot.slane %v1850, 4
        %v1864 = vrot.slane %v1852, 4
        %v1865 = vrot.slane %v1854, 4
        %v1866 = vrot.slane %v1856, 4
        %v1867 = vrot.slane %v1858, 4
        %v1868 = vrot.slane %v1860, 4
        %v1869 = vsel %vm734, %v1861, %v1862
        %v1870 = vsel %vm1785, %v1846, %v1869
        %v1871 = vsel %vm734, %v1863, %v1864
        %v1872 = vsel %vm1785, %v1850, %v1871
        %v1873 = vsel %vm734, %v1865, %v1866
        %v1874 = vsel %vm1785, %v1854, %v1873
        %v1875 = vsel %vm734, %v1867, %v1868
        %v1876 = vsel %vm1785, %v1858, %v1875
        %1881 = vst [vmem:[#allocation3 + $0x1c8] sm:$0xff] %v1870
        %1882 = vst [vmem:[#allocation3 + $0x1d8] sm:$0xff] %v1872
        %1883 = vst [vmem:[#allocation3 + $0x1e8] sm:$0xff] %v1874
        %1884 = vst [vmem:[#allocation3 + $0x1f8] sm:$0xff] %v1876
        %v1885 = vld [vmem:[#allocation2 + $0x8] sm:$0xff]
        %v1886 = vld [vmem:[#allocation2 + $0x10] sm:$0xff]
        %v1887 = vld [vmem:[#allocation2 + $0x18] sm:$0xff]
        %v1888 = vld [vmem:[#allocation2 + $0x48] sm:$0xff]
        %v1889 = vld [vmem:[#allocation2 + $0x50] sm:$0xff]
        %v1890 = vld [vmem:[#allocation2 + $0x58] sm:$0xff]
        %v1891 = vld [vmem:[#allocation2 + $0x88] sm:$0xff]
        %v1892 = vld [vmem:[#allocation2 + $0x90] sm:$0xff]
        %v1893 = vld [vmem:[#allocation2 + $0x98] sm:$0xff]
        %v1894 = vld [vmem:[#allocation2 + $0xc8] sm:$0xff]
        %v1895 = vld [vmem:[#allocation2 + $0xd0] sm:$0xff]
        %v1896 = vld [vmem:[#allocation2 + $0xd8] sm:$0xff]
        %1909 = vrot.lane.b32.xlu0 %v1885, 111
        %v1910 = vpop.permute.xlu0 %1909
        %1911 = vrot.lane.b32.xlu0 %v1886, 111
        %v1912 = vpop.permute.xlu0 %1911
        %1913 = vrot.lane.b32.xlu0 %v1887, 111
        %v1914 = vpop.permute.xlu0 %1913
        %1915 = vrot.lane.b32.xlu0 %v1888, 111
        %v1916 = vpop.permute.xlu0 %1915
        %1917 = vrot.lane.b32.xlu0 %v1889, 111
        %v1918 = vpop.permute.xlu0 %1917
        %1919 = vrot.lane.b32.xlu0 %v1890, 111
        %v1920 = vpop.permute.xlu0 %1919
        %1921 = vrot.lane.b32.xlu0 %v1891, 111
        %v1922 = vpop.permute.xlu0 %1921
        %1923 = vrot.lane.b32.xlu0 %v1892, 111
        %v1924 = vpop.permute.xlu0 %1923
        %1925 = vrot.lane.b32.xlu0 %v1893, 111
        %v1926 = vpop.permute.xlu0 %1925
        %1927 = vrot.lane.b32.xlu0 %v1894, 111
        %v1928 = vpop.permute.xlu0 %1927
        %1929 = vrot.lane.b32.xlu0 %v1895, 111
        %v1930 = vpop.permute.xlu0 %1929
        %1931 = vrot.lane.b32.xlu0 %v1896, 111
        %v1932 = vpop.permute.xlu0 %1931
        %vm1933 = vcmask 908288
        %v1934 = vsel %vm1933, %v1910, %v1912
        %v1935 = vsel %vm1933, %v1912, %v1914
        %v1936 = vsel %vm1933, %v1916, %v1918
        %v1937 = vsel %vm1933, %v1918, %v1920
        %v1938 = vsel %vm1933, %v1922, %v1924
        %v1939 = vsel %vm1933, %v1924, %v1926
        %v1940 = vsel %vm1933, %v1928, %v1930
        %v1941 = vsel %vm1933, %v1930, %v1932
        %v1950 = vsel %vm850, %v1934, 0.0
        %v1951 = vsel %vm851, %v1935, 0.0
        %v1952 = vsel %vm850, %v1936, 0.0
        %v1953 = vsel %vm851, %v1937, 0.0
        %v1954 = vsel %vm850, %v1938, 0.0
        %v1955 = vsel %vm851, %v1939, 0.0
        %v1956 = vsel %vm850, %v1940, 0.0
        %v1957 = vsel %vm851, %v1941, 0.0
        %v1958 = vpack.c.bf16 %v1952, %v1950
        %v1959 = vpack.c.bf16 %v1953, %v1951
        %v1960 = vpack.c.bf16 %v1956, %v1954
        %v1961 = vpack.c.bf16 %v1957, %v1955
        %v1966 = vunpack.c.l.b16 %v1958
        %v1967 = vunpack.c.l.b16 %v1959
        %v1968 = vunpack.c.h.b16 %v1958
        %v1969 = vunpack.c.h.b16 %v1959
        %v1970 = vunpack.c.l.b16 %v1960
        %v1971 = vunpack.c.l.b16 %v1961
        %v1972 = vunpack.c.h.b16 %v1960
        %v1973 = vunpack.c.h.b16 %v1961
        %v1974 = vpack.c.b16 %v1967, %v1966
        %v1975 = vpack.c.b16 %v1969, %v1968
        %v1976 = vpack.c.b16 %v1971, %v1970
        %v1977 = vpack.c.b16 %v1973, %v1972
        %1982 = vst [vmem:[#allocation3 + $0x200] sm:$0xff] %v1974
        %1983 = vst [vmem:[#allocation3 + $0x210] sm:$0xff] %v1975
        %1984 = vst [vmem:[#allocation3 + $0x220] sm:$0xff] %v1976
        %1985 = vst [vmem:[#allocation3 + $0x230] sm:$0xff] %v1977
        %v1986 = vld [vmem:[#allocation2 + $0x28] sm:$0xff]
        %v1987 = vld [vmem:[#allocation2 + $0x30] sm:$0xff]
        %v1988 = vld [vmem:[#allocation2 + $0x38] sm:$0xff]
        %v1989 = vld [vmem:[#allocation2 + $0x68] sm:$0xff]
        %v1990 = vld [vmem:[#allocation2 + $0x70] sm:$0xff]
        %v1991 = vld [vmem:[#allocation2 + $0x78] sm:$0xff]
        %v1992 = vld [vmem:[#allocation2 + $0xa8] sm:$0xff]
        %v1993 = vld [vmem:[#allocation2 + $0xb0] sm:$0xff]
        %v1994 = vld [vmem:[#allocation2 + $0xb8] sm:$0xff]
        %v1995 = vld [vmem:[#allocation2 + $0xe8] sm:$0xff]
        %v1996 = vld [vmem:[#allocation2 + $0xf0] sm:$0xff]
        %v1997 = vld [vmem:[#allocation2 + $0xf8] sm:$0xff]
        %2010 = vrot.lane.b32.xlu0 %v1986, 111
        %v2011 = vpop.permute.xlu0 %2010
        %2012 = vrot.lane.b32.xlu0 %v1987, 111
        %v2013 = vpop.permute.xlu0 %2012
        %2014 = vrot.lane.b32.xlu0 %v1988, 111
        %v2015 = vpop.permute.xlu0 %2014
        %2016 = vrot.lane.b32.xlu0 %v1989, 111
        %v2017 = vpop.permute.xlu0 %2016
        %2018 = vrot.lane.b32.xlu0 %v1990, 111
        %v2019 = vpop.permute.xlu0 %2018
        %2020 = vrot.lane.b32.xlu0 %v1991, 111
        %v2021 = vpop.permute.xlu0 %2020
        %2022 = vrot.lane.b32.xlu0 %v1992, 111
        %v2023 = vpop.permute.xlu0 %2022
        %2024 = vrot.lane.b32.xlu0 %v1993, 111
        %v2025 = vpop.permute.xlu0 %2024
        %2026 = vrot.lane.b32.xlu0 %v1994, 111
        %v2027 = vpop.permute.xlu0 %2026
        %2028 = vrot.lane.b32.xlu0 %v1995, 111
        %v2029 = vpop.permute.xlu0 %2028
        %2030 = vrot.lane.b32.xlu0 %v1996, 111
        %v2031 = vpop.permute.xlu0 %2030
        %2032 = vrot.lane.b32.xlu0 %v1997, 111
        %v2033 = vpop.permute.xlu0 %2032
        %v2034 = vsel %vm1933, %v2011, %v2013
        %v2035 = vsel %vm1933, %v2013, %v2015
        %v2036 = vsel %vm1933, %v2017, %v2019
        %v2037 = vsel %vm1933, %v2019, %v2021
        %v2038 = vsel %vm1933, %v2023, %v2025
        %v2039 = vsel %vm1933, %v2025, %v2027
        %v2040 = vsel %vm1933, %v2029, %v2031
        %v2041 = vsel %vm1933, %v2031, %v2033
        %v2050 = vsel %vm850, %v2034, 0.0
        %v2051 = vsel %vm851, %v2035, 0.0
        %v2052 = vsel %vm850, %v2036, 0.0
        %v2053 = vsel %vm851, %v2037, 0.0
        %v2054 = vsel %vm850, %v2038, 0.0
        %v2055 = vsel %vm851, %v2039, 0.0
        %v2056 = vsel %vm850, %v2040, 0.0
        %v2057 = vsel %vm851, %v2041, 0.0
        %v2058 = vpack.c.bf16 %v2052, %v2050
        %v2059 = vpack.c.bf16 %v2053, %v2051
        %v2060 = vpack.c.bf16 %v2056, %v2054
        %v2061 = vpack.c.bf16 %v2057, %v2055
        %v2066 = vunpack.c.l.b16 %v2058
        %v2067 = vunpack.c.l.b16 %v2059
        %v2068 = vunpack.c.h.b16 %v2058
        %v2069 = vunpack.c.h.b16 %v2059
        %v2070 = vunpack.c.l.b16 %v2060
        %v2071 = vunpack.c.l.b16 %v2061
        %v2072 = vunpack.c.h.b16 %v2060
        %v2073 = vunpack.c.h.b16 %v2061
        %v2074 = vpack.c.b16 %v2067, %v2066
        %v2075 = vpack.c.b16 %v2069, %v2068
        %v2076 = vpack.c.b16 %v2071, %v2070
        %v2077 = vpack.c.b16 %v2073, %v2072
        %2082 = vst [vmem:[#allocation3 + $0x208] sm:$0xff] %v2074
        %2083 = vst [vmem:[#allocation3 + $0x218] sm:$0xff] %v2075
        %2084 = vst [vmem:[#allocation3 + $0x228] sm:$0xff] %v2076
        %2085 = vst [vmem:[#allocation3 + $0x238] sm:$0xff] %v2077
        %v2086 = vld [vmem:[%s2] sm:$0xff]
        %v2087 = vld [vmem:[%s2 + $0x8] sm:$0xf]
        %v2088 = vld [vmem:[%s2 + $0xc] sm:$0xff]
        %v2089 = vld [vmem:[%s2 + $0x14] sm:$0xf]
        %v2090 = vld [vmem:[#allocation3] sm:$0xff]
        %v2091 = vld [vmem:[#allocation3 + $0x8] sm:$0xff]
        %v2092 = vld [vmem:[#allocation3 + $0x10] sm:$0xff]
        %v2093 = vld [vmem:[#allocation3 + $0x18] sm:$0xff]
        %v2094 = vld [vmem:[#allocation3 + $0x20] sm:$0xff]
        %v2095 = vld [vmem:[#allocation3 + $0x28] sm:$0xff]
        %v2096 = vld [vmem:[#allocation3 + $0x30] sm:$0xff]
        %v2097 = vld [vmem:[#allocation3 + $0x38] sm:$0xff]
        %v2098 = vld [vmem:[#allocation3 + $0x40] sm:$0xff]
        %v2099 = vld [vmem:[#allocation3 + $0x48] sm:$0xff]
        %v2100 = vld [vmem:[#allocation3 + $0x50] sm:$0xff]
        %v2101 = vld [vmem:[#allocation3 + $0x58] sm:$0xff]
        %v2102 = vld [vmem:[#allocation3 + $0x60] sm:$0xff]
        %v2103 = vld [vmem:[#allocation3 + $0x68] sm:$0xff]
        %v2104 = vld [vmem:[#allocation3 + $0x70] sm:$0xff]
        %v2105 = vld [vmem:[#allocation3 + $0x78] sm:$0xff]
        %v2106 = vld [vmem:[#allocation3 + $0x80] sm:$0xff]
        %v2107 = vld [vmem:[#allocation3 + $0x88] sm:$0xff]
        %v2108 = vld [vmem:[#allocation3 + $0x90] sm:$0xff]
        %v2109 = vld [vmem:[#allocation3 + $0x98] sm:$0xff]
        %v2110 = vld [vmem:[#allocation3 + $0xa0] sm:$0xff]
        %v2111 = vld [vmem:[#allocation3 + $0xa8] sm:$0xff]
        %v2112 = vld [vmem:[#allocation3 + $0xb0] sm:$0xff]
        %v2113 = vld [vmem:[#allocation3 + $0xb8] sm:$0xff]
        %v2114 = vld [vmem:[#allocation3 + $0xc0] sm:$0xff]
        %v2115 = vld [vmem:[#allocation3 + $0xc8] sm:$0xff]
        %v2116 = vld [vmem:[#allocation3 + $0xd0] sm:$0xff]
        %v2117 = vld [vmem:[#allocation3 + $0xd8] sm:$0xff]
        %v2118 = vld [vmem:[#allocation3 + $0xe0] sm:$0xff]
        %v2119 = vld [vmem:[#allocation3 + $0xe8] sm:$0xff]
        %v2120 = vld [vmem:[#allocation3 + $0xf0] sm:$0xff]
        %v2121 = vld [vmem:[#allocation3 + $0xf8] sm:$0xff]
        %v2122 = vld [vmem:[#allocation3 + $0x100] sm:$0xff]
        %v2123 = vld [vmem:[#allocation3 + $0x108] sm:$0xff]
        %v2124 = vld [vmem:[#allocation3 + $0x110] sm:$0xff]
        %v2125 = vld [vmem:[#allocation3 + $0x118] sm:$0xff]
        %v2126 = vld [vmem:[#allocation3 + $0x120] sm:$0xff]
        %v2127 = vld [vmem:[#allocation3 + $0x128] sm:$0xff]
        %v2128 = vld [vmem:[#allocation3 + $0x130] sm:$0xff]
        %v2129 = vld [vmem:[#allocation3 + $0x138] sm:$0xff]
        %v2130 = vld [vmem:[#allocation3 + $0x140] sm:$0xff]
        %v2131 = vld [vmem:[#allocation3 + $0x148] sm:$0xff]
        %v2132 = vld [vmem:[#allocation3 + $0x150] sm:$0xff]
        %v2133 = vld [vmem:[#allocation3 + $0x158] sm:$0xff]
        %v2134 = vld [vmem:[#allocation3 + $0x160] sm:$0xff]
        %v2135 = vld [vmem:[#allocation3 + $0x168] sm:$0xff]
        %v2136 = vld [vmem:[#allocation3 + $0x170] sm:$0xff]
        %v2137 = vld [vmem:[#allocation3 + $0x178] sm:$0xff]
        %v2138 = vld [vmem:[#allocation3 + $0x180] sm:$0xff]
        %v2139 = vld [vmem:[#allocation3 + $0x188] sm:$0xff]
        %v2140 = vld [vmem:[#allocation3 + $0x190] sm:$0xff]
        %v2141 = vld [vmem:[#allocation3 + $0x198] sm:$0xff]
        %v2142 = vld [vmem:[#allocation3 + $0x1a0] sm:$0xff]
        %v2143 = vld [vmem:[#allocation3 + $0x1a8] sm:$0xff]
        %v2144 = vld [vmem:[#allocation3 + $0x1b0] sm:$0xff]
        %v2145 = vld [vmem:[#allocation3 + $0x1b8] sm:$0xff]
        %v2146 = vld [vmem:[#allocation3 + $0x1c0] sm:$0xff]
        %v2147 = vld [vmem:[#allocation3 + $0x1c8] sm:$0xff]
        %v2148 = vld [vmem:[#allocation3 + $0x1d0] sm:$0xff]
        %v2149 = vld [vmem:[#allocation3 + $0x1d8] sm:$0xff]
        %v2150 = vld [vmem:[#allocation3 + $0x1e0] sm:$0xff]
        %v2151 = vld [vmem:[#allocation3 + $0x1e8] sm:$0xff]
        %v2152 = vld [vmem:[#allocation3 + $0x1f0] sm:$0xff]
        %v2153 = vld [vmem:[#allocation3 + $0x1f8] sm:$0xff]
        %v2154 = vld [vmem:[#allocation3 + $0x200] sm:$0xff]
        %v2155 = vld [vmem:[#allocation3 + $0x208] sm:$0xff]
        %v2156 = vld [vmem:[#allocation3 + $0x210] sm:$0xff]
        %v2157 = vld [vmem:[#allocation3 + $0x218] sm:$0xff]
        %v2158 = vld [vmem:[#allocation3 + $0x220] sm:$0xff]
        %v2159 = vld [vmem:[#allocation3 + $0x228] sm:$0xff]
        %v2160 = vld [vmem:[#allocation3 + $0x230] sm:$0xff]
        %v2161 = vld [vmem:[#allocation3 + $0x238] sm:$0xff]
        %v2162 = vld [vmem:[%s3] sm:$0xff]
        %v2163 = vld [vmem:[%s3 + $0x8] sm:$0xff]
        %2165 = vset.pattern.permute.xlu0 0
        %2166 = vperm.xlu0 %2165, %v2162
        %v2167 = vpop.permute.xlu0 %2166
        %2170 = vset.pattern.permute.xlu0 0
        %2171 = vperm.xlu0 %2170, %v2163
        %v2172 = vpop.permute.xlu0 %2171
        %v2178 = vunpack.c.l.b16 %v2086
        %v2179 = vunpack.c.h.b16 %v2086
        %v2180 = vunpack.c.l.b16 %v2087
        %v2181 = vunpack.c.l.b16 %v2088
        %v2182 = vunpack.c.h.b16 %v2088
        %v2183 = vunpack.c.l.b16 %v2089
        %v2184 = vpack.c.b16 %v2181, %v2178
        %v2185 = vpack.c.b16 %v2182, %v2179
        %v2186 = vpack.c.b16 %v2183, %v2180
        %v2261 = vunpack.c.l.b16 %v2090
        %v2262 = vunpack.c.h.b16 %v2090
        %v2263 = vunpack.c.l.b16 %v2091
        %v2264 = vunpack.c.h.b16 %v2091
        %v2265 = vunpack.c.l.b16 %v2092
        %v2266 = vunpack.c.h.b16 %v2092
        %v2267 = vunpack.c.l.b16 %v2093
        %v2268 = vunpack.c.h.b16 %v2093
        %v2269 = vunpack.c.l.b16 %v2094
        %v2270 = vunpack.c.h.b16 %v2094
        %v2271 = vunpack.c.l.b16 %v2095
        %v2272 = vunpack.c.h.b16 %v2095
        %v2273 = vunpack.c.l.b16 %v2096
        %v2274 = vunpack.c.h.b16 %v2096
        %v2275 = vunpack.c.l.b16 %v2097
        %v2276 = vunpack.c.h.b16 %v2097
        %v2277 = vunpack.c.l.b16 %v2098
        %v2278 = vunpack.c.h.b16 %v2098
        %v2279 = vunpack.c.l.b16 %v2099
        %v2280 = vunpack.c.h.b16 %v2099
        %v2281 = vunpack.c.l.b16 %v2100
        %v2282 = vunpack.c.h.b16 %v2100
        %v2283 = vunpack.c.l.b16 %v2101
        %v2284 = vunpack.c.h.b16 %v2101
        %v2285 = vunpack.c.l.b16 %v2102
        %v2286 = vunpack.c.h.b16 %v2102
        %v2287 = vunpack.c.l.b16 %v2103
        %v2288 = vunpack.c.h.b16 %v2103
        %v2289 = vunpack.c.l.b16 %v2104
        %v2290 = vunpack.c.h.b16 %v2104
        %v2291 = vunpack.c.l.b16 %v2105
        %v2292 = vunpack.c.h.b16 %v2105
        %v2293 = vunpack.c.l.b16 %v2106
        %v2294 = vunpack.c.h.b16 %v2106
        %v2295 = vunpack.c.l.b16 %v2107
        %v2296 = vunpack.c.h.b16 %v2107
        %v2297 = vunpack.c.l.b16 %v2108
        %v2298 = vunpack.c.h.b16 %v2108
        %v2299 = vunpack.c.l.b16 %v2109
        %v2300 = vunpack.c.h.b16 %v2109
        %v2301 = vunpack.c.l.b16 %v2110
        %v2302 = vunpack.c.h.b16 %v2110
        %v2303 = vunpack.c.l.b16 %v2111
        %v2304 = vunpack.c.h.b16 %v2111
        %v2305 = vunpack.c.l.b16 %v2112
        %v2306 = vunpack.c.h.b16 %v2112
        %v2307 = vunpack.c.l.b16 %v2113
        %v2308 = vunpack.c.h.b16 %v2113
        %v2309 = vunpack.c.l.b16 %v2114
        %v2310 = vunpack.c.h.b16 %v2114
        %v2311 = vunpack.c.l.b16 %v2115
        %v2312 = vunpack.c.h.b16 %v2115
        %v2313 = vunpack.c.l.b16 %v2116
        %v2314 = vunpack.c.h.b16 %v2116
        %v2315 = vunpack.c.l.b16 %v2117
        %v2316 = vunpack.c.h.b16 %v2117
        %v2317 = vunpack.c.l.b16 %v2118
        %v2318 = vunpack.c.h.b16 %v2118
        %v2319 = vunpack.c.l.b16 %v2119
        %v2320 = vunpack.c.h.b16 %v2119
        %v2321 = vunpack.c.l.b16 %v2120
        %v2322 = vunpack.c.h.b16 %v2120
        %v2323 = vunpack.c.l.b16 %v2121
        %v2324 = vunpack.c.h.b16 %v2121
        %v2325 = vunpack.c.l.b16 %v2122
        %v2326 = vunpack.c.h.b16 %v2122
        %v2327 = vunpack.c.l.b16 %v2123
        %v2328 = vunpack.c.h.b16 %v2123
        %v2329 = vunpack.c.l.b16 %v2124
        %v2330 = vunpack.c.h.b16 %v2124
        %v2331 = vunpack.c.l.b16 %v2125
        %v2332 = vunpack.c.h.b16 %v2125
        %v2333 = vunpack.c.l.b16 %v2126
        %v2334 = vunpack.c.h.b16 %v2126
        %v2335 = vunpack.c.l.b16 %v2127
        %v2336 = vunpack.c.h.b16 %v2127
        %v2337 = vunpack.c.l.b16 %v2128
        %v2338 = vunpack.c.h.b16 %v2128
        %v2339 = vunpack.c.l.b16 %v2129
        %v2340 = vunpack.c.h.b16 %v2129
        %v2341 = vunpack.c.l.b16 %v2130
        %v2342 = vunpack.c.h.b16 %v2130
        %v2343 = vunpack.c.l.b16 %v2131
        %v2344 = vunpack.c.h.b16 %v2131
        %v2345 = vunpack.c.l.b16 %v2132
        %v2346 = vunpack.c.h.b16 %v2132
        %v2347 = vunpack.c.l.b16 %v2133
        %v2348 = vunpack.c.h.b16 %v2133
        %v2349 = vunpack.c.l.b16 %v2134
        %v2350 = vunpack.c.h.b16 %v2134
        %v2351 = vunpack.c.l.b16 %v2135
        %v2352 = vunpack.c.h.b16 %v2135
        %v2353 = vunpack.c.l.b16 %v2136
        %v2354 = vunpack.c.h.b16 %v2136
        %v2355 = vunpack.c.l.b16 %v2137
        %v2356 = vunpack.c.h.b16 %v2137
        %v2357 = vunpack.c.l.b16 %v2138
        %v2358 = vunpack.c.h.b16 %v2138
        %v2359 = vunpack.c.l.b16 %v2139
        %v2360 = vunpack.c.h.b16 %v2139
        %v2361 = vunpack.c.l.b16 %v2140
        %v2362 = vunpack.c.h.b16 %v2140
        %v2363 = vunpack.c.l.b16 %v2141
        %v2364 = vunpack.c.h.b16 %v2141
        %v2365 = vunpack.c.l.b16 %v2142
        %v2366 = vunpack.c.h.b16 %v2142
        %v2367 = vunpack.c.l.b16 %v2143
        %v2368 = vunpack.c.h.b16 %v2143
        %v2369 = vunpack.c.l.b16 %v2144
        %v2370 = vunpack.c.h.b16 %v2144
        %v2371 = vunpack.c.l.b16 %v2145
        %v2372 = vunpack.c.h.b16 %v2145
        %v2373 = vunpack.c.l.b16 %v2146
        %v2374 = vunpack.c.h.b16 %v2146
        %v2375 = vunpack.c.l.b16 %v2147
        %v2376 = vunpack.c.h.b16 %v2147
        %v2377 = vunpack.c.l.b16 %v2148
        %v2378 = vunpack.c.h.b16 %v2148
        %v2379 = vunpack.c.l.b16 %v2149
        %v2380 = vunpack.c.h.b16 %v2149
        %v2381 = vunpack.c.l.b16 %v2150
        %v2382 = vunpack.c.h.b16 %v2150
        %v2383 = vunpack.c.l.b16 %v2151
        %v2384 = vunpack.c.h.b16 %v2151
        %v2385 = vunpack.c.l.b16 %v2152
        %v2386 = vunpack.c.h.b16 %v2152
        %v2387 = vunpack.c.l.b16 %v2153
        %v2388 = vunpack.c.h.b16 %v2153
        %v2389 = vunpack.c.l.b16 %v2154
        %v2390 = vunpack.c.h.b16 %v2154
        %v2391 = vunpack.c.l.b16 %v2155
        %v2392 = vunpack.c.h.b16 %v2155
        %v2393 = vunpack.c.l.b16 %v2156
        %v2394 = vunpack.c.h.b16 %v2156
        %v2395 = vunpack.c.l.b16 %v2157
        %v2396 = vunpack.c.h.b16 %v2157
        %v2397 = vunpack.c.l.b16 %v2158
        %v2398 = vunpack.c.h.b16 %v2158
        %v2399 = vunpack.c.l.b16 %v2159
        %v2400 = vunpack.c.h.b16 %v2159
        %v2401 = vunpack.c.l.b16 %v2160
        %v2402 = vunpack.c.h.b16 %v2160
        %v2403 = vunpack.c.l.b16 %v2161
        %v2404 = vunpack.c.h.b16 %v2161
        %v2405 = vpack.c.b16 %v2265, %v2261
        %v2406 = vpack.c.b16 %v2266, %v2262
        %v2407 = vpack.c.b16 %v2267, %v2263
        %v2408 = vpack.c.b16 %v2268, %v2264
        %v2409 = vpack.c.b16 %v2273, %v2269
        %v2410 = vpack.c.b16 %v2274, %v2270
        %v2411 = vpack.c.b16 %v2275, %v2271
        %v2412 = vpack.c.b16 %v2276, %v2272
        %v2413 = vpack.c.b16 %v2281, %v2277
        %v2414 = vpack.c.b16 %v2282, %v2278
        %v2415 = vpack.c.b16 %v2283, %v2279
        %v2416 = vpack.c.b16 %v2284, %v2280
        %v2417 = vpack.c.b16 %v2289, %v2285
        %v2418 = vpack.c.b16 %v2290, %v2286
        %v2419 = vpack.c.b16 %v2291, %v2287
        %v2420 = vpack.c.b16 %v2292, %v2288
        %v2421 = vpack.c.b16 %v2297, %v2293
        %v2422 = vpack.c.b16 %v2298, %v2294
        %v2423 = vpack.c.b16 %v2299, %v2295
        %v2424 = vpack.c.b16 %v2300, %v2296
        %v2425 = vpack.c.b16 %v2305, %v2301
        %v2426 = vpack.c.b16 %v2306, %v2302
        %v2427 = vpack.c.b16 %v2307, %v2303
        %v2428 = vpack.c.b16 %v2308, %v2304
        %v2429 = vpack.c.b16 %v2313, %v2309
        %v2430 = vpack.c.b16 %v2314, %v2310
        %v2431 = vpack.c.b16 %v2315, %v2311
        %v2432 = vpack.c.b16 %v2316, %v2312
        %v2433 = vpack.c.b16 %v2321, %v2317
        %v2434 = vpack.c.b16 %v2322, %v2318
        %v2435 = vpack.c.b16 %v2323, %v2319
        %v2436 = vpack.c.b16 %v2324, %v2320
        %v2437 = vpack.c.b16 %v2329, %v2325
        %v2438 = vpack.c.b16 %v2330, %v2326
        %v2439 = vpack.c.b16 %v2331, %v2327
        %v2440 = vpack.c.b16 %v2332, %v2328
        %v2441 = vpack.c.b16 %v2337, %v2333
        %v2442 = vpack.c.b16 %v2338, %v2334
        %v2443 = vpack.c.b16 %v2339, %v2335
        %v2444 = vpack.c.b16 %v2340, %v2336
        %v2445 = vpack.c.b16 %v2345, %v2341
        %v2446 = vpack.c.b16 %v2346, %v2342
        %v2447 = vpack.c.b16 %v2347, %v2343
        %v2448 = vpack.c.b16 %v2348, %v2344
        %v2449 = vpack.c.b16 %v2353, %v2349
        %v2450 = vpack.c.b16 %v2354, %v2350
        %v2451 = vpack.c.b16 %v2355, %v2351
        %v2452 = vpack.c.b16 %v2356, %v2352
        %v2453 = vpack.c.b16 %v2361, %v2357
        %v2454 = vpack.c.b16 %v2362, %v2358
        %v2455 = vpack.c.b16 %v2363, %v2359
        %v2456 = vpack.c.b16 %v2364, %v2360
        %v2457 = vpack.c.b16 %v2369, %v2365
        %v2458 = vpack.c.b16 %v2370, %v2366
        %v2459 = vpack.c.b16 %v2371, %v2367
        %v2460 = vpack.c.b16 %v2372, %v2368
        %v2461 = vpack.c.b16 %v2377, %v2373
        %v2462 = vpack.c.b16 %v2378, %v2374
        %v2463 = vpack.c.b16 %v2379, %v2375
        %v2464 = vpack.c.b16 %v2380, %v2376
        %v2465 = vpack.c.b16 %v2385, %v2381
        %v2466 = vpack.c.b16 %v2386, %v2382
        %v2467 = vpack.c.b16 %v2387, %v2383
        %v2468 = vpack.c.b16 %v2388, %v2384
        %v2469 = vpack.c.b16 %v2393, %v2389
        %v2470 = vpack.c.b16 %v2394, %v2390
        %v2471 = vpack.c.b16 %v2395, %v2391
        %v2472 = vpack.c.b16 %v2396, %v2392
        %v2473 = vpack.c.b16 %v2401, %v2397
        %v2474 = vpack.c.b16 %v2402, %v2398
        %v2475 = vpack.c.b16 %v2403, %v2399
        %v2476 = vpack.c.b16 %v2404, %v2400
        %vm2549 = vcmask 261120
        %v2551 = vsel %vm2549, %v2186, 0
        %2553 = vmatprep.subr.bf16.mxu0 %v2434
        %2554 = vmatpush1.bf16.msra.mxu0 %v2433
        %2555 = vmatprep.subr.bf16.mxu0 %v2430
        %2556 = vmatpush1.bf16.msra.mxu0 %v2429
        %2557 = vmatprep.subr.bf16.mxu0 %v2426
        %2558 = vmatpush1.bf16.msra.mxu0 %v2425
        %2559 = vmatprep.subr.bf16.mxu0 %v2422
        %2560 = vmatpush1.bf16.msra.mxu0 %v2421
        %2561 = vmatprep.subr.bf16.mxu0 %v2418
        %2562 = vmatpush1.bf16.msra.mxu0 %v2417
        %2563 = vmatprep.subr.bf16.mxu0 %v2414
        %2564 = vmatpush1.bf16.msra.mxu0 %v2413
        %2565 = vmatprep.subr.bf16.mxu0 %v2410
        %2566 = vmatpush1.bf16.msra.mxu0 %v2409
        %2567 = vmatprep.subr.bf16.mxu0 %v2406
        %2568 = vmatpush1.bf16.msra.mxu0 %v2405
        %2569 = vmatprep.subr.bf16.mxu0 %v2466
        %2570 = vmatpush2.bf16.msra.mxu0 %v2465
        %2571 = vmatprep.subr.bf16.mxu0 %v2462
        %2572 = vmatpush2.bf16.msra.mxu0 %v2461
        %2573 = vmatprep.subr.bf16.mxu0 %v2458
        %2574 = vmatpush2.bf16.msra.mxu0 %v2457
        %2575 = vmatprep.subr.bf16.mxu0 %v2454
        %2576 = vmatpush2.bf16.msra.mxu0 %v2453
        %2577 = vmatprep.subr.bf16.mxu0 %v2450
        %2578 = vmatpush2.bf16.msra.mxu0 %v2449
        %2579 = vmatprep.subr.bf16.mxu0 %v2446
        %2580 = vmatpush2.bf16.msra.mxu0 %v2445
        %2581 = vmatprep.subr.bf16.mxu0 %v2442
        %2582 = vmatpush2.bf16.msra.mxu0 %v2441
        %2583 = vmatprep.subr.bf16.mxu0 %v2438
        %2584 = vmatpush2.bf16.msra.mxu0 %v2437
        %2585 = vmatprep.mubr.bf16.mxu0 %v2185
        %2586 = vmatmul.mubr.bf16.gmra.mxu0 %v2184
        %v2587 = vpop.f32.mrf.mxu0
        %v2588 = vadd.f32 %v2167, %v2587
        %v2589 = vpop.f32.mrf.mxu0
        %v2590 = vadd.f32 %v2167, %v2589
        %v2591 = vpop.f32.mrf.mxu0
        %v2592 = vadd.f32 %v2172, %v2591
        %v2593 = vpop.f32.mrf.mxu0
        %v2594 = vadd.f32 %v2172, %v2593
        %2595 = vdwg.mxu0
        %2596 = vmatprep.subr.bf16.mxu0 0
        %2597 = vmatpush1.bf16.msra.mxu0 0
        %2598 = vmatprep.subr.bf16.mxu0 0
        %2599 = vmatpush1.bf16.msra.mxu0 0
        %2600 = vmatprep.subr.bf16.mxu0 0
        %2601 = vmatpush1.bf16.msra.mxu0 0
        %2602 = vmatprep.subr.bf16.mxu0 0
        %2603 = vmatpush1.bf16.msra.mxu0 0
        %2604 = vmatprep.subr.bf16.mxu0 0
        %2605 = vmatpush1.bf16.msra.mxu0 0
        %2606 = vmatprep.subr.bf16.mxu0 0
        %2607 = vmatpush1.bf16.msra.mxu0 0
        %2608 = vmatprep.subr.bf16.mxu0 %v2474
        %2609 = vmatpush1.bf16.msra.mxu0 %v2473
        %2610 = vmatprep.subr.bf16.mxu0 %v2470
        %2611 = vmatpush1.bf16.msra.mxu0 %v2469
        %2612 = vmatprep.subr.bf16.mxu0 0
        %2613 = vmatpush2.bf16.msra.mxu0 0
        %2614 = vmatprep.subr.bf16.mxu0 0
        %2615 = vmatpush2.bf16.msra.mxu0 0
        %2616 = vmatprep.subr.bf16.mxu0 0
        %2617 = vmatpush2.bf16.msra.mxu0 0
        %2618 = vmatprep.subr.bf16.mxu0 0
        %2619 = vmatpush2.bf16.msra.mxu0 0
        %2620 = vmatprep.subr.bf16.mxu0 0
        %2621 = vmatpush2.bf16.msra.mxu0 0
        %2622 = vmatprep.subr.bf16.mxu0 0
        %2623 = vmatpush2.bf16.msra.mxu0 0
        %2624 = vmatprep.subr.bf16.mxu0 0
        %2625 = vmatpush2.bf16.msra.mxu0 0
        %2626 = vmatprep.subr.bf16.mxu0 0
        %2627 = vmatpush2.bf16.msra.mxu0 0
        %2628 = vmatprep.mubr.bf16.mxu0 0
        %2629 = vmatmul.mubr.bf16.gmra.mxu0 %v2551
        %v2630 = vpop.f32.mrf.mxu0
        %v2631 = vadd.f32 %v2588, %v2630
        %v2632 = vpop.f32.mrf.mxu0
        %v2633 = vadd.f32 %v2590, %v2632
        %v2634 = vpop.f32.mrf.mxu0
        %v2635 = vadd.f32 %v2592, %v2634
        %v2636 = vpop.f32.mrf.mxu0
        %v2637 = vadd.f32 %v2594, %v2636
        %2638 = vdwg.mxu0
        %2639 = vmatprep.subr.bf16.mxu0 %v2436
        %2640 = vmatpush1.bf16.msra.mxu0 %v2435
        %2641 = vmatprep.subr.bf16.mxu0 %v2432
        %2642 = vmatpush1.bf16.msra.mxu0 %v2431
        %2643 = vmatprep.subr.bf16.mxu0 %v2428
        %2644 = vmatpush1.bf16.msra.mxu0 %v2427
        %2645 = vmatprep.subr.bf16.mxu0 %v2424
        %2646 = vmatpush1.bf16.msra.mxu0 %v2423
        %2647 = vmatprep.subr.bf16.mxu0 %v2420
        %2648 = vmatpush1.bf16.msra.mxu0 %v2419
        %2649 = vmatprep.subr.bf16.mxu0 %v2416
        %2650 = vmatpush1.bf16.msra.mxu0 %v2415
        %2651 = vmatprep.subr.bf16.mxu0 %v2412
        %2652 = vmatpush1.bf16.msra.mxu0 %v2411
        %2653 = vmatprep.subr.bf16.mxu0 %v2408
        %2654 = vmatpush1.bf16.msra.mxu0 %v2407
        %2655 = vmatprep.subr.bf16.mxu0 %v2468
        %2656 = vmatpush2.bf16.msra.mxu0 %v2467
        %2657 = vmatprep.subr.bf16.mxu0 %v2464
        %2658 = vmatpush2.bf16.msra.mxu0 %v2463
        %2659 = vmatprep.subr.bf16.mxu0 %v2460
        %2660 = vmatpush2.bf16.msra.mxu0 %v2459
        %2661 = vmatprep.subr.bf16.mxu0 %v2456
        %2662 = vmatpush2.bf16.msra.mxu0 %v2455
        %2663 = vmatprep.subr.bf16.mxu0 %v2452
        %2664 = vmatpush2.bf16.msra.mxu0 %v2451
        %2665 = vmatprep.subr.bf16.mxu0 %v2448
        %2666 = vmatpush2.bf16.msra.mxu0 %v2447
        %2667 = vmatprep.subr.bf16.mxu0 %v2444
        %2668 = vmatpush2.bf16.msra.mxu0 %v2443
        %2669 = vmatprep.subr.bf16.mxu0 %v2440
        %2670 = vmatpush2.bf16.msra.mxu0 %v2439
        %2671 = vmatprep.mubr.bf16.mxu0 %v2185
        %2672 = vmatmul.mubr.bf16.gmra.mxu0 %v2184
        %v2673 = vpop.f32.mrf.mxu0
        %v2674 = vadd.f32 %v2167, %v2673
        %v2675 = vpop.f32.mrf.mxu0
        %v2676 = vadd.f32 %v2167, %v2675
        %v2677 = vpop.f32.mrf.mxu0
        %v2678 = vadd.f32 %v2172, %v2677
        %v2679 = vpop.f32.mrf.mxu0
        %v2680 = vadd.f32 %v2172, %v2679
        %2681 = vdwg.mxu0
        %2682 = vmatprep.subr.bf16.mxu0 0
        %2683 = vmatpush1.bf16.msra.mxu0 0
        %2684 = vmatprep.subr.bf16.mxu0 0
        %2685 = vmatpush1.bf16.msra.mxu0 0
        %2686 = vmatprep.subr.bf16.mxu0 0
        %2687 = vmatpush1.bf16.msra.mxu0 0
        %2688 = vmatprep.subr.bf16.mxu0 0
        %2689 = vmatpush1.bf16.msra.mxu0 0
        %2690 = vmatprep.subr.bf16.mxu0 0
        %2691 = vmatpush1.bf16.msra.mxu0 0
        %2692 = vmatprep.subr.bf16.mxu0 0
        %2693 = vmatpush1.bf16.msra.mxu0 0
        %2694 = vmatprep.subr.bf16.mxu0 %v2476
        %2695 = vmatpush1.bf16.msra.mxu0 %v2475
        %2696 = vmatprep.subr.bf16.mxu0 %v2472
        %2697 = vmatpush1.bf16.msra.mxu0 %v2471
        %2698 = vmatprep.subr.bf16.mxu0 0
        %2699 = vmatpush2.bf16.msra.mxu0 0
        %2700 = vmatprep.subr.bf16.mxu0 0
        %2701 = vmatpush2.bf16.msra.mxu0 0
        %2702 = vmatprep.subr.bf16.mxu0 0
        %2703 = vmatpush2.bf16.msra.mxu0 0
        %2704 = vmatprep.subr.bf16.mxu0 0
        %2705 = vmatpush2.bf16.msra.mxu0 0
        %2706 = vmatprep.subr.bf16.mxu0 0
        %2707 = vmatpush2.bf16.msra.mxu0 0
        %2708 = vmatprep.subr.bf16.mxu0 0
        %2709 = vmatpush2.bf16.msra.mxu0 0
        %2710 = vmatprep.subr.bf16.mxu0 0
        %2711 = vmatpush2.bf16.msra.mxu0 0
        %2712 = vmatprep.subr.bf16.mxu0 0
        %2713 = vmatpush2.bf16.msra.mxu0 0
        %2714 = vmatprep.mubr.bf16.mxu0 0
        %2715 = vmatmul.mubr.bf16.gmra.mxu0 %v2551
        %v2716 = vpop.f32.mrf.mxu0
        %v2717 = vadd.f32 %v2674, %v2716
        %v2718 = vpop.f32.mrf.mxu0
        %v2719 = vadd.f32 %v2676, %v2718
        %v2720 = vpop.f32.mrf.mxu0
        %v2721 = vadd.f32 %v2678, %v2720
        %v2722 = vpop.f32.mrf.mxu0
        %v2723 = vadd.f32 %v2680, %v2722
        %2724 = vdwg.mxu0
        %v2725 = vmax.f32 %v2631, 0.0
        %v2726 = vmax.f32 %v2633, 0.0
        %v2727 = vmax.f32 %v2717, 0.0
        %v2728 = vmax.f32 %v2719, 0.0
        %v2729 = vmax.f32 %v2635, 0.0
        %v2730 = vmax.f32 %v2637, 0.0
        %v2731 = vmax.f32 %v2721, 0.0
        %v2732 = vmax.f32 %v2723, 0.0
        %2733 = vst [vmem:[#allocation2 + $0x8] sm:$0xff] %v2725
        %2734 = vst [vmem:[#allocation2 + $0x10] sm:$0xff] %v2726
        %2735 = vst [vmem:[#allocation2 + $0x48] sm:$0xff] %v2729
        %2736 = vst [vmem:[#allocation2 + $0x50] sm:$0xff] %v2730
        %2737 = vst [vmem:[#allocation2 + $0x28] sm:$0xff] %v2727
        %2738 = vst [vmem:[#allocation2 + $0x30] sm:$0xff] %v2728
        %2739 = vst [vmem:[#allocation2 + $0x68] sm:$0xff] %v2731
        %2740 = vst [vmem:[#allocation2 + $0x70] sm:$0xff] %v2732
        %v2741 = vld [vmem:[#allocation2] sm:$0xff]
        %v2742 = vld [vmem:[#allocation2 + $0x8] sm:$0xff]
        %v2743 = vld [vmem:[#allocation2 + $0x10] sm:$0xff]
        %v2744 = vld [vmem:[#allocation2 + $0x40] sm:$0xff]
        %v2745 = vld [vmem:[#allocation2 + $0x48] sm:$0xff]
        %v2746 = vld [vmem:[#allocation2 + $0x50] sm:$0xff]
        %2753 = vrot.lane.b32.xlu0 %v2741, 17
        %v2754 = vpop.permute.xlu0 %2753
        %2755 = vrot.lane.b32.xlu0 %v2742, 17
        %v2756 = vpop.permute.xlu0 %2755
        %2757 = vrot.lane.b32.xlu0 %v2743, 17
        %v2758 = vpop.permute.xlu0 %2757
        %2759 = vrot.lane.b32.xlu0 %v2744, 17
        %v2760 = vpop.permute.xlu0 %2759
        %2761 = vrot.lane.b32.xlu0 %v2745, 17
        %v2762 = vpop.permute.xlu0 %2761
        %2763 = vrot.lane.b32.xlu0 %v2746, 17
        %v2764 = vpop.permute.xlu0 %2763
        %v2765 = vsel %vm513, %v2754, %v2756
        %v2766 = vsel %vm513, %v2756, %v2758
        %v2767 = vsel %vm513, %v2760, %v2762
        %v2768 = vsel %vm513, %v2762, %v2764
        %v2773 = vsel %vm475, %v2765, 0.0
        %v2774 = vsel %vm476, %v2766, 0.0
        %v2775 = vsel %vm475, %v2767, 0.0
        %v2776 = vsel %vm476, %v2768, 0.0
        %v2777 = vpack.c.bf16 %v2775, %v2773
        %v2778 = vpack.c.bf16 %v2776, %v2774
        %v2781 = vunpack.c.l.b16 %v2777
        %v2782 = vunpack.c.l.b16 %v2778
        %v2783 = vunpack.c.h.b16 %v2777
        %v2784 = vunpack.c.h.b16 %v2778
        %v2785 = vpack.c.b16 %v2782, %v2781
        %v2786 = vpack.c.b16 %v2784, %v2783
        %2789 = vst [vmem:[#allocation3] sm:$0xff] %v2785
        %2790 = vst [vmem:[#allocation3 + $0x10] sm:$0xff] %v2786
        %v2791 = vld [vmem:[#allocation2 + $0x20] sm:$0xff]
        %v2792 = vld [vmem:[#allocation2 + $0x28] sm:$0xff]
        %v2793 = vld [vmem:[#allocation2 + $0x30] sm:$0xff]
        %v2794 = vld [vmem:[#allocation2 + $0x60] sm:$0xff]
        %v2795 = vld [vmem:[#allocation2 + $0x68] sm:$0xff]
        %v2796 = vld [vmem:[#allocation2 + $0x70] sm:$0xff]
        %2803 = vrot.lane.b32.xlu0 %v2791, 17
        %v2804 = vpop.permute.xlu0 %2803
        %2805 = vrot.lane.b32.xlu0 %v2792, 17
        %v2806 = vpop.permute.xlu0 %2805
        %2807 = vrot.lane.b32.xlu0 %v2793, 17
        %v2808 = vpop.permute.xlu0 %2807
        %2809 = vrot.lane.b32.xlu0 %v2794, 17
        %v2810 = vpop.permute.xlu0 %2809
        %2811 = vrot.lane.b32.xlu0 %v2795, 17
        %v2812 = vpop.permute.xlu0 %2811
        %2813 = vrot.lane.b32.xlu0 %v2796, 17
        %v2814 = vpop.permute.xlu0 %2813
        %v2815 = vsel %vm513, %v2804, %v2806
        %v2816 = vsel %vm513, %v2806, %v2808
        %v2817 = vsel %vm513, %v2810, %v2812
        %v2818 = vsel %vm513, %v2812, %v2814
        %v2823 = vsel %vm475, %v2815, 0.0
        %v2824 = vsel %vm476, %v2816, 0.0
        %v2825 = vsel %vm475, %v2817, 0.0
        %v2826 = vsel %vm476, %v2818, 0.0
        %v2827 = vpack.c.bf16 %v2825, %v2823
        %v2828 = vpack.c.bf16 %v2826, %v2824
        %v2831 = vunpack.c.l.b16 %v2827
        %v2832 = vunpack.c.l.b16 %v2828
        %v2833 = vunpack.c.h.b16 %v2827
        %v2834 = vunpack.c.h.b16 %v2828
        %v2835 = vpack.c.b16 %v2832, %v2831
        %v2836 = vpack.c.b16 %v2834, %v2833
        %2839 = vst [vmem:[#allocation3 + $0x8] sm:$0xff] %v2835
        %2840 = vst [vmem:[#allocation3 + $0x18] sm:$0xff] %v2836
        %v2841 = vld [vmem:[#allocation2] sm:$0xff]
        %v2842 = vld [vmem:[#allocation2 + $0x8] sm:$0xff]
        %v2843 = vld [vmem:[#allocation2 + $0x10] sm:$0xff]
        %v2844 = vld [vmem:[#allocation2 + $0x40] sm:$0xff]
        %v2845 = vld [vmem:[#allocation2 + $0x48] sm:$0xff]
        %v2846 = vld [vmem:[#allocation2 + $0x50] sm:$0xff]
        %v2847 = vpack.c.bf16 %v2844, %v2841
        %v2848 = vpack.c.bf16 %v2845, %v2842
        %v2849 = vpack.c.bf16 %v2846, %v2843
        %v2853 = vunpack.c.l.b16 %v2847
        %v2854 = vunpack.c.l.b16 %v2848
        %v2855 = vunpack.c.l.b16 %v2849
        %v2856 = vunpack.c.h.b16 %v2847
        %v2857 = vunpack.c.h.b16 %v2848
        %v2858 = vunpack.c.h.b16 %v2849
        %v2859 = vpack.c.b16 %v2854, %v2853
        %v2860 = vpack.c.b16 %v2855, %v2855
        %v2861 = vpack.c.b16 %v2857, %v2856
        %v2862 = vpack.c.b16 %v2858, %v2858
        %2863 = vrot.lane.b32.xlu0 %v2859, 16
        %v2864 = vpop.permute.xlu0 %2863
        %2865 = vrot.lane.b32.xlu0 %v2860, 16
        %v2866 = vpop.permute.xlu0 %2865
        %2867 = vrot.lane.b32.xlu0 %v2861, 16
        %v2868 = vpop.permute.xlu0 %2867
        %2869 = vrot.lane.b32.xlu0 %v2862, 16
        %v2870 = vpop.permute.xlu0 %2869
        %v2871 = vrot.slane %v2864, 4
        %v2872 = vrot.slane %v2866, 4
        %v2873 = vrot.slane %v2868, 4
        %v2874 = vrot.slane %v2870, 4
        %v2875 = vsel %vm734, %v2871, %v2872
        %v2876 = vsel %vm736, %v2864, %v2875
        %v2877 = vsel %vm734, %v2873, %v2874
        %v2878 = vsel %vm736, %v2868, %v2877
        %2881 = vst [vmem:[#allocation3 + $0x20] sm:$0xff] %v2876
        %2882 = vst [vmem:[#allocation3 + $0x30] sm:$0xff] %v2878
        %v2883 = vld [vmem:[#allocation2 + $0x20] sm:$0xff]
        %v2884 = vld [vmem:[#allocation2 + $0x28] sm:$0xff]
        %v2885 = vld [vmem:[#allocation2 + $0x30] sm:$0xff]
        %v2886 = vld [vmem:[#allocation2 + $0x60] sm:$0xff]
        %v2887 = vld [vmem:[#allocation2 + $0x68] sm:$0xff]
        %v2888 = vld [vmem:[#allocation2 + $0x70] sm:$0xff]
        %v2889 = vpack.c.bf16 %v2886, %v2883
        %v2890 = vpack.c.bf16 %v2887, %v2884
        %v2891 = vpack.c.bf16 %v2888, %v2885
        %v2895 = vunpack.c.l.b16 %v2889
        %v2896 = vunpack.c.l.b16 %v2890
        %v2897 = vunpack.c.l.b16 %v2891
        %v2898 = vunpack.c.h.b16 %v2889
        %v2899 = vunpack.c.h.b16 %v2890
        %v2900 = vunpack.c.h.b16 %v2891
        %v2901 = vpack.c.b16 %v2896, %v2895
        %v2902 = vpack.c.b16 %v2897, %v2897
        %v2903 = vpack.c.b16 %v2899, %v2898
        %v2904 = vpack.c.b16 %v2900, %v2900
        %2905 = vrot.lane.b32.xlu0 %v2901, 16
        %v2906 = vpop.permute.xlu0 %2905
        %2907 = vrot.lane.b32.xlu0 %v2902, 16
        %v2908 = vpop.permute.xlu0 %2907
        %2909 = vrot.lane.b32.xlu0 %v2903, 16
        %v2910 = vpop.permute.xlu0 %2909
        %2911 = vrot.lane.b32.xlu0 %v2904, 16
        %v2912 = vpop.permute.xlu0 %2911
        %v2913 = vrot.slane %v2906, 4
        %v2914 = vrot.slane %v2908, 4
        %v2915 = vrot.slane %v2910, 4
        %v2916 = vrot.slane %v2912, 4
        %v2917 = vsel %vm734, %v2913, %v2914
        %v2918 = vsel %vm736, %v2906, %v2917
        %v2919 = vsel %vm734, %v2915, %v2916
        %v2920 = vsel %vm736, %v2910, %v2919
        %2923 = vst [vmem:[#allocation3 + $0x28] sm:$0xff] %v2918
        %2924 = vst [vmem:[#allocation3 + $0x38] sm:$0xff] %v2920
        %v2925 = vld [vmem:[#allocation2] sm:$0xff]
        %v2926 = vld [vmem:[#allocation2 + $0x8] sm:$0xff]
        %v2927 = vld [vmem:[#allocation2 + $0x10] sm:$0xff]
        %v2928 = vld [vmem:[#allocation2 + $0x40] sm:$0xff]
        %v2929 = vld [vmem:[#allocation2 + $0x48] sm:$0xff]
        %v2930 = vld [vmem:[#allocation2 + $0x50] sm:$0xff]
        %2937 = vrot.lane.b32.xlu0 %v2925, 15
        %v2938 = vpop.permute.xlu0 %2937
        %2939 = vrot.lane.b32.xlu0 %v2926, 15
        %v2940 = vpop.permute.xlu0 %2939
        %2941 = vrot.lane.b32.xlu0 %v2927, 15
        %v2942 = vpop.permute.xlu0 %2941
        %2943 = vrot.lane.b32.xlu0 %v2928, 15
        %v2944 = vpop.permute.xlu0 %2943
        %2945 = vrot.lane.b32.xlu0 %v2929, 15
        %v2946 = vpop.permute.xlu0 %2945
        %2947 = vrot.lane.b32.xlu0 %v2930, 15
        %v2948 = vpop.permute.xlu0 %2947
        %v2949 = vsel %vm888, %v2938, %v2940
        %v2950 = vsel %vm888, %v2940, %v2942
        %v2951 = vsel %vm888, %v2944, %v2946
        %v2952 = vsel %vm888, %v2946, %v2948
        %v2957 = vsel %vm850, %v2949, 0.0
        %v2958 = vsel %vm851, %v2950, 0.0
        %v2959 = vsel %vm850, %v2951, 0.0
        %v2960 = vsel %vm851, %v2952, 0.0
        %v2961 = vpack.c.bf16 %v2959, %v2957
        %v2962 = vpack.c.bf16 %v2960, %v2958
        %v2965 = vunpack.c.l.b16 %v2961
        %v2966 = vunpack.c.l.b16 %v2962
        %v2967 = vunpack.c.h.b16 %v2961
        %v2968 = vunpack.c.h.b16 %v2962
        %v2969 = vpack.c.b16 %v2966, %v2965
        %v2970 = vpack.c.b16 %v2968, %v2967
        %2973 = vst [vmem:[#allocation3 + $0x40] sm:$0xff] %v2969
        %2974 = vst [vmem:[#allocation3 + $0x50] sm:$0xff] %v2970
        %v2975 = vld [vmem:[#allocation2 + $0x20] sm:$0xff]
        %v2976 = vld [vmem:[#allocation2 + $0x28] sm:$0xff]
        %v2977 = vld [vmem:[#allocation2 + $0x30] sm:$0xff]
        %v2978 = vld [vmem:[#allocation2 + $0x60] sm:$0xff]
        %v2979 = vld [vmem:[#allocation2 + $0x68] sm:$0xff]
        %v2980 = vld [vmem:[#allocation2 + $0x70] sm:$0xff]
        %2987 = vrot.lane.b32.xlu0 %v2975, 15
        %v2988 = vpop.permute.xlu0 %2987
        %2989 = vrot.lane.b32.xlu0 %v2976, 15
        %v2990 = vpop.permute.xlu0 %2989
        %2991 = vrot.lane.b32.xlu0 %v2977, 15
        %v2992 = vpop.permute.xlu0 %2991
        %2993 = vrot.lane.b32.xlu0 %v2978, 15
        %v2994 = vpop.permute.xlu0 %2993
        %2995 = vrot.lane.b32.xlu0 %v2979, 15
        %v2996 = vpop.permute.xlu0 %2995
        %2997 = vrot.lane.b32.xlu0 %v2980, 15
        %v2998 = vpop.permute.xlu0 %2997
        %v2999 = vsel %vm888, %v2988, %v2990
        %v3000 = vsel %vm888, %v2990, %v2992
        %v3001 = vsel %vm888, %v2994, %v2996
        %v3002 = vsel %vm888, %v2996, %v2998
        %v3007 = vsel %vm850, %v2999, 0.0
        %v3008 = vsel %vm851, %v3000, 0.0
        %v3009 = vsel %vm850, %v3001, 0.0
        %v3010 = vsel %vm851, %v3002, 0.0
        %v3011 = vpack.c.bf16 %v3009, %v3007
        %v3012 = vpack.c.bf16 %v3010, %v3008
        %v3015 = vunpack.c.l.b16 %v3011
        %v3016 = vunpack.c.l.b16 %v3012
        %v3017 = vunpack.c.h.b16 %v3011
        %v3018 = vunpack.c.h.b16 %v3012
        %v3019 = vpack.c.b16 %v3016, %v3015
        %v3020 = vpack.c.b16 %v3018, %v3017
        %3023 = vst [vmem:[#allocation3 + $0x48] sm:$0xff] %v3019
        %3024 = vst [vmem:[#allocation3 + $0x58] sm:$0xff] %v3020
        %v3025 = vld [vmem:[#allocation2] sm:$0xff]
        %v3026 = vld [vmem:[#allocation2 + $0x8] sm:$0xff]
        %v3027 = vld [vmem:[#allocation2 + $0x10] sm:$0xff]
        %v3028 = vld [vmem:[#allocation2 + $0x40] sm:$0xff]
        %v3029 = vld [vmem:[#allocation2 + $0x48] sm:$0xff]
        %v3030 = vld [vmem:[#allocation2 + $0x50] sm:$0xff]
        %3037 = vrot.lane.b32.xlu0 %v3025, 1
        %v3038 = vpop.permute.xlu0 %3037
        %3039 = vrot.lane.b32.xlu0 %v3026, 1
        %v3040 = vpop.permute.xlu0 %3039
        %3041 = vrot.lane.b32.xlu0 %v3027, 1
        %v3042 = vpop.permute.xlu0 %3041
        %3043 = vrot.lane.b32.xlu0 %v3028, 1
        %v3044 = vpop.permute.xlu0 %3043
        %3045 = vrot.lane.b32.xlu0 %v3029, 1
        %v3046 = vpop.permute.xlu0 %3045
        %3047 = vrot.lane.b32.xlu0 %v3030, 1
        %v3048 = vpop.permute.xlu0 %3047
        %v3049 = vsel %vm1089, %v3038, %v3040
        %v3050 = vsel %vm1089, %v3040, %v3042
        %v3051 = vsel %vm1089, %v3044, %v3046
        %v3052 = vsel %vm1089, %v3046, %v3048
        %v3057 = vsel %vm475, %v3049, 0.0
        %v3058 = vsel %vm476, %v3050, 0.0
        %v3059 = vsel %vm475, %v3051, 0.0
        %v3060 = vsel %vm476, %v3052, 0.0
        %v3061 = vpack.c.bf16 %v3059, %v3057
        %v3062 = vpack.c.bf16 %v3060, %v3058
        %v3065 = vunpack.c.l.b16 %v3061
        %v3066 = vunpack.c.l.b16 %v3062
        %v3067 = vunpack.c.h.b16 %v3061
        %v3068 = vunpack.c.h.b16 %v3062
        %v3069 = vpack.c.b16 %v3066, %v3065
        %v3070 = vpack.c.b16 %v3068, %v3067
        %3073 = vst [vmem:[#allocation3 + $0x60] sm:$0xff] %v3069
        %3074 = vst [vmem:[#allocation3 + $0x70] sm:$0xff] %v3070
        %v3075 = vld [vmem:[#allocation2 + $0x20] sm:$0xff]
        %v3076 = vld [vmem:[#allocation2 + $0x28] sm:$0xff]
        %v3077 = vld [vmem:[#allocation2 + $0x30] sm:$0xff]
        %v3078 = vld [vmem:[#allocation2 + $0x60] sm:$0xff]
        %v3079 = vld [vmem:[#allocation2 + $0x68] sm:$0xff]
        %v3080 = vld [vmem:[#allocation2 + $0x70] sm:$0xff]
        %3087 = vrot.lane.b32.xlu0 %v3075, 1
        %v3088 = vpop.permute.xlu0 %3087
        %3089 = vrot.lane.b32.xlu0 %v3076, 1
        %v3090 = vpop.permute.xlu0 %3089
        %3091 = vrot.lane.b32.xlu0 %v3077, 1
        %v3092 = vpop.permute.xlu0 %3091
        %3093 = vrot.lane.b32.xlu0 %v3078, 1
        %v3094 = vpop.permute.xlu0 %3093
        %3095 = vrot.lane.b32.xlu0 %v3079, 1
        %v3096 = vpop.permute.xlu0 %3095
        %3097 = vrot.lane.b32.xlu0 %v3080, 1
        %v3098 = vpop.permute.xlu0 %3097
        %v3099 = vsel %vm1089, %v3088, %v3090
        %v3100 = vsel %vm1089, %v3090, %v3092
        %v3101 = vsel %vm1089, %v3094, %v3096
        %v3102 = vsel %vm1089, %v3096, %v3098
        %v3107 = vsel %vm475, %v3099, 0.0
        %v3108 = vsel %vm476, %v3100, 0.0
        %v3109 = vsel %vm475, %v3101, 0.0
        %v3110 = vsel %vm476, %v3102, 0.0
        %v3111 = vpack.c.bf16 %v3109, %v3107
        %v3112 = vpack.c.bf16 %v3110, %v3108
        %v3115 = vunpack.c.l.b16 %v3111
        %v3116 = vunpack.c.l.b16 %v3112
        %v3117 = vunpack.c.h.b16 %v3111
        %v3118 = vunpack.c.h.b16 %v3112
        %v3119 = vpack.c.b16 %v3116, %v3115
        %v3120 = vpack.c.b16 %v3118, %v3117
        %3123 = vst [vmem:[#allocation3 + $0x68] sm:$0xff] %v3119
        %3124 = vst [vmem:[#allocation3 + $0x78] sm:$0xff] %v3120
        %v3125 = vld [vmem:[#allocation2 + $0x8] sm:$0xff]
        %v3126 = vld [vmem:[#allocation2 + $0x10] sm:$0xff]
        %v3127 = vld [vmem:[#allocation2 + $0x48] sm:$0xff]
        %v3128 = vld [vmem:[#allocation2 + $0x50] sm:$0xff]
        %v3129 = vpack.c.bf16 %v3127, %v3125
        %v3130 = vpack.c.bf16 %v3128, %v3126
        %v3133 = vunpack.c.l.b16 %v3129
        %v3134 = vunpack.c.l.b16 %v3130
        %v3135 = vunpack.c.h.b16 %v3129
        %v3136 = vunpack.c.h.b16 %v3130
        %v3137 = vpack.c.b16 %v3134, %v3133
        %v3138 = vpack.c.b16 %v3136, %v3135
        %3141 = vst [vmem:[#allocation3 + $0x80] sm:$0xff] %v3137
        %3142 = vst [vmem:[#allocation3 + $0x90] sm:$0xff] %v3138
        %v3143 = vld [vmem:[#allocation2 + $0x28] sm:$0xff]
        %v3144 = vld [vmem:[#allocation2 + $0x30] sm:$0xff]
        %v3145 = vld [vmem:[#allocation2 + $0x68] sm:$0xff]
        %v3146 = vld [vmem:[#allocation2 + $0x70] sm:$0xff]
        %v3147 = vpack.c.bf16 %v3145, %v3143
        %v3148 = vpack.c.bf16 %v3146, %v3144
        %v3151 = vunpack.c.l.b16 %v3147
        %v3152 = vunpack.c.l.b16 %v3148
        %v3153 = vunpack.c.h.b16 %v3147
        %v3154 = vunpack.c.h.b16 %v3148
        %v3155 = vpack.c.b16 %v3152, %v3151
        %v3156 = vpack.c.b16 %v3154, %v3153
        %3159 = vst [vmem:[#allocation3 + $0x88] sm:$0xff] %v3155
        %3160 = vst [vmem:[#allocation3 + $0x98] sm:$0xff] %v3156
        %v3161 = vld [vmem:[#allocation2 + $0x8] sm:$0xff]
        %v3162 = vld [vmem:[#allocation2 + $0x10] sm:$0xff]
        %v3163 = vld [vmem:[#allocation2 + $0x18] sm:$0xff]
        %v3164 = vld [vmem:[#allocation2 + $0x48] sm:$0xff]
        %v3165 = vld [vmem:[#allocation2 + $0x50] sm:$0xff]
        %v3166 = vld [vmem:[#allocation2 + $0x58] sm:$0xff]
        %3173 = vrot.lane.b32.xlu0 %v3161, 127
        %v3174 = vpop.permute.xlu0 %3173
        %3175 = vrot.lane.b32.xlu0 %v3162, 127
        %v3176 = vpop.permute.xlu0 %3175
        %3177 = vrot.lane.b32.xlu0 %v3163, 127
        %v3178 = vpop.permute.xlu0 %3177
        %3179 = vrot.lane.b32.xlu0 %v3164, 127
        %v3180 = vpop.permute.xlu0 %3179
        %3181 = vrot.lane.b32.xlu0 %v3165, 127
        %v3182 = vpop.permute.xlu0 %3181
        %3183 = vrot.lane.b32.xlu0 %v3166, 127
        %v3184 = vpop.permute.xlu0 %3183
        %v3185 = vsel %vm1362, %v3174, %v3176
        %v3186 = vsel %vm1362, %v3176, %v3178
        %v3187 = vsel %vm1362, %v3180, %v3182
        %v3188 = vsel %vm1362, %v3182, %v3184
        %v3193 = vsel %vm850, %v3185, 0.0
        %v3194 = vsel %vm851, %v3186, 0.0
        %v3195 = vsel %vm850, %v3187, 0.0
        %v3196 = vsel %vm851, %v3188, 0.0
        %v3197 = vpack.c.bf16 %v3195, %v3193
        %v3198 = vpack.c.bf16 %v3196, %v3194
        %v3201 = vunpack.c.l.b16 %v3197
        %v3202 = vunpack.c.l.b16 %v3198
        %v3203 = vunpack.c.h.b16 %v3197
        %v3204 = vunpack.c.h.b16 %v3198
        %v3205 = vpack.c.b16 %v3202, %v3201
        %v3206 = vpack.c.b16 %v3204, %v3203
        %3209 = vst [vmem:[#allocation3 + $0xa0] sm:$0xff] %v3205
        %3210 = vst [vmem:[#allocation3 + $0xb0] sm:$0xff] %v3206
        %v3211 = vld [vmem:[#allocation2 + $0x28] sm:$0xff]
        %v3212 = vld [vmem:[#allocation2 + $0x30] sm:$0xff]
        %v3213 = vld [vmem:[#allocation2 + $0x38] sm:$0xff]
        %v3214 = vld [vmem:[#allocation2 + $0x68] sm:$0xff]
        %v3215 = vld [vmem:[#allocation2 + $0x70] sm:$0xff]
        %v3216 = vld [vmem:[#allocation2 + $0x78] sm:$0xff]
        %3223 = vrot.lane.b32.xlu0 %v3211, 127
        %v3224 = vpop.permute.xlu0 %3223
        %3225 = vrot.lane.b32.xlu0 %v3212, 127
        %v3226 = vpop.permute.xlu0 %3225
        %3227 = vrot.lane.b32.xlu0 %v3213, 127
        %v3228 = vpop.permute.xlu0 %3227
        %3229 = vrot.lane.b32.xlu0 %v3214, 127
        %v3230 = vpop.permute.xlu0 %3229
        %3231 = vrot.lane.b32.xlu0 %v3215, 127
        %v3232 = vpop.permute.xlu0 %3231
        %3233 = vrot.lane.b32.xlu0 %v3216, 127
        %v3234 = vpop.permute.xlu0 %3233
        %v3235 = vsel %vm1362, %v3224, %v3226
        %v3236 = vsel %vm1362, %v3226, %v3228
        %v3237 = vsel %vm1362, %v3230, %v3232
        %v3238 = vsel %vm1362, %v3232, %v3234
        %v3243 = vsel %vm850, %v3235, 0.0
        %v3244 = vsel %vm851, %v3236, 0.0
        %v3245 = vsel %vm850, %v3237, 0.0
        %v3246 = vsel %vm851, %v3238, 0.0
        %v3247 = vpack.c.bf16 %v3245, %v3243
        %v3248 = vpack.c.bf16 %v3246, %v3244
        %v3251 = vunpack.c.l.b16 %v3247
        %v3252 = vunpack.c.l.b16 %v3248
        %v3253 = vunpack.c.h.b16 %v3247
        %v3254 = vunpack.c.h.b16 %v3248
        %v3255 = vpack.c.b16 %v3252, %v3251
        %v3256 = vpack.c.b16 %v3254, %v3253
        %3259 = vst [vmem:[#allocation3 + $0xa8] sm:$0xff] %v3255
        %3260 = vst [vmem:[#allocation3 + $0xb8] sm:$0xff] %v3256
        %v3261 = vld [vmem:[#allocation2 + $0x8] sm:$0xff]
        %v3262 = vld [vmem:[#allocation2 + $0x10] sm:$0xff]
        %v3263 = vld [vmem:[#allocation2 + $0x18] sm:$0xff]
        %v3264 = vld [vmem:[#allocation2 + $0x48] sm:$0xff]
        %v3265 = vld [vmem:[#allocation2 + $0x50] sm:$0xff]
        %v3266 = vld [vmem:[#allocation2 + $0x58] sm:$0xff]
        %3273 = vrot.lane.b32.xlu0 %v3261, 113
        %v3274 = vpop.permute.xlu0 %3273
        %3275 = vrot.lane.b32.xlu0 %v3262, 113
        %v3276 = vpop.permute.xlu0 %3275
        %3277 = vrot.lane.b32.xlu0 %v3263, 113
        %v3278 = vpop.permute.xlu0 %3277
        %3279 = vrot.lane.b32.xlu0 %v3264, 113
        %v3280 = vpop.permute.xlu0 %3279
        %3281 = vrot.lane.b32.xlu0 %v3265, 113
        %v3282 = vpop.permute.xlu0 %3281
        %3283 = vrot.lane.b32.xlu0 %v3266, 113
        %v3284 = vpop.permute.xlu0 %3283
        %v3285 = vsel %vm1563, %v3274, %v3276
        %v3286 = vsel %vm1563, %v3276, %v3278
        %v3287 = vsel %vm1563, %v3280, %v3282
        %v3288 = vsel %vm1563, %v3282, %v3284
        %v3293 = vsel %vm475, %v3285, 0.0
        %v3294 = vsel %vm476, %v3286, 0.0
        %v3295 = vsel %vm475, %v3287, 0.0
        %v3296 = vsel %vm476, %v3288, 0.0
        %v3297 = vpack.c.bf16 %v3295, %v3293
        %v3298 = vpack.c.bf16 %v3296, %v3294
        %v3301 = vunpack.c.l.b16 %v3297
        %v3302 = vunpack.c.l.b16 %v3298
        %v3303 = vunpack.c.h.b16 %v3297
        %v3304 = vunpack.c.h.b16 %v3298
        %v3305 = vpack.c.b16 %v3302, %v3301
        %v3306 = vpack.c.b16 %v3304, %v3303
        %3309 = vst [vmem:[#allocation3 + $0xc0] sm:$0xff] %v3305
        %3310 = vst [vmem:[#allocation3 + $0xd0] sm:$0xff] %v3306
        %v3311 = vld [vmem:[#allocation2 + $0x28] sm:$0xff]
        %v3312 = vld [vmem:[#allocation2 + $0x30] sm:$0xff]
        %v3313 = vld [vmem:[#allocation2 + $0x38] sm:$0xff]
        %v3314 = vld [vmem:[#allocation2 + $0x68] sm:$0xff]
        %v3315 = vld [vmem:[#allocation2 + $0x70] sm:$0xff]
        %v3316 = vld [vmem:[#allocation2 + $0x78] sm:$0xff]
        %3323 = vrot.lane.b32.xlu0 %v3311, 113
        %v3324 = vpop.permute.xlu0 %3323
        %3325 = vrot.lane.b32.xlu0 %v3312, 113
        %v3326 = vpop.permute.xlu0 %3325
        %3327 = vrot.lane.b32.xlu0 %v3313, 113
        %v3328 = vpop.permute.xlu0 %3327
        %3329 = vrot.lane.b32.xlu0 %v3314, 113
        %v3330 = vpop.permute.xlu0 %3329
        %3331 = vrot.lane.b32.xlu0 %v3315, 113
        %v3332 = vpop.permute.xlu0 %3331
        %3333 = vrot.lane.b32.xlu0 %v3316, 113
        %v3334 = vpop.permute.xlu0 %3333
        %v3335 = vsel %vm1563, %v3324, %v3326
        %v3336 = vsel %vm1563, %v3326, %v3328
        %v3337 = vsel %vm1563, %v3330, %v3332
        %v3338 = vsel %vm1563, %v3332, %v3334
        %v3343 = vsel %vm475, %v3335, 0.0
        %v3344 = vsel %vm476, %v3336, 0.0
        %v3345 = vsel %vm475, %v3337, 0.0
        %v3346 = vsel %vm476, %v3338, 0.0
        %v3347 = vpack.c.bf16 %v3345, %v3343
        %v3348 = vpack.c.bf16 %v3346, %v3344
        %v3351 = vunpack.c.l.b16 %v3347
        %v3352 = vunpack.c.l.b16 %v3348
        %v3353 = vunpack.c.h.b16 %v3347
        %v3354 = vunpack.c.h.b16 %v3348
        %v3355 = vpack.c.b16 %v3352, %v3351
        %v3356 = vpack.c.b16 %v3354, %v3353
        %3359 = vst [vmem:[#allocation3 + $0xc8] sm:$0xff] %v3355
        %3360 = vst [vmem:[#allocation3 + $0xd8] sm:$0xff] %v3356
        %v3361 = vld [vmem:[#allocation2 + $0x8] sm:$0xff]
        %v3362 = vld [vmem:[#allocation2 + $0x10] sm:$0xff]
        %v3363 = vld [vmem:[#allocation2 + $0x18] sm:$0xff]
        %v3364 = vld [vmem:[#allocation2 + $0x48] sm:$0xff]
        %v3365 = vld [vmem:[#allocation2 + $0x50] sm:$0xff]
        %v3366 = vld [vmem:[#allocation2 + $0x58] sm:$0xff]
        %v3367 = vpack.c.bf16 %v3364, %v3361
        %v3368 = vpack.c.bf16 %v3365, %v3362
        %v3369 = vpack.c.bf16 %v3366, %v3363
        %v3373 = vunpack.c.l.b16 %v3367
        %v3374 = vunpack.c.l.b16 %v3368
        %v3375 = vunpack.c.l.b16 %v3369
        %v3376 = vunpack.c.h.b16 %v3367
        %v3377 = vunpack.c.h.b16 %v3368
        %v3378 = vunpack.c.h.b16 %v3369
        %v3379 = vpack.c.b16 %v3374, %v3373
        %v3380 = vpack.c.b16 %v3375, %v3375
        %v3381 = vpack.c.b16 %v3377, %v3376
        %v3382 = vpack.c.b16 %v3378, %v3378
        %3383 = vrot.lane.b32.xlu0 %v3379, 112
        %v3384 = vpop.permute.xlu0 %3383
        %3385 = vrot.lane.b32.xlu0 %v3380, 112
        %v3386 = vpop.permute.xlu0 %3385
        %3387 = vrot.lane.b32.xlu0 %v3381, 112
        %v3388 = vpop.permute.xlu0 %3387
        %3389 = vrot.lane.b32.xlu0 %v3382, 112
        %v3390 = vpop.permute.xlu0 %3389
        %v3391 = vrot.slane %v3384, 4
        %v3392 = vrot.slane %v3386, 4
        %v3393 = vrot.slane %v3388, 4
        %v3394 = vrot.slane %v3390, 4
        %v3395 = vsel %vm734, %v3391, %v3392
        %v3396 = vsel %vm1785, %v3384, %v3395
        %v3397 = vsel %vm734, %v3393, %v3394
        %v3398 = vsel %vm1785, %v3388, %v3397
        %3401 = vst [vmem:[#allocation3 + $0xe0] sm:$0xff] %v3396
        %3402 = vst [vmem:[#allocation3 + $0xf0] sm:$0xff] %v3398
        %v3403 = vld [vmem:[#allocation2 + $0x28] sm:$0xff]
        %v3404 = vld [vmem:[#allocation2 + $0x30] sm:$0xff]
        %v3405 = vld [vmem:[#allocation2 + $0x38] sm:$0xff]
        %v3406 = vld [vmem:[#allocation2 + $0x68] sm:$0xff]
        %v3407 = vld [vmem:[#allocation2 + $0x70] sm:$0xff]
        %v3408 = vld [vmem:[#allocation2 + $0x78] sm:$0xff]
        %v3409 = vpack.c.bf16 %v3406, %v3403
        %v3410 = vpack.c.bf16 %v3407, %v3404
        %v3411 = vpack.c.bf16 %v3408, %v3405
        %v3415 = vunpack.c.l.b16 %v3409
        %v3416 = vunpack.c.l.b16 %v3410
        %v3417 = vunpack.c.l.b16 %v3411
        %v3418 = vunpack.c.h.b16 %v3409
        %v3419 = vunpack.c.h.b16 %v3410
        %v3420 = vunpack.c.h.b16 %v3411
        %v3421 = vpack.c.b16 %v3416, %v3415
        %v3422 = vpack.c.b16 %v3417, %v3417
        %v3423 = vpack.c.b16 %v3419, %v3418
        %v3424 = vpack.c.b16 %v3420, %v3420
        %3425 = vrot.lane.b32.xlu0 %v3421, 112
        %v3426 = vpop.permute.xlu0 %3425
        %3427 = vrot.lane.b32.xlu0 %v3422, 112
        %v3428 = vpop.permute.xlu0 %3427
        %3429 = vrot.lane.b32.xlu0 %v3423, 112
        %v3430 = vpop.permute.xlu0 %3429
        %3431 = vrot.lane.b32.xlu0 %v3424, 112
        %v3432 = vpop.permute.xlu0 %3431
        %v3433 = vrot.slane %v3426, 4
        %v3434 = vrot.slane %v3428, 4
        %v3435 = vrot.slane %v3430, 4
        %v3436 = vrot.slane %v3432, 4
        %v3437 = vsel %vm734, %v3433, %v3434
        %v3438 = vsel %vm1785, %v3426, %v3437
        %v3439 = vsel %vm734, %v3435, %v3436
        %v3440 = vsel %vm1785, %v3430, %v3439
        %3443 = vst [vmem:[#allocation3 + $0xe8] sm:$0xff] %v3438
        %3444 = vst [vmem:[#allocation3 + $0xf8] sm:$0xff] %v3440
        %v3445 = vld [vmem:[#allocation2 + $0x8] sm:$0xff]
        %v3446 = vld [vmem:[#allocation2 + $0x10] sm:$0xff]
        %v3447 = vld [vmem:[#allocation2 + $0x18] sm:$0xff]
        %v3448 = vld [vmem:[#allocation2 + $0x48] sm:$0xff]
        %v3449 = vld [vmem:[#allocation2 + $0x50] sm:$0xff]
        %v3450 = vld [vmem:[#allocation2 + $0x58] sm:$0xff]
        %3457 = vrot.lane.b32.xlu0 %v3445, 111
        %v3458 = vpop.permute.xlu0 %3457
        %3459 = vrot.lane.b32.xlu0 %v3446, 111
        %v3460 = vpop.permute.xlu0 %3459
        %3461 = vrot.lane.b32.xlu0 %v3447, 111
        %v3462 = vpop.permute.xlu0 %3461
        %3463 = vrot.lane.b32.xlu0 %v3448, 111
        %v3464 = vpop.permute.xlu0 %3463
        %3465 = vrot.lane.b32.xlu0 %v3449, 111
        %v3466 = vpop.permute.xlu0 %3465
        %3467 = vrot.lane.b32.xlu0 %v3450, 111
        %v3468 = vpop.permute.xlu0 %3467
        %v3469 = vsel %vm1933, %v3458, %v3460
        %v3470 = vsel %vm1933, %v3460, %v3462
        %v3471 = vsel %vm1933, %v3464, %v3466
        %v3472 = vsel %vm1933, %v3466, %v3468
        %v3477 = vsel %vm850, %v3469, 0.0
        %v3478 = vsel %vm851, %v3470, 0.0
        %v3479 = vsel %vm850, %v3471, 0.0
        %v3480 = vsel %vm851, %v3472, 0.0
        %v3481 = vpack.c.bf16 %v3479, %v3477
        %v3482 = vpack.c.bf16 %v3480, %v3478
        %v3485 = vunpack.c.l.b16 %v3481
        %v3486 = vunpack.c.l.b16 %v3482
        %v3487 = vunpack.c.h.b16 %v3481
        %v3488 = vunpack.c.h.b16 %v3482
        %v3489 = vpack.c.b16 %v3486, %v3485
        %v3490 = vpack.c.b16 %v3488, %v3487
        %3493 = vst [vmem:[#allocation3 + $0x100] sm:$0xff] %v3489
        %3494 = vst [vmem:[#allocation3 + $0x110] sm:$0xff] %v3490
        %v3495 = vld [vmem:[#allocation2 + $0x28] sm:$0xff]
        %v3496 = vld [vmem:[#allocation2 + $0x30] sm:$0xff]
        %v3497 = vld [vmem:[#allocation2 + $0x38] sm:$0xff]
        %v3498 = vld [vmem:[#allocation2 + $0x68] sm:$0xff]
        %v3499 = vld [vmem:[#allocation2 + $0x70] sm:$0xff]
        %v3500 = vld [vmem:[#allocation2 + $0x78] sm:$0xff]
        %3507 = vrot.lane.b32.xlu0 %v3495, 111
        %v3508 = vpop.permute.xlu0 %3507
        %3509 = vrot.lane.b32.xlu0 %v3496, 111
        %v3510 = vpop.permute.xlu0 %3509
        %3511 = vrot.lane.b32.xlu0 %v3497, 111
        %v3512 = vpop.permute.xlu0 %3511
        %3513 = vrot.lane.b32.xlu0 %v3498, 111
        %v3514 = vpop.permute.xlu0 %3513
        %3515 = vrot.lane.b32.xlu0 %v3499, 111
        %v3516 = vpop.permute.xlu0 %3515
        %3517 = vrot.lane.b32.xlu0 %v3500, 111
        %v3518 = vpop.permute.xlu0 %3517
        %v3519 = vsel %vm1933, %v3508, %v3510
        %v3520 = vsel %vm1933, %v3510, %v3512
        %v3521 = vsel %vm1933, %v3514, %v3516
        %v3522 = vsel %vm1933, %v3516, %v3518
        %v3527 = vsel %vm850, %v3519, 0.0
        %v3528 = vsel %vm851, %v3520, 0.0
        %v3529 = vsel %vm850, %v3521, 0.0
        %v3530 = vsel %vm851, %v3522, 0.0
        %v3531 = vpack.c.bf16 %v3529, %v3527
        %v3532 = vpack.c.bf16 %v3530, %v3528
        %v3535 = vunpack.c.l.b16 %v3531
        %v3536 = vunpack.c.l.b16 %v3532
        %v3537 = vunpack.c.h.b16 %v3531
        %v3538 = vunpack.c.h.b16 %v3532
        %v3539 = vpack.c.b16 %v3536, %v3535
        %v3540 = vpack.c.b16 %v3538, %v3537
        %3543 = vst [vmem:[#allocation3 + $0x108] sm:$0xff] %v3539
        %3544 = vst [vmem:[#allocation3 + $0x118] sm:$0xff] %v3540
        %v3545 = vld [vmem:[%s4] sm:$0xff]
        %v3546 = vld [vmem:[%s4 + $0x8] sm:$0xff]
        %v3547 = vld [vmem:[#allocation3] sm:$0xff]
        %v3548 = vld [vmem:[#allocation3 + $0x8] sm:$0xff]
        %v3549 = vld [vmem:[#allocation3 + $0x10] sm:$0xff]
        %v3550 = vld [vmem:[#allocation3 + $0x18] sm:$0xff]
        %v3551 = vld [vmem:[#allocation3 + $0x20] sm:$0xff]
        %v3552 = vld [vmem:[#allocation3 + $0x28] sm:$0xff]
        %v3553 = vld [vmem:[#allocation3 + $0x30] sm:$0xff]
        %v3554 = vld [vmem:[#allocation3 + $0x38] sm:$0xff]
        %v3555 = vld [vmem:[#allocation3 + $0x40] sm:$0xff]
        %v3556 = vld [vmem:[#allocation3 + $0x48] sm:$0xff]
        %v3557 = vld [vmem:[#allocation3 + $0x50] sm:$0xff]
        %v3558 = vld [vmem:[#allocation3 + $0x58] sm:$0xff]
        %v3559 = vld [vmem:[#allocation3 + $0x60] sm:$0xff]
        %v3560 = vld [vmem:[#allocation3 + $0x68] sm:$0xff]
        %v3561 = vld [vmem:[#allocation3 + $0x70] sm:$0xff]
        %v3562 = vld [vmem:[#allocation3 + $0x78] sm:$0xff]
        %v3563 = vld [vmem:[#allocation3 + $0x80] sm:$0xff]
        %v3564 = vld [vmem:[#allocation3 + $0x88] sm:$0xff]
        %v3565 = vld [vmem:[#allocation3 + $0x90] sm:$0xff]
        %v3566 = vld [vmem:[#allocation3 + $0x98] sm:$0xff]
        %v3567 = vld [vmem:[#allocation3 + $0xa0] sm:$0xff]
        %v3568 = vld [vmem:[#allocation3 + $0xa8] sm:$0xff]
        %v3569 = vld [vmem:[#allocation3 + $0xb0] sm:$0xff]
        %v3570 = vld [vmem:[#allocation3 + $0xb8] sm:$0xff]
        %v3571 = vld [vmem:[#allocation3 + $0xc0] sm:$0xff]
        %v3572 = vld [vmem:[#allocation3 + $0xc8] sm:$0xff]
        %v3573 = vld [vmem:[#allocation3 + $0xd0] sm:$0xff]
        %v3574 = vld [vmem:[#allocation3 + $0xd8] sm:$0xff]
        %v3575 = vld [vmem:[#allocation3 + $0xe0] sm:$0xff]
        %v3576 = vld [vmem:[#allocation3 + $0xe8] sm:$0xff]
        %v3577 = vld [vmem:[#allocation3 + $0xf0] sm:$0xff]
        %v3578 = vld [vmem:[#allocation3 + $0xf8] sm:$0xff]
        %v3579 = vld [vmem:[#allocation3 + $0x100] sm:$0xff]
        %v3580 = vld [vmem:[#allocation3 + $0x108] sm:$0xff]
        %v3581 = vld [vmem:[#allocation3 + $0x110] sm:$0xff]
        %v3582 = vld [vmem:[#allocation3 + $0x118] sm:$0xff]
        %v3583 = vld [vmem:[%s5] sm:$0xff]
        %v3584 = vld [vmem:[%s5 + $0x8] sm:$0xff]
        %3586 = vset.pattern.permute.xlu0 0
        %3587 = vperm.xlu0 %3586, %v3583
        %v3588 = vpop.permute.xlu0 %3587
        %3591 = vset.pattern.permute.xlu0 0
        %3592 = vperm.xlu0 %3591, %v3584
        %v3593 = vpop.permute.xlu0 %3592
        %v3597 = vunpack.c.l.b16 %v3545
        %v3598 = vunpack.c.h.b16 %v3545
        %v3599 = vunpack.c.l.b16 %v3546
        %v3600 = vunpack.c.h.b16 %v3546
        %v3601 = vpack.c.b16 %v3599, %v3597
        %v3602 = vpack.c.b16 %v3600, %v3598
        %v3640 = vunpack.c.l.b16 %v3547
        %v3641 = vunpack.c.h.b16 %v3547
        %v3642 = vunpack.c.l.b16 %v3548
        %v3643 = vunpack.c.h.b16 %v3548
        %v3644 = vunpack.c.l.b16 %v3549
        %v3645 = vunpack.c.h.b16 %v3549
        %v3646 = vunpack.c.l.b16 %v3550
        %v3647 = vunpack.c.h.b16 %v3550
        %v3648 = vunpack.c.l.b16 %v3551
        %v3649 = vunpack.c.h.b16 %v3551
        %v3650 = vunpack.c.l.b16 %v3552
        %v3651 = vunpack.c.h.b16 %v3552
        %v3652 = vunpack.c.l.b16 %v3553
        %v3653 = vunpack.c.h.b16 %v3553
        %v3654 = vunpack.c.l.b16 %v3554
        %v3655 = vunpack.c.h.b16 %v3554
        %v3656 = vunpack.c.l.b16 %v3555
        %v3657 = vunpack.c.h.b16 %v3555
        %v3658 = vunpack.c.l.b16 %v3556
        %v3659 = vunpack.c.h.b16 %v3556
        %v3660 = vunpack.c.l.b16 %v3557
        %v3661 = vunpack.c.h.b16 %v3557
        %v3662 = vunpack.c.l.b16 %v3558
        %v3663 = vunpack.c.h.b16 %v3558
        %v3664 = vunpack.c.l.b16 %v3559
        %v3665 = vunpack.c.h.b16 %v3559
        %v3666 = vunpack.c.l.b16 %v3560
        %v3667 = vunpack.c.h.b16 %v3560
        %v3668 = vunpack.c.l.b16 %v3561
        %v3669 = vunpack.c.h.b16 %v3561
        %v3670 = vunpack.c.l.b16 %v3562
        %v3671 = vunpack.c.h.b16 %v3562
        %v3672 = vunpack.c.l.b16 %v3563
        %v3673 = vunpack.c.h.b16 %v3563
        %v3674 = vunpack.c.l.b16 %v3564
        %v3675 = vunpack.c.h.b16 %v3564
        %v3676 = vunpack.c.l.b16 %v3565
        %v3677 = vunpack.c.h.b16 %v3565
        %v3678 = vunpack.c.l.b16 %v3566
        %v3679 = vunpack.c.h.b16 %v3566
        %v3680 = vunpack.c.l.b16 %v3567
        %v3681 = vunpack.c.h.b16 %v3567
        %v3682 = vunpack.c.l.b16 %v3568
        %v3683 = vunpack.c.h.b16 %v3568
        %v3684 = vunpack.c.l.b16 %v3569
        %v3685 = vunpack.c.h.b16 %v3569
        %v3686 = vunpack.c.l.b16 %v3570
        %v3687 = vunpack.c.h.b16 %v3570
        %v3688 = vunpack.c.l.b16 %v3571
        %v3689 = vunpack.c.h.b16 %v3571
        %v3690 = vunpack.c.l.b16 %v3572
        %v3691 = vunpack.c.h.b16 %v3572
        %v3692 = vunpack.c.l.b16 %v3573
        %v3693 = vunpack.c.h.b16 %v3573
        %v3694 = vunpack.c.l.b16 %v3574
        %v3695 = vunpack.c.h.b16 %v3574
        %v3696 = vunpack.c.l.b16 %v3575
        %v3697 = vunpack.c.h.b16 %v3575
        %v3698 = vunpack.c.l.b16 %v3576
        %v3699 = vunpack.c.h.b16 %v3576
        %v3700 = vunpack.c.l.b16 %v3577
        %v3701 = vunpack.c.h.b16 %v3577
        %v3702 = vunpack.c.l.b16 %v3578
        %v3703 = vunpack.c.h.b16 %v3578
        %v3704 = vunpack.c.l.b16 %v3579
        %v3705 = vunpack.c.h.b16 %v3579
        %v3706 = vunpack.c.l.b16 %v3580
        %v3707 = vunpack.c.h.b16 %v3580
        %v3708 = vunpack.c.l.b16 %v3581
        %v3709 = vunpack.c.h.b16 %v3581
        %v3710 = vunpack.c.l.b16 %v3582
        %v3711 = vunpack.c.h.b16 %v3582
        %v3712 = vpack.c.b16 %v3644, %v3640
        %v3713 = vpack.c.b16 %v3645, %v3641
        %v3714 = vpack.c.b16 %v3646, %v3642
        %v3715 = vpack.c.b16 %v3647, %v3643
        %v3716 = vpack.c.b16 %v3652, %v3648
        %v3717 = vpack.c.b16 %v3653, %v3649
        %v3718 = vpack.c.b16 %v3654, %v3650
        %v3719 = vpack.c.b16 %v3655, %v3651
        %v3720 = vpack.c.b16 %v3660, %v3656
        %v3721 = vpack.c.b16 %v3661, %v3657
        %v3722 = vpack.c.b16 %v3662, %v3658
        %v3723 = vpack.c.b16 %v3663, %v3659
        %v3724 = vpack.c.b16 %v3668, %v3664
        %v3725 = vpack.c.b16 %v3669, %v3665
        %v3726 = vpack.c.b16 %v3670, %v3666
        %v3727 = vpack.c.b16 %v3671, %v3667
        %v3728 = vpack.c.b16 %v3676, %v3672
        %v3729 = vpack.c.b16 %v3677, %v3673
        %v3730 = vpack.c.b16 %v3678, %v3674
        %v3731 = vpack.c.b16 %v3679, %v3675
        %v3732 = vpack.c.b16 %v3684, %v3680
        %v3733 = vpack.c.b16 %v3685, %v3681
        %v3734 = vpack.c.b16 %v3686, %v3682
        %v3735 = vpack.c.b16 %v3687, %v3683
        %v3736 = vpack.c.b16 %v3692, %v3688
        %v3737 = vpack.c.b16 %v3693, %v3689
        %v3738 = vpack.c.b16 %v3694, %v3690
        %v3739 = vpack.c.b16 %v3695, %v3691
        %v3740 = vpack.c.b16 %v3700, %v3696
        %v3741 = vpack.c.b16 %v3701, %v3697
        %v3742 = vpack.c.b16 %v3702, %v3698
        %v3743 = vpack.c.b16 %v3703, %v3699
        %v3744 = vpack.c.b16 %v3708, %v3704
        %v3745 = vpack.c.b16 %v3709, %v3705
        %v3746 = vpack.c.b16 %v3710, %v3706
        %v3747 = vpack.c.b16 %v3711, %v3707
        %vm3784 = vcmask 130048
        %v3786 = vsel %vm3784, %v3602, 0
        %3788 = vmatprep.subr.bf16.mxu0 %v3741
        %3789 = vmatpush1.bf16.msra.mxu0 %v3740
        %3790 = vmatprep.subr.bf16.mxu0 %v3737
        %3791 = vmatpush1.bf16.msra.mxu0 %v3736
        %3792 = vmatprep.subr.bf16.mxu0 %v3733
        %3793 = vmatpush1.bf16.msra.mxu0 %v3732
        %3794 = vmatprep.subr.bf16.mxu0 %v3729
        %3795 = vmatpush1.bf16.msra.mxu0 %v3728
        %3796 = vmatprep.subr.bf16.mxu0 %v3725
        %3797 = vmatpush1.bf16.msra.mxu0 %v3724
        %3798 = vmatprep.subr.bf16.mxu0 %v3721
        %3799 = vmatpush1.bf16.msra.mxu0 %v3720
        %3800 = vmatprep.subr.bf16.mxu0 %v3717
        %3801 = vmatpush1.bf16.msra.mxu0 %v3716
        %3802 = vmatprep.subr.bf16.mxu0 %v3713
        %3803 = vmatpush1.bf16.msra.mxu0 %v3712
        %3804 = vmatprep.subr.bf16.mxu0 0
        %3805 = vmatpush2.bf16.msra.mxu0 0
        %3806 = vmatprep.subr.bf16.mxu0 0
        %3807 = vmatpush2.bf16.msra.mxu0 0
        %3808 = vmatprep.subr.bf16.mxu0 0
        %3809 = vmatpush2.bf16.msra.mxu0 0
        %3810 = vmatprep.subr.bf16.mxu0 0
        %3811 = vmatpush2.bf16.msra.mxu0 0
        %3812 = vmatprep.subr.bf16.mxu0 0
        %3813 = vmatpush2.bf16.msra.mxu0 0
        %3814 = vmatprep.subr.bf16.mxu0 0
        %3815 = vmatpush2.bf16.msra.mxu0 0
        %3816 = vmatprep.subr.bf16.mxu0 0
        %3817 = vmatpush2.bf16.msra.mxu0 0
        %3818 = vmatprep.subr.bf16.mxu0 %v3745
        %3819 = vmatpush2.bf16.msra.mxu0 %v3744
        %3820 = vmatprep.mubr.bf16.mxu0 %v3786
        %3821 = vmatmul.mubr.bf16.gmra.mxu0 %v3601
        %v3822 = vpop.f32.mrf.mxu0
        %v3823 = vadd.f32 %v3588, %v3822
        %v3824 = vpop.f32.mrf.mxu0
        %v3825 = vadd.f32 %v3588, %v3824
        %v3826 = vpop.f32.mrf.mxu0
        %v3827 = vadd.f32 %v3593, %v3826
        %v3828 = vpop.f32.mrf.mxu0
        %v3829 = vadd.f32 %v3593, %v3828
        %3830 = vdwg.mxu0
        %3831 = vmatprep.subr.bf16.mxu0 %v3743
        %3832 = vmatpush1.bf16.msra.mxu0 %v3742
        %3833 = vmatprep.subr.bf16.mxu0 %v3739
        %3834 = vmatpush1.bf16.msra.mxu0 %v3738
        %3835 = vmatprep.subr.bf16.mxu0 %v3735
        %3836 = vmatpush1.bf16.msra.mxu0 %v3734
        %3837 = vmatprep.subr.bf16.mxu0 %v3731
        %3838 = vmatpush1.bf16.msra.mxu0 %v3730
        %3839 = vmatprep.subr.bf16.mxu0 %v3727
        %3840 = vmatpush1.bf16.msra.mxu0 %v3726
        %3841 = vmatprep.subr.bf16.mxu0 %v3723
        %3842 = vmatpush1.bf16.msra.mxu0 %v3722
        %3843 = vmatprep.subr.bf16.mxu0 %v3719
        %3844 = vmatpush1.bf16.msra.mxu0 %v3718
        %3845 = vmatprep.subr.bf16.mxu0 %v3715
        %3846 = vmatpush1.bf16.msra.mxu0 %v3714
        %3847 = vmatprep.subr.bf16.mxu0 0
        %3848 = vmatpush2.bf16.msra.mxu0 0
        %3849 = vmatprep.subr.bf16.mxu0 0
        %3850 = vmatpush2.bf16.msra.mxu0 0
        %3851 = vmatprep.subr.bf16.mxu0 0
        %3852 = vmatpush2.bf16.msra.mxu0 0
        %3853 = vmatprep.subr.bf16.mxu0 0
        %3854 = vmatpush2.bf16.msra.mxu0 0
        %3855 = vmatprep.subr.bf16.mxu0 0
        %3856 = vmatpush2.bf16.msra.mxu0 0
        %3857 = vmatprep.subr.bf16.mxu0 0
        %3858 = vmatpush2.bf16.msra.mxu0 0
        %3859 = vmatprep.subr.bf16.mxu0 0
        %3860 = vmatpush2.bf16.msra.mxu0 0
        %3861 = vmatprep.subr.bf16.mxu0 %v3747
        %3862 = vmatpush2.bf16.msra.mxu0 %v3746
        %3863 = vmatprep.mubr.bf16.mxu0 %v3786
        %3864 = vmatmul.mubr.bf16.gmra.mxu0 %v3601
        %v3865 = vpop.f32.mrf.mxu0
        %v3866 = vadd.f32 %v3588, %v3865
        %v3867 = vpop.f32.mrf.mxu0
        %v3868 = vadd.f32 %v3588, %v3867
        %v3869 = vpop.f32.mrf.mxu0
        %v3870 = vadd.f32 %v3593, %v3869
        %v3871 = vpop.f32.mrf.mxu0
        %v3872 = vadd.f32 %v3593, %v3871
        %3873 = vdwg.mxu0
        %v3874 = vmax.f32 %v3823, 0.0
        %v3875 = vmax.f32 %v3825, 0.0
        %v3876 = vmax.f32 %v3866, 0.0
        %v3877 = vmax.f32 %v3868, 0.0
        %v3878 = vmax.f32 %v3827, 0.0
        %v3879 = vmax.f32 %v3829, 0.0
        %v3880 = vmax.f32 %v3870, 0.0
        %v3881 = vmax.f32 %v3872, 0.0
        %3882 = vst [vmem:[#allocation2 + $0x8] sm:$0xff] %v3874
        %3883 = vst [vmem:[#allocation2 + $0x10] sm:$0xff] %v3875
        %3884 = vst [vmem:[#allocation2 + $0x48] sm:$0xff] %v3878
        %3885 = vst [vmem:[#allocation2 + $0x50] sm:$0xff] %v3879
        %3886 = vst [vmem:[#allocation2 + $0x28] sm:$0xff] %v3876
        %3887 = vst [vmem:[#allocation2 + $0x30] sm:$0xff] %v3877
        %3888 = vst [vmem:[#allocation2 + $0x68] sm:$0xff] %v3880
        %3889 = vst [vmem:[#allocation2 + $0x70] sm:$0xff] %v3881
        %v3890 = vld [vmem:[#allocation2] sm:$0xff]
        %v3891 = vld [vmem:[#allocation2 + $0x8] sm:$0xff]
        %v3892 = vld [vmem:[#allocation2 + $0x10] sm:$0xff]
        %v3893 = vld [vmem:[#allocation2 + $0x40] sm:$0xff]
        %v3894 = vld [vmem:[#allocation2 + $0x48] sm:$0xff]
        %v3895 = vld [vmem:[#allocation2 + $0x50] sm:$0xff]
        %3902 = vrot.lane.b32.xlu0 %v3890, 17
        %v3903 = vpop.permute.xlu0 %3902
        %3904 = vrot.lane.b32.xlu0 %v3891, 17
        %v3905 = vpop.permute.xlu0 %3904
        %3906 = vrot.lane.b32.xlu0 %v3892, 17
        %v3907 = vpop.permute.xlu0 %3906
        %3908 = vrot.lane.b32.xlu0 %v3893, 17
        %v3909 = vpop.permute.xlu0 %3908
        %3910 = vrot.lane.b32.xlu0 %v3894, 17
        %v3911 = vpop.permute.xlu0 %3910
        %3912 = vrot.lane.b32.xlu0 %v3895, 17
        %v3913 = vpop.permute.xlu0 %3912
        %v3914 = vsel %vm513, %v3903, %v3905
        %v3915 = vsel %vm513, %v3905, %v3907
        %v3916 = vsel %vm513, %v3909, %v3911
        %v3917 = vsel %vm513, %v3911, %v3913
        %v3922 = vsel %vm475, %v3914, 0.0
        %v3923 = vsel %vm476, %v3915, 0.0
        %v3924 = vsel %vm475, %v3916, 0.0
        %v3925 = vsel %vm476, %v3917, 0.0
        %v3926 = vpack.c.bf16 %v3924, %v3922
        %v3927 = vpack.c.bf16 %v3925, %v3923
        %v3930 = vunpack.c.l.b16 %v3926
        %v3931 = vunpack.c.l.b16 %v3927
        %v3932 = vunpack.c.h.b16 %v3926
        %v3933 = vunpack.c.h.b16 %v3927
        %v3934 = vpack.c.b16 %v3931, %v3930
        %v3935 = vpack.c.b16 %v3933, %v3932
        %3938 = vst [vmem:[#allocation3] sm:$0xff] %v3934
        %3939 = vst [vmem:[#allocation3 + $0x10] sm:$0xff] %v3935
        %v3940 = vld [vmem:[#allocation2 + $0x20] sm:$0xff]
        %v3941 = vld [vmem:[#allocation2 + $0x28] sm:$0xff]
        %v3942 = vld [vmem:[#allocation2 + $0x30] sm:$0xff]
        %v3943 = vld [vmem:[#allocation2 + $0x60] sm:$0xff]
        %v3944 = vld [vmem:[#allocation2 + $0x68] sm:$0xff]
        %v3945 = vld [vmem:[#allocation2 + $0x70] sm:$0xff]
        %3952 = vrot.lane.b32.xlu0 %v3940, 17
        %v3953 = vpop.permute.xlu0 %3952
        %3954 = vrot.lane.b32.xlu0 %v3941, 17
        %v3955 = vpop.permute.xlu0 %3954
        %3956 = vrot.lane.b32.xlu0 %v3942, 17
        %v3957 = vpop.permute.xlu0 %3956
        %3958 = vrot.lane.b32.xlu0 %v3943, 17
        %v3959 = vpop.permute.xlu0 %3958
        %3960 = vrot.lane.b32.xlu0 %v3944, 17
        %v3961 = vpop.permute.xlu0 %3960
        %3962 = vrot.lane.b32.xlu0 %v3945, 17
        %v3963 = vpop.permute.xlu0 %3962
        %v3964 = vsel %vm513, %v3953, %v3955
        %v3965 = vsel %vm513, %v3955, %v3957
        %v3966 = vsel %vm513, %v3959, %v3961
        %v3967 = vsel %vm513, %v3961, %v3963
        %v3972 = vsel %vm475, %v3964, 0.0
        %v3973 = vsel %vm476, %v3965, 0.0
        %v3974 = vsel %vm475, %v3966, 0.0
        %v3975 = vsel %vm476, %v3967, 0.0
        %v3976 = vpack.c.bf16 %v3974, %v3972
        %v3977 = vpack.c.bf16 %v3975, %v3973
        %v3980 = vunpack.c.l.b16 %v3976
        %v3981 = vunpack.c.l.b16 %v3977
        %v3982 = vunpack.c.h.b16 %v3976
        %v3983 = vunpack.c.h.b16 %v3977
        %v3984 = vpack.c.b16 %v3981, %v3980
        %v3985 = vpack.c.b16 %v3983, %v3982
        %3988 = vst [vmem:[#allocation3 + $0x8] sm:$0xff] %v3984
        %3989 = vst [vmem:[#allocation3 + $0x18] sm:$0xff] %v3985
        %v3990 = vld [vmem:[#allocation2] sm:$0xff]
        %v3991 = vld [vmem:[#allocation2 + $0x8] sm:$0xff]
        %v3992 = vld [vmem:[#allocation2 + $0x10] sm:$0xff]
        %v3993 = vld [vmem:[#allocation2 + $0x40] sm:$0xff]
        %v3994 = vld [vmem:[#allocation2 + $0x48] sm:$0xff]
        %v3995 = vld [vmem:[#allocation2 + $0x50] sm:$0xff]
        %v3996 = vpack.c.bf16 %v3993, %v3990
        %v3997 = vpack.c.bf16 %v3994, %v3991
        %v3998 = vpack.c.bf16 %v3995, %v3992
        %v4002 = vunpack.c.l.b16 %v3996
        %v4003 = vunpack.c.l.b16 %v3997
        %v4004 = vunpack.c.l.b16 %v3998
        %v4005 = vunpack.c.h.b16 %v3996
        %v4006 = vunpack.c.h.b16 %v3997
        %v4007 = vunpack.c.h.b16 %v3998
        %v4008 = vpack.c.b16 %v4003, %v4002
        %v4009 = vpack.c.b16 %v4004, %v4004
        %v4010 = vpack.c.b16 %v4006, %v4005
        %v4011 = vpack.c.b16 %v4007, %v4007
        %4012 = vrot.lane.b32.xlu0 %v4008, 16
        %v4013 = vpop.permute.xlu0 %4012
        %4014 = vrot.lane.b32.xlu0 %v4009, 16
        %v4015 = vpop.permute.xlu0 %4014
        %4016 = vrot.lane.b32.xlu0 %v4010, 16
        %v4017 = vpop.permute.xlu0 %4016
        %4018 = vrot.lane.b32.xlu0 %v4011, 16
        %v4019 = vpop.permute.xlu0 %4018
        %v4020 = vrot.slane %v4013, 4
        %v4021 = vrot.slane %v4015, 4
        %v4022 = vrot.slane %v4017, 4
        %v4023 = vrot.slane %v4019, 4
        %v4024 = vsel %vm734, %v4020, %v4021
        %v4025 = vsel %vm736, %v4013, %v4024
        %v4026 = vsel %vm734, %v4022, %v4023
        %v4027 = vsel %vm736, %v4017, %v4026
        %4030 = vst [vmem:[#allocation3 + $0x20] sm:$0xff] %v4025
        %4031 = vst [vmem:[#allocation3 + $0x30] sm:$0xff] %v4027
        %v4032 = vld [vmem:[#allocation2 + $0x20] sm:$0xff]
        %v4033 = vld [vmem:[#allocation2 + $0x28] sm:$0xff]
        %v4034 = vld [vmem:[#allocation2 + $0x30] sm:$0xff]
        %v4035 = vld [vmem:[#allocation2 + $0x60] sm:$0xff]
        %v4036 = vld [vmem:[#allocation2 + $0x68] sm:$0xff]
        %v4037 = vld [vmem:[#allocation2 + $0x70] sm:$0xff]
        %v4038 = vpack.c.bf16 %v4035, %v4032
        %v4039 = vpack.c.bf16 %v4036, %v4033
        %v4040 = vpack.c.bf16 %v4037, %v4034
        %v4044 = vunpack.c.l.b16 %v4038
        %v4045 = vunpack.c.l.b16 %v4039
        %v4046 = vunpack.c.l.b16 %v4040
        %v4047 = vunpack.c.h.b16 %v4038
        %v4048 = vunpack.c.h.b16 %v4039
        %v4049 = vunpack.c.h.b16 %v4040
        %v4050 = vpack.c.b16 %v4045, %v4044
        %v4051 = vpack.c.b16 %v4046, %v4046
        %v4052 = vpack.c.b16 %v4048, %v4047
        %v4053 = vpack.c.b16 %v4049, %v4049
        %4054 = vrot.lane.b32.xlu0 %v4050, 16
        %v4055 = vpop.permute.xlu0 %4054
        %4056 = vrot.lane.b32.xlu0 %v4051, 16
        %v4057 = vpop.permute.xlu0 %4056
        %4058 = vrot.lane.b32.xlu0 %v4052, 16
        %v4059 = vpop.permute.xlu0 %4058
        %4060 = vrot.lane.b32.xlu0 %v4053, 16
        %v4061 = vpop.permute.xlu0 %4060
        %v4062 = vrot.slane %v4055, 4
        %v4063 = vrot.slane %v4057, 4
        %v4064 = vrot.slane %v4059, 4
        %v4065 = vrot.slane %v4061, 4
        %v4066 = vsel %vm734, %v4062, %v4063
        %v4067 = vsel %vm736, %v4055, %v4066
        %v4068 = vsel %vm734, %v4064, %v4065
        %v4069 = vsel %vm736, %v4059, %v4068
        %4072 = vst [vmem:[#allocation3 + $0x28] sm:$0xff] %v4067
        %4073 = vst [vmem:[#allocation3 + $0x38] sm:$0xff] %v4069
        %v4074 = vld [vmem:[#allocation2] sm:$0xff]
        %v4075 = vld [vmem:[#allocation2 + $0x8] sm:$0xff]
        %v4076 = vld [vmem:[#allocation2 + $0x10] sm:$0xff]
        %v4077 = vld [vmem:[#allocation2 + $0x40] sm:$0xff]
        %v4078 = vld [vmem:[#allocation2 + $0x48] sm:$0xff]
        %v4079 = vld [vmem:[#allocation2 + $0x50] sm:$0xff]
        %4086 = vrot.lane.b32.xlu0 %v4074, 15
        %v4087 = vpop.permute.xlu0 %4086
        %4088 = vrot.lane.b32.xlu0 %v4075, 15
        %v4089 = vpop.permute.xlu0 %4088
        %4090 = vrot.lane.b32.xlu0 %v4076, 15
        %v4091 = vpop.permute.xlu0 %4090
        %4092 = vrot.lane.b32.xlu0 %v4077, 15
        %v4093 = vpop.permute.xlu0 %4092
        %4094 = vrot.lane.b32.xlu0 %v4078, 15
        %v4095 = vpop.permute.xlu0 %4094
        %4096 = vrot.lane.b32.xlu0 %v4079, 15
        %v4097 = vpop.permute.xlu0 %4096
        %v4098 = vsel %vm888, %v4087, %v4089
        %v4099 = vsel %vm888, %v4089, %v4091
        %v4100 = vsel %vm888, %v4093, %v4095
        %v4101 = vsel %vm888, %v4095, %v4097
        %v4106 = vsel %vm850, %v4098, 0.0
        %v4107 = vsel %vm851, %v4099, 0.0
        %v4108 = vsel %vm850, %v4100, 0.0
        %v4109 = vsel %vm851, %v4101, 0.0
        %v4110 = vpack.c.bf16 %v4108, %v4106
        %v4111 = vpack.c.bf16 %v4109, %v4107
        %v4114 = vunpack.c.l.b16 %v4110
        %v4115 = vunpack.c.l.b16 %v4111
        %v4116 = vunpack.c.h.b16 %v4110
        %v4117 = vunpack.c.h.b16 %v4111
        %v4118 = vpack.c.b16 %v4115, %v4114
        %v4119 = vpack.c.b16 %v4117, %v4116
        %4122 = vst [vmem:[#allocation3 + $0x40] sm:$0xff] %v4118
        %4123 = vst [vmem:[#allocation3 + $0x50] sm:$0xff] %v4119
        %v4124 = vld [vmem:[#allocation2 + $0x20] sm:$0xff]
        %v4125 = vld [vmem:[#allocation2 + $0x28] sm:$0xff]
        %v4126 = vld [vmem:[#allocation2 + $0x30] sm:$0xff]
        %v4127 = vld [vmem:[#allocation2 + $0x60] sm:$0xff]
        %v4128 = vld [vmem:[#allocation2 + $0x68] sm:$0xff]
        %v4129 = vld [vmem:[#allocation2 + $0x70] sm:$0xff]
        %4136 = vrot.lane.b32.xlu0 %v4124, 15
        %v4137 = vpop.permute.xlu0 %4136
        %4138 = vrot.lane.b32.xlu0 %v4125, 15
        %v4139 = vpop.permute.xlu0 %4138
        %4140 = vrot.lane.b32.xlu0 %v4126, 15
        %v4141 = vpop.permute.xlu0 %4140
        %4142 = vrot.lane.b32.xlu0 %v4127, 15
        %v4143 = vpop.permute.xlu0 %4142
        %4144 = vrot.lane.b32.xlu0 %v4128, 15
        %v4145 = vpop.permute.xlu0 %4144
        %4146 = vrot.lane.b32.xlu0 %v4129, 15
        %v4147 = vpop.permute.xlu0 %4146
        %v4148 = vsel %vm888, %v4137, %v4139
        %v4149 = vsel %vm888, %v4139, %v4141
        %v4150 = vsel %vm888, %v4143, %v4145
        %v4151 = vsel %vm888, %v4145, %v4147
        %v4156 = vsel %vm850, %v4148, 0.0
        %v4157 = vsel %vm851, %v4149, 0.0
        %v4158 = vsel %vm850, %v4150, 0.0
        %v4159 = vsel %vm851, %v4151, 0.0
        %v4160 = vpack.c.bf16 %v4158, %v4156
        %v4161 = vpack.c.bf16 %v4159, %v4157
        %v4164 = vunpack.c.l.b16 %v4160
        %v4165 = vunpack.c.l.b16 %v4161
        %v4166 = vunpack.c.h.b16 %v4160
        %v4167 = vunpack.c.h.b16 %v4161
        %v4168 = vpack.c.b16 %v4165, %v4164
        %v4169 = vpack.c.b16 %v4167, %v4166
        %4172 = vst [vmem:[#allocation3 + $0x48] sm:$0xff] %v4168
        %4173 = vst [vmem:[#allocation3 + $0x58] sm:$0xff] %v4169
        %v4174 = vld [vmem:[#allocation2] sm:$0xff]
        %v4175 = vld [vmem:[#allocation2 + $0x8] sm:$0xff]
        %v4176 = vld [vmem:[#allocation2 + $0x10] sm:$0xff]
        %v4177 = vld [vmem:[#allocation2 + $0x40] sm:$0xff]
        %v4178 = vld [vmem:[#allocation2 + $0x48] sm:$0xff]
        %v4179 = vld [vmem:[#allocation2 + $0x50] sm:$0xff]
        %4186 = vrot.lane.b32.xlu0 %v4174, 1
        %v4187 = vpop.permute.xlu0 %4186
        %4188 = vrot.lane.b32.xlu0 %v4175, 1
        %v4189 = vpop.permute.xlu0 %4188
        %4190 = vrot.lane.b32.xlu0 %v4176, 1
        %v4191 = vpop.permute.xlu0 %4190
        %4192 = vrot.lane.b32.xlu0 %v4177, 1
        %v4193 = vpop.permute.xlu0 %4192
        %4194 = vrot.lane.b32.xlu0 %v4178, 1
        %v4195 = vpop.permute.xlu0 %4194
        %4196 = vrot.lane.b32.xlu0 %v4179, 1
        %v4197 = vpop.permute.xlu0 %4196
        %v4198 = vsel %vm1089, %v4187, %v4189
        %v4199 = vsel %vm1089, %v4189, %v4191
        %v4200 = vsel %vm1089, %v4193, %v4195
        %v4201 = vsel %vm1089, %v4195, %v4197
        %v4206 = vsel %vm475, %v4198, 0.0
        %v4207 = vsel %vm476, %v4199, 0.0
        %v4208 = vsel %vm475, %v4200, 0.0
        %v4209 = vsel %vm476, %v4201, 0.0
        %v4210 = vpack.c.bf16 %v4208, %v4206
        %v4211 = vpack.c.bf16 %v4209, %v4207
        %v4214 = vunpack.c.l.b16 %v4210
        %v4215 = vunpack.c.l.b16 %v4211
        %v4216 = vunpack.c.h.b16 %v4210
        %v4217 = vunpack.c.h.b16 %v4211
        %v4218 = vpack.c.b16 %v4215, %v4214
        %v4219 = vpack.c.b16 %v4217, %v4216
        %4222 = vst [vmem:[#allocation3 + $0x60] sm:$0xff] %v4218
        %4223 = vst [vmem:[#allocation3 + $0x70] sm:$0xff] %v4219
        %v4224 = vld [vmem:[#allocation2 + $0x20] sm:$0xff]
        %v4225 = vld [vmem:[#allocation2 + $0x28] sm:$0xff]
        %v4226 = vld [vmem:[#allocation2 + $0x30] sm:$0xff]
        %v4227 = vld [vmem:[#allocation2 + $0x60] sm:$0xff]
        %v4228 = vld [vmem:[#allocation2 + $0x68] sm:$0xff]
        %v4229 = vld [vmem:[#allocation2 + $0x70] sm:$0xff]
        %4236 = vrot.lane.b32.xlu0 %v4224, 1
        %v4237 = vpop.permute.xlu0 %4236
        %4238 = vrot.lane.b32.xlu0 %v4225, 1
        %v4239 = vpop.permute.xlu0 %4238
        %4240 = vrot.lane.b32.xlu0 %v4226, 1
        %v4241 = vpop.permute.xlu0 %4240
        %4242 = vrot.lane.b32.xlu0 %v4227, 1
        %v4243 = vpop.permute.xlu0 %4242
        %4244 = vrot.lane.b32.xlu0 %v4228, 1
        %v4245 = vpop.permute.xlu0 %4244
        %4246 = vrot.lane.b32.xlu0 %v4229, 1
        %v4247 = vpop.permute.xlu0 %4246
        %v4248 = vsel %vm1089, %v4237, %v4239
        %v4249 = vsel %vm1089, %v4239, %v4241
        %v4250 = vsel %vm1089, %v4243, %v4245
        %v4251 = vsel %vm1089, %v4245, %v4247
        %v4256 = vsel %vm475, %v4248, 0.0
        %v4257 = vsel %vm476, %v4249, 0.0
        %v4258 = vsel %vm475, %v4250, 0.0
        %v4259 = vsel %vm476, %v4251, 0.0
        %v4260 = vpack.c.bf16 %v4258, %v4256
        %v4261 = vpack.c.bf16 %v4259, %v4257
        %v4264 = vunpack.c.l.b16 %v4260
        %v4265 = vunpack.c.l.b16 %v4261
        %v4266 = vunpack.c.h.b16 %v4260
        %v4267 = vunpack.c.h.b16 %v4261
        %v4268 = vpack.c.b16 %v4265, %v4264
        %v4269 = vpack.c.b16 %v4267, %v4266
        %4272 = vst [vmem:[#allocation3 + $0x68] sm:$0xff] %v4268
        %4273 = vst [vmem:[#allocation3 + $0x78] sm:$0xff] %v4269
        %v4274 = vld [vmem:[#allocation2 + $0x8] sm:$0xff]
        %v4275 = vld [vmem:[#allocation2 + $0x10] sm:$0xff]
        %v4276 = vld [vmem:[#allocation2 + $0x48] sm:$0xff]
        %v4277 = vld [vmem:[#allocation2 + $0x50] sm:$0xff]
        %v4278 = vpack.c.bf16 %v4276, %v4274
        %v4279 = vpack.c.bf16 %v4277, %v4275
        %v4282 = vunpack.c.l.b16 %v4278
        %v4283 = vunpack.c.l.b16 %v4279
        %v4284 = vunpack.c.h.b16 %v4278
        %v4285 = vunpack.c.h.b16 %v4279
        %v4286 = vpack.c.b16 %v4283, %v4282
        %v4287 = vpack.c.b16 %v4285, %v4284
        %4290 = vst [vmem:[#allocation3 + $0x80] sm:$0xff] %v4286
        %4291 = vst [vmem:[#allocation3 + $0x90] sm:$0xff] %v4287
        %v4292 = vld [vmem:[#allocation2 + $0x28] sm:$0xff]
        %v4293 = vld [vmem:[#allocation2 + $0x30] sm:$0xff]
        %v4294 = vld [vmem:[#allocation2 + $0x68] sm:$0xff]
        %v4295 = vld [vmem:[#allocation2 + $0x70] sm:$0xff]
        %v4296 = vpack.c.bf16 %v4294, %v4292
        %v4297 = vpack.c.bf16 %v4295, %v4293
        %v4300 = vunpack.c.l.b16 %v4296
        %v4301 = vunpack.c.l.b16 %v4297
        %v4302 = vunpack.c.h.b16 %v4296
        %v4303 = vunpack.c.h.b16 %v4297
        %v4304 = vpack.c.b16 %v4301, %v4300
        %v4305 = vpack.c.b16 %v4303, %v4302
        %4308 = vst [vmem:[#allocation3 + $0x88] sm:$0xff] %v4304
        %4309 = vst [vmem:[#allocation3 + $0x98] sm:$0xff] %v4305
        %v4310 = vld [vmem:[#allocation2 + $0x8] sm:$0xff]
        %v4311 = vld [vmem:[#allocation2 + $0x10] sm:$0xff]
        %v4312 = vld [vmem:[#allocation2 + $0x18] sm:$0xff]
        %v4313 = vld [vmem:[#allocation2 + $0x48] sm:$0xff]
        %v4314 = vld [vmem:[#allocation2 + $0x50] sm:$0xff]
        %v4315 = vld [vmem:[#allocation2 + $0x58] sm:$0xff]
        %4322 = vrot.lane.b32.xlu0 %v4310, 127
        %v4323 = vpop.permute.xlu0 %4322
        %4324 = vrot.lane.b32.xlu0 %v4311, 127
        %v4325 = vpop.permute.xlu0 %4324
        %4326 = vrot.lane.b32.xlu0 %v4312, 127
        %v4327 = vpop.permute.xlu0 %4326
        %4328 = vrot.lane.b32.xlu0 %v4313, 127
        %v4329 = vpop.permute.xlu0 %4328
        %4330 = vrot.lane.b32.xlu0 %v4314, 127
        %v4331 = vpop.permute.xlu0 %4330
        %4332 = vrot.lane.b32.xlu0 %v4315, 127
        %v4333 = vpop.permute.xlu0 %4332
        %v4334 = vsel %vm1362, %v4323, %v4325
        %v4335 = vsel %vm1362, %v4325, %v4327
        %v4336 = vsel %vm1362, %v4329, %v4331
        %v4337 = vsel %vm1362, %v4331, %v4333
        %v4342 = vsel %vm850, %v4334, 0.0
        %v4343 = vsel %vm851, %v4335, 0.0
        %v4344 = vsel %vm850, %v4336, 0.0
        %v4345 = vsel %vm851, %v4337, 0.0
        %v4346 = vpack.c.bf16 %v4344, %v4342
        %v4347 = vpack.c.bf16 %v4345, %v4343
        %v4350 = vunpack.c.l.b16 %v4346
        %v4351 = vunpack.c.l.b16 %v4347
        %v4352 = vunpack.c.h.b16 %v4346
        %v4353 = vunpack.c.h.b16 %v4347
        %v4354 = vpack.c.b16 %v4351, %v4350
        %v4355 = vpack.c.b16 %v4353, %v4352
        %4358 = vst [vmem:[#allocation3 + $0xa0] sm:$0xff] %v4354
        %4359 = vst [vmem:[#allocation3 + $0xb0] sm:$0xff] %v4355
        %v4360 = vld [vmem:[#allocation2 + $0x28] sm:$0xff]
        %v4361 = vld [vmem:[#allocation2 + $0x30] sm:$0xff]
        %v4362 = vld [vmem:[#allocation2 + $0x38] sm:$0xff]
        %v4363 = vld [vmem:[#allocation2 + $0x68] sm:$0xff]
        %v4364 = vld [vmem:[#allocation2 + $0x70] sm:$0xff]
        %v4365 = vld [vmem:[#allocation2 + $0x78] sm:$0xff]
        %4372 = vrot.lane.b32.xlu0 %v4360, 127
        %v4373 = vpop.permute.xlu0 %4372
        %4374 = vrot.lane.b32.xlu0 %v4361, 127
        %v4375 = vpop.permute.xlu0 %4374
        %4376 = vrot.lane.b32.xlu0 %v4362, 127
        %v4377 = vpop.permute.xlu0 %4376
        %4378 = vrot.lane.b32.xlu0 %v4363, 127
        %v4379 = vpop.permute.xlu0 %4378
        %4380 = vrot.lane.b32.xlu0 %v4364, 127
        %v4381 = vpop.permute.xlu0 %4380
        %4382 = vrot.lane.b32.xlu0 %v4365, 127
        %v4383 = vpop.permute.xlu0 %4382
        %v4384 = vsel %vm1362, %v4373, %v4375
        %v4385 = vsel %vm1362, %v4375, %v4377
        %v4386 = vsel %vm1362, %v4379, %v4381
        %v4387 = vsel %vm1362, %v4381, %v4383
        %v4392 = vsel %vm850, %v4384, 0.0
        %v4393 = vsel %vm851, %v4385, 0.0
        %v4394 = vsel %vm850, %v4386, 0.0
        %v4395 = vsel %vm851, %v4387, 0.0
        %v4396 = vpack.c.bf16 %v4394, %v4392
        %v4397 = vpack.c.bf16 %v4395, %v4393
        %v4400 = vunpack.c.l.b16 %v4396
        %v4401 = vunpack.c.l.b16 %v4397
        %v4402 = vunpack.c.h.b16 %v4396
        %v4403 = vunpack.c.h.b16 %v4397
        %v4404 = vpack.c.b16 %v4401, %v4400
        %v4405 = vpack.c.b16 %v4403, %v4402
        %4408 = vst [vmem:[#allocation3 + $0xa8] sm:$0xff] %v4404
        %4409 = vst [vmem:[#allocation3 + $0xb8] sm:$0xff] %v4405
        %v4410 = vld [vmem:[#allocation2 + $0x8] sm:$0xff]
        %v4411 = vld [vmem:[#allocation2 + $0x10] sm:$0xff]
        %v4412 = vld [vmem:[#allocation2 + $0x18] sm:$0xff]
        %v4413 = vld [vmem:[#allocation2 + $0x48] sm:$0xff]
        %v4414 = vld [vmem:[#allocation2 + $0x50] sm:$0xff]
        %v4415 = vld [vmem:[#allocation2 + $0x58] sm:$0xff]
        %4422 = vrot.lane.b32.xlu0 %v4410, 113
        %v4423 = vpop.permute.xlu0 %4422
        %4424 = vrot.lane.b32.xlu0 %v4411, 113
        %v4425 = vpop.permute.xlu0 %4424
        %4426 = vrot.lane.b32.xlu0 %v4412, 113
        %v4427 = vpop.permute.xlu0 %4426
        %4428 = vrot.lane.b32.xlu0 %v4413, 113
        %v4429 = vpop.permute.xlu0 %4428
        %4430 = vrot.lane.b32.xlu0 %v4414, 113
        %v4431 = vpop.permute.xlu0 %4430
        %4432 = vrot.lane.b32.xlu0 %v4415, 113
        %v4433 = vpop.permute.xlu0 %4432
        %v4434 = vsel %vm1563, %v4423, %v4425
        %v4435 = vsel %vm1563, %v4425, %v4427
        %v4436 = vsel %vm1563, %v4429, %v4431
        %v4437 = vsel %vm1563, %v4431, %v4433
        %v4442 = vsel %vm475, %v4434, 0.0
        %v4443 = vsel %vm476, %v4435, 0.0
        %v4444 = vsel %vm475, %v4436, 0.0
        %v4445 = vsel %vm476, %v4437, 0.0
        %v4446 = vpack.c.bf16 %v4444, %v4442
        %v4447 = vpack.c.bf16 %v4445, %v4443
        %v4450 = vunpack.c.l.b16 %v4446
        %v4451 = vunpack.c.l.b16 %v4447
        %v4452 = vunpack.c.h.b16 %v4446
        %v4453 = vunpack.c.h.b16 %v4447
        %v4454 = vpack.c.b16 %v4451, %v4450
        %v4455 = vpack.c.b16 %v4453, %v4452
        %4458 = vst [vmem:[#allocation3 + $0xc0] sm:$0xff] %v4454
        %4459 = vst [vmem:[#allocation3 + $0xd0] sm:$0xff] %v4455
        %v4460 = vld [vmem:[#allocation2 + $0x28] sm:$0xff]
        %v4461 = vld [vmem:[#allocation2 + $0x30] sm:$0xff]
        %v4462 = vld [vmem:[#allocation2 + $0x38] sm:$0xff]
        %v4463 = vld [vmem:[#allocation2 + $0x68] sm:$0xff]
        %v4464 = vld [vmem:[#allocation2 + $0x70] sm:$0xff]
        %v4465 = vld [vmem:[#allocation2 + $0x78] sm:$0xff]
        %4472 = vrot.lane.b32.xlu0 %v4460, 113
        %v4473 = vpop.permute.xlu0 %4472
        %4474 = vrot.lane.b32.xlu0 %v4461, 113
        %v4475 = vpop.permute.xlu0 %4474
        %4476 = vrot.lane.b32.xlu0 %v4462, 113
        %v4477 = vpop.permute.xlu0 %4476
        %4478 = vrot.lane.b32.xlu0 %v4463, 113
        %v4479 = vpop.permute.xlu0 %4478
        %4480 = vrot.lane.b32.xlu0 %v4464, 113
        %v4481 = vpop.permute.xlu0 %4480
        %4482 = vrot.lane.b32.xlu0 %v4465, 113
        %v4483 = vpop.permute.xlu0 %4482
        %v4484 = vsel %vm1563, %v4473, %v4475
        %v4485 = vsel %vm1563, %v4475, %v4477
        %v4486 = vsel %vm1563, %v4479, %v4481
        %v4487 = vsel %vm1563, %v4481, %v4483
        %v4492 = vsel %vm475, %v4484, 0.0
        %v4493 = vsel %vm476, %v4485, 0.0
        %v4494 = vsel %vm475, %v4486, 0.0
        %v4495 = vsel %vm476, %v4487, 0.0
        %v4496 = vpack.c.bf16 %v4494, %v4492
        %v4497 = vpack.c.bf16 %v4495, %v4493
        %v4500 = vunpack.c.l.b16 %v4496
        %v4501 = vunpack.c.l.b16 %v4497
        %v4502 = vunpack.c.h.b16 %v4496
        %v4503 = vunpack.c.h.b16 %v4497
        %v4504 = vpack.c.b16 %v4501, %v4500
        %v4505 = vpack.c.b16 %v4503, %v4502
        %4508 = vst [vmem:[#allocation3 + $0xc8] sm:$0xff] %v4504
        %4509 = vst [vmem:[#allocation3 + $0xd8] sm:$0xff] %v4505
        %v4510 = vld [vmem:[#allocation2 + $0x8] sm:$0xff]
        %v4511 = vld [vmem:[#allocation2 + $0x10] sm:$0xff]
        %v4512 = vld [vmem:[#allocation2 + $0x18] sm:$0xff]
        %v4513 = vld [vmem:[#allocation2 + $0x48] sm:$0xff]
        %v4514 = vld [vmem:[#allocation2 + $0x50] sm:$0xff]
        %v4515 = vld [vmem:[#allocation2 + $0x58] sm:$0xff]
        %v4516 = vpack.c.bf16 %v4513, %v4510
        %v4517 = vpack.c.bf16 %v4514, %v4511
        %v4518 = vpack.c.bf16 %v4515, %v4512
        %v4522 = vunpack.c.l.b16 %v4516
        %v4523 = vunpack.c.l.b16 %v4517
        %v4524 = vunpack.c.l.b16 %v4518
        %v4525 = vunpack.c.h.b16 %v4516
        %v4526 = vunpack.c.h.b16 %v4517
        %v4527 = vunpack.c.h.b16 %v4518
        %v4528 = vpack.c.b16 %v4523, %v4522
        %v4529 = vpack.c.b16 %v4524, %v4524
        %v4530 = vpack.c.b16 %v4526, %v4525
        %v4531 = vpack.c.b16 %v4527, %v4527
        %4532 = vrot.lane.b32.xlu0 %v4528, 112
        %v4533 = vpop.permute.xlu0 %4532
        %4534 = vrot.lane.b32.xlu0 %v4529, 112
        %v4535 = vpop.permute.xlu0 %4534
        %4536 = vrot.lane.b32.xlu0 %v4530, 112
        %v4537 = vpop.permute.xlu0 %4536
        %4538 = vrot.lane.b32.xlu0 %v4531, 112
        %v4539 = vpop.permute.xlu0 %4538
        %v4540 = vrot.slane %v4533, 4
        %v4541 = vrot.slane %v4535, 4
        %v4542 = vrot.slane %v4537, 4
        %v4543 = vrot.slane %v4539, 4
        %v4544 = vsel %vm734, %v4540, %v4541
        %v4545 = vsel %vm1785, %v4533, %v4544
        %v4546 = vsel %vm734, %v4542, %v4543
        %v4547 = vsel %vm1785, %v4537, %v4546
        %4550 = vst [vmem:[#allocation3 + $0xe0] sm:$0xff] %v4545
        %4551 = vst [vmem:[#allocation3 + $0xf0] sm:$0xff] %v4547
        %v4552 = vld [vmem:[#allocation2 + $0x28] sm:$0xff]
        %v4553 = vld [vmem:[#allocation2 + $0x30] sm:$0xff]
        %v4554 = vld [vmem:[#allocation2 + $0x38] sm:$0xff]
        %v4555 = vld [vmem:[#allocation2 + $0x68] sm:$0xff]
        %v4556 = vld [vmem:[#allocation2 + $0x70] sm:$0xff]
        %v4557 = vld [vmem:[#allocation2 + $0x78] sm:$0xff]
        %v4558 = vpack.c.bf16 %v4555, %v4552
        %v4559 = vpack.c.bf16 %v4556, %v4553
        %v4560 = vpack.c.bf16 %v4557, %v4554
        %v4564 = vunpack.c.l.b16 %v4558
        %v4565 = vunpack.c.l.b16 %v4559
        %v4566 = vunpack.c.l.b16 %v4560
        %v4567 = vunpack.c.h.b16 %v4558
        %v4568 = vunpack.c.h.b16 %v4559
        %v4569 = vunpack.c.h.b16 %v4560
        %v4570 = vpack.c.b16 %v4565, %v4564
        %v4571 = vpack.c.b16 %v4566, %v4566
        %v4572 = vpack.c.b16 %v4568, %v4567
        %v4573 = vpack.c.b16 %v4569, %v4569
        %4574 = vrot.lane.b32.xlu0 %v4570, 112
        %v4575 = vpop.permute.xlu0 %4574
        %4576 = vrot.lane.b32.xlu0 %v4571, 112
        %v4577 = vpop.permute.xlu0 %4576
        %4578 = vrot.lane.b32.xlu0 %v4572, 112
        %v4579 = vpop.permute.xlu0 %4578
        %4580 = vrot.lane.b32.xlu0 %v4573, 112
        %v4581 = vpop.permute.xlu0 %4580
        %v4582 = vrot.slane %v4575, 4
        %v4583 = vrot.slane %v4577, 4
        %v4584 = vrot.slane %v4579, 4
        %v4585 = vrot.slane %v4581, 4
        %v4586 = vsel %vm734, %v4582, %v4583
        %v4587 = vsel %vm1785, %v4575, %v4586
        %v4588 = vsel %vm734, %v4584, %v4585
        %v4589 = vsel %vm1785, %v4579, %v4588
        %4592 = vst [vmem:[#allocation3 + $0xe8] sm:$0xff] %v4587
        %4593 = vst [vmem:[#allocation3 + $0xf8] sm:$0xff] %v4589
        %v4594 = vld [vmem:[#allocation2 + $0x8] sm:$0xff]
        %v4595 = vld [vmem:[#allocation2 + $0x10] sm:$0xff]
        %v4596 = vld [vmem:[#allocation2 + $0x18] sm:$0xff]
        %v4597 = vld [vmem:[#allocation2 + $0x48] sm:$0xff]
        %v4598 = vld [vmem:[#allocation2 + $0x50] sm:$0xff]
        %v4599 = vld [vmem:[#allocation2 + $0x58] sm:$0xff]
        %4606 = vrot.lane.b32.xlu0 %v4594, 111
        %v4607 = vpop.permute.xlu0 %4606
        %4608 = vrot.lane.b32.xlu0 %v4595, 111
        %v4609 = vpop.permute.xlu0 %4608
        %4610 = vrot.lane.b32.xlu0 %v4596, 111
        %v4611 = vpop.permute.xlu0 %4610
        %4612 = vrot.lane.b32.xlu0 %v4597, 111
        %v4613 = vpop.permute.xlu0 %4612
        %4614 = vrot.lane.b32.xlu0 %v4598, 111
        %v4615 = vpop.permute.xlu0 %4614
        %4616 = vrot.lane.b32.xlu0 %v4599, 111
        %v4617 = vpop.permute.xlu0 %4616
        %v4618 = vsel %vm1933, %v4607, %v4609
        %v4619 = vsel %vm1933, %v4609, %v4611
        %v4620 = vsel %vm1933, %v4613, %v4615
        %v4621 = vsel %vm1933, %v4615, %v4617
        %v4626 = vsel %vm850, %v4618, 0.0
        %v4627 = vsel %vm851, %v4619, 0.0
        %v4628 = vsel %vm850, %v4620, 0.0
        %v4629 = vsel %vm851, %v4621, 0.0
        %v4630 = vpack.c.bf16 %v4628, %v4626
        %v4631 = vpack.c.bf16 %v4629, %v4627
        %v4634 = vunpack.c.l.b16 %v4630
        %v4635 = vunpack.c.l.b16 %v4631
        %v4636 = vunpack.c.h.b16 %v4630
        %v4637 = vunpack.c.h.b16 %v4631
        %v4638 = vpack.c.b16 %v4635, %v4634
        %v4639 = vpack.c.b16 %v4637, %v4636
        %4642 = vst [vmem:[#allocation3 + $0x100] sm:$0xff] %v4638
        %4643 = vst [vmem:[#allocation3 + $0x110] sm:$0xff] %v4639
        %v4644 = vld [vmem:[#allocation2 + $0x28] sm:$0xff]
        %v4645 = vld [vmem:[#allocation2 + $0x30] sm:$0xff]
        %v4646 = vld [vmem:[#allocation2 + $0x38] sm:$0xff]
        %v4647 = vld [vmem:[#allocation2 + $0x68] sm:$0xff]
        %v4648 = vld [vmem:[#allocation2 + $0x70] sm:$0xff]
        %v4649 = vld [vmem:[#allocation2 + $0x78] sm:$0xff]
        %4656 = vrot.lane.b32.xlu0 %v4644, 111
        %v4657 = vpop.permute.xlu0 %4656
        %4658 = vrot.lane.b32.xlu0 %v4645, 111
        %v4659 = vpop.permute.xlu0 %4658
        %4660 = vrot.lane.b32.xlu0 %v4646, 111
        %v4661 = vpop.permute.xlu0 %4660
        %4662 = vrot.lane.b32.xlu0 %v4647, 111
        %v4663 = vpop.permute.xlu0 %4662
        %4664 = vrot.lane.b32.xlu0 %v4648, 111
        %v4665 = vpop.permute.xlu0 %4664
        %4666 = vrot.lane.b32.xlu0 %v4649, 111
        %v4667 = vpop.permute.xlu0 %4666
        %v4668 = vsel %vm1933, %v4657, %v4659
        %v4669 = vsel %vm1933, %v4659, %v4661
        %v4670 = vsel %vm1933, %v4663, %v4665
        %v4671 = vsel %vm1933, %v4665, %v4667
        %v4676 = vsel %vm850, %v4668, 0.0
        %v4677 = vsel %vm851, %v4669, 0.0
        %v4678 = vsel %vm850, %v4670, 0.0
        %v4679 = vsel %vm851, %v4671, 0.0
        %v4680 = vpack.c.bf16 %v4678, %v4676
        %v4681 = vpack.c.bf16 %v4679, %v4677
        %v4684 = vunpack.c.l.b16 %v4680
        %v4685 = vunpack.c.l.b16 %v4681
        %v4686 = vunpack.c.h.b16 %v4680
        %v4687 = vunpack.c.h.b16 %v4681
        %v4688 = vpack.c.b16 %v4685, %v4684
        %v4689 = vpack.c.b16 %v4687, %v4686
        %4692 = vst [vmem:[#allocation3 + $0x108] sm:$0xff] %v4688
        %4693 = vst [vmem:[#allocation3 + $0x118] sm:$0xff] %v4689
        %v4694 = vld [vmem:[%s6] sm:$0x3]
        %v4695 = vld [vmem:[#allocation3] sm:$0xff]
        %v4696 = vld [vmem:[#allocation3 + $0x8] sm:$0xff]
        %v4697 = vld [vmem:[#allocation3 + $0x10] sm:$0xff]
        %v4698 = vld [vmem:[#allocation3 + $0x18] sm:$0xff]
        %v4699 = vld [vmem:[#allocation3 + $0x20] sm:$0xff]
        %v4700 = vld [vmem:[#allocation3 + $0x28] sm:$0xff]
        %v4701 = vld [vmem:[#allocation3 + $0x30] sm:$0xff]
        %v4702 = vld [vmem:[#allocation3 + $0x38] sm:$0xff]
        %v4703 = vld [vmem:[#allocation3 + $0x40] sm:$0xff]
        %v4704 = vld [vmem:[#allocation3 + $0x48] sm:$0xff]
        %v4705 = vld [vmem:[#allocation3 + $0x50] sm:$0xff]
        %v4706 = vld [vmem:[#allocation3 + $0x58] sm:$0xff]
        %v4707 = vld [vmem:[#allocation3 + $0x60] sm:$0xff]
        %v4708 = vld [vmem:[#allocation3 + $0x68] sm:$0xff]
        %v4709 = vld [vmem:[#allocation3 + $0x70] sm:$0xff]
        %v4710 = vld [vmem:[#allocation3 + $0x78] sm:$0xff]
        %v4711 = vld [vmem:[#allocation3 + $0x80] sm:$0xff]
        %v4712 = vld [vmem:[#allocation3 + $0x88] sm:$0xff]
        %v4713 = vld [vmem:[#allocation3 + $0x90] sm:$0xff]
        %v4714 = vld [vmem:[#allocation3 + $0x98] sm:$0xff]
        %v4715 = vld [vmem:[#allocation3 + $0xa0] sm:$0xff]
        %v4716 = vld [vmem:[#allocation3 + $0xa8] sm:$0xff]
        %v4717 = vld [vmem:[#allocation3 + $0xb0] sm:$0xff]
        %v4718 = vld [vmem:[#allocation3 + $0xb8] sm:$0xff]
        %v4719 = vld [vmem:[#allocation3 + $0xc0] sm:$0xff]
        %v4720 = vld [vmem:[#allocation3 + $0xc8] sm:$0xff]
        %v4721 = vld [vmem:[#allocation3 + $0xd0] sm:$0xff]
        %v4722 = vld [vmem:[#allocation3 + $0xd8] sm:$0xff]
        %v4723 = vld [vmem:[#allocation3 + $0xe0] sm:$0xff]
        %v4724 = vld [vmem:[#allocation3 + $0xe8] sm:$0xff]
        %v4725 = vld [vmem:[#allocation3 + $0xf0] sm:$0xff]
        %v4726 = vld [vmem:[#allocation3 + $0xf8] sm:$0xff]
        %v4727 = vld [vmem:[#allocation3 + $0x100] sm:$0xff]
        %v4728 = vld [vmem:[#allocation3 + $0x108] sm:$0xff]
        %v4729 = vld [vmem:[#allocation3 + $0x110] sm:$0xff]
        %v4730 = vld [vmem:[#allocation3 + $0x118] sm:$0xff]
        %v4731 = vld [vmem:[%s7] sm:$0x3]
        %4733 = vset.pattern.permute.xlu0 0
        %4734 = vperm.xlu0 %4733, %v4731
        %v4735 = vpop.permute.xlu0 %4734
        %v4739 = vunpack.c.l.s4 1966171168
        %v4740 = vunpack.c.0.s8 %v4739
        %v4741 = vlaneseq
        %v4742 = vshrl.u32 %v4741, 7
        %v4743 = vsub.s32 %v4740, %v4742
        %v4744 = vrot.slane %v4694, %v4743
        %v4745 = vcombine.high %v4744, %v4744
        %v4747 = vunpack.c.l.s4 1966171168
        %v4748 = vunpack.c.0.s8 %v4747
        %v4749 = vlaneseq
        %v4750 = vshrl.u32 %v4749, 7
        %v4751 = vsub.s32 %v4748, %v4750
        %v4752 = vrot.slane %v4744, %v4751
        %v4754 = vunpack.c.l.s4 1966171168
        %v4755 = vunpack.c.0.s8 %v4754
        %v4756 = vlaneseq
        %v4757 = vshrl.u32 %v4756, 7
        %v4758 = vsub.s32 %v4755, %v4757
        %v4759 = vrot.slane %v4745, %v4758
        %v4797 = vunpack.c.l.b16 %v4695
        %v4798 = vunpack.c.h.b16 %v4695
        %v4799 = vunpack.c.l.b16 %v4696
        %v4800 = vunpack.c.h.b16 %v4696
        %v4801 = vunpack.c.l.b16 %v4697
        %v4802 = vunpack.c.h.b16 %v4697
        %v4803 = vunpack.c.l.b16 %v4698
        %v4804 = vunpack.c.h.b16 %v4698
        %v4805 = vunpack.c.l.b16 %v4699
        %v4806 = vunpack.c.h.b16 %v4699
        %v4807 = vunpack.c.l.b16 %v4700
        %v4808 = vunpack.c.h.b16 %v4700
        %v4809 = vunpack.c.l.b16 %v4701
        %v4810 = vunpack.c.h.b16 %v4701
        %v4811 = vunpack.c.l.b16 %v4702
        %v4812 = vunpack.c.h.b16 %v4702
        %v4813 = vunpack.c.l.b16 %v4703
        %v4814 = vunpack.c.h.b16 %v4703
        %v4815 = vunpack.c.l.b16 %v4704
        %v4816 = vunpack.c.h.b16 %v4704
        %v4817 = vunpack.c.l.b16 %v4705
        %v4818 = vunpack.c.h.b16 %v4705
        %v4819 = vunpack.c.l.b16 %v4706
        %v4820 = vunpack.c.h.b16 %v4706
        %v4821 = vunpack.c.l.b16 %v4707
        %v4822 = vunpack.c.h.b16 %v4707
        %v4823 = vunpack.c.l.b16 %v4708
        %v4824 = vunpack.c.h.b16 %v4708
        %v4825 = vunpack.c.l.b16 %v4709
        %v4826 = vunpack.c.h.b16 %v4709
        %v4827 = vunpack.c.l.b16 %v4710
        %v4828 = vunpack.c.h.b16 %v4710
        %v4829 = vunpack.c.l.b16 %v4711
        %v4830 = vunpack.c.h.b16 %v4711
        %v4831 = vunpack.c.l.b16 %v4712
        %v4832 = vunpack.c.h.b16 %v4712
        %v4833 = vunpack.c.l.b16 %v4713
        %v4834 = vunpack.c.h.b16 %v4713
        %v4835 = vunpack.c.l.b16 %v4714
        %v4836 = vunpack.c.h.b16 %v4714
        %v4837 = vunpack.c.l.b16 %v4715
        %v4838 = vunpack.c.h.b16 %v4715
        %v4839 = vunpack.c.l.b16 %v4716
        %v4840 = vunpack.c.h.b16 %v4716
        %v4841 = vunpack.c.l.b16 %v4717
        %v4842 = vunpack.c.h.b16 %v4717
        %v4843 = vunpack.c.l.b16 %v4718
        %v4844 = vunpack.c.h.b16 %v4718
        %v4845 = vunpack.c.l.b16 %v4719
        %v4846 = vunpack.c.h.b16 %v4719
        %v4847 = vunpack.c.l.b16 %v4720
        %v4848 = vunpack.c.h.b16 %v4720
        %v4849 = vunpack.c.l.b16 %v4721
        %v4850 = vunpack.c.h.b16 %v4721
        %v4851 = vunpack.c.l.b16 %v4722
        %v4852 = vunpack.c.h.b16 %v4722
        %v4853 = vunpack.c.l.b16 %v4723
        %v4854 = vunpack.c.h.b16 %v4723
        %v4855 = vunpack.c.l.b16 %v4724
        %v4856 = vunpack.c.h.b16 %v4724
        %v4857 = vunpack.c.l.b16 %v4725
        %v4858 = vunpack.c.h.b16 %v4725
        %v4859 = vunpack.c.l.b16 %v4726
        %v4860 = vunpack.c.h.b16 %v4726
        %v4861 = vunpack.c.l.b16 %v4727
        %v4862 = vunpack.c.h.b16 %v4727
        %v4863 = vunpack.c.l.b16 %v4728
        %v4864 = vunpack.c.h.b16 %v4728
        %v4865 = vunpack.c.l.b16 %v4729
        %v4866 = vunpack.c.h.b16 %v4729
        %v4867 = vunpack.c.l.b16 %v4730
        %v4868 = vunpack.c.h.b16 %v4730
        %v4869 = vpack.c.b16 %v4801, %v4797
        %v4870 = vpack.c.b16 %v4802, %v4798
        %v4871 = vpack.c.b16 %v4803, %v4799
        %v4872 = vpack.c.b16 %v4804, %v4800
        %v4873 = vpack.c.b16 %v4809, %v4805
        %v4874 = vpack.c.b16 %v4810, %v4806
        %v4875 = vpack.c.b16 %v4811, %v4807
        %v4876 = vpack.c.b16 %v4812, %v4808
        %v4877 = vpack.c.b16 %v4817, %v4813
        %v4878 = vpack.c.b16 %v4818, %v4814
        %v4879 = vpack.c.b16 %v4819, %v4815
        %v4880 = vpack.c.b16 %v4820, %v4816
        %v4881 = vpack.c.b16 %v4825, %v4821
        %v4882 = vpack.c.b16 %v4826, %v4822
        %v4883 = vpack.c.b16 %v4827, %v4823
        %v4884 = vpack.c.b16 %v4828, %v4824
        %v4885 = vpack.c.b16 %v4833, %v4829
        %v4886 = vpack.c.b16 %v4834, %v4830
        %v4887 = vpack.c.b16 %v4835, %v4831
        %v4888 = vpack.c.b16 %v4836, %v4832
        %v4889 = vpack.c.b16 %v4841, %v4837
        %v4890 = vpack.c.b16 %v4842, %v4838
        %v4891 = vpack.c.b16 %v4843, %v4839
        %v4892 = vpack.c.b16 %v4844, %v4840
        %v4893 = vpack.c.b16 %v4849, %v4845
        %v4894 = vpack.c.b16 %v4850, %v4846
        %v4895 = vpack.c.b16 %v4851, %v4847
        %v4896 = vpack.c.b16 %v4852, %v4848
        %v4897 = vpack.c.b16 %v4857, %v4853
        %v4898 = vpack.c.b16 %v4858, %v4854
        %v4899 = vpack.c.b16 %v4859, %v4855
        %v4900 = vpack.c.b16 %v4860, %v4856
        %v4901 = vpack.c.b16 %v4865, %v4861
        %v4902 = vpack.c.b16 %v4866, %v4862
        %v4903 = vpack.c.b16 %v4867, %v4863
        %v4904 = vpack.c.b16 %v4868, %v4864
        %v4942 = vsel %vm3784, %v4759, 0
        %4944 = vmatprep.subr.bf16.mxu0 %v4898
        %4945 = vmatpush1.bf16.msra.mxu0 %v4897
        %4946 = vmatprep.subr.bf16.mxu0 %v4894
        %4947 = vmatpush1.bf16.msra.mxu0 %v4893
        %4948 = vmatprep.subr.bf16.mxu0 %v4890
        %4949 = vmatpush1.bf16.msra.mxu0 %v4889
        %4950 = vmatprep.subr.bf16.mxu0 %v4886
        %4951 = vmatpush1.bf16.msra.mxu0 %v4885
        %4952 = vmatprep.subr.bf16.mxu0 %v4882
        %4953 = vmatpush1.bf16.msra.mxu0 %v4881
        %4954 = vmatprep.subr.bf16.mxu0 %v4878
        %4955 = vmatpush1.bf16.msra.mxu0 %v4877
        %4956 = vmatprep.subr.bf16.mxu0 %v4874
        %4957 = vmatpush1.bf16.msra.mxu0 %v4873
        %4958 = vmatprep.subr.bf16.mxu0 %v4870
        %4959 = vmatpush1.bf16.msra.mxu0 %v4869
        %4960 = vmatprep.subr.bf16.mxu0 0
        %4961 = vmatpush2.bf16.msra.mxu0 0
        %4962 = vmatprep.subr.bf16.mxu0 0
        %4963 = vmatpush2.bf16.msra.mxu0 0
        %4964 = vmatprep.subr.bf16.mxu0 0
        %4965 = vmatpush2.bf16.msra.mxu0 0
        %4966 = vmatprep.subr.bf16.mxu0 0
        %4967 = vmatpush2.bf16.msra.mxu0 0
        %4968 = vmatprep.subr.bf16.mxu0 0
        %4969 = vmatpush2.bf16.msra.mxu0 0
        %4970 = vmatprep.subr.bf16.mxu0 0
        %4971 = vmatpush2.bf16.msra.mxu0 0
        %4972 = vmatprep.subr.bf16.mxu0 0
        %4973 = vmatpush2.bf16.msra.mxu0 0
        %4974 = vmatprep.subr.bf16.mxu0 %v4902
        %4975 = vmatpush2.bf16.msra.mxu0 %v4901
        %4976 = vmatprep.mubr.bf16.mxu0 %v4942
        %4977 = vmatmul.mubr.bf16.gmra.mxu0 %v4752
        %v4978 = vpop.f32.mrf.mxu0
        %v4979 = vadd.f32 %v4735, %v4978
        %v4980 = vpop.f32.mrf.mxu0
        %v4981 = vadd.f32 %v4735, %v4980
        %v4982 = vpop.f32.mrf.mxu0
        %v4983 = vpop.f32.mrf.mxu0
        %4984 = vdwg.mxu0
        %4985 = vmatprep.subr.bf16.mxu0 %v4900
        %4986 = vmatpush1.bf16.msra.mxu0 %v4899
        %4987 = vmatprep.subr.bf16.mxu0 %v4896
        %4988 = vmatpush1.bf16.msra.mxu0 %v4895
        %4989 = vmatprep.subr.bf16.mxu0 %v4892
        %4990 = vmatpush1.bf16.msra.mxu0 %v4891
        %4991 = vmatprep.subr.bf16.mxu0 %v4888
        %4992 = vmatpush1.bf16.msra.mxu0 %v4887
        %4993 = vmatprep.subr.bf16.mxu0 %v4884
        %4994 = vmatpush1.bf16.msra.mxu0 %v4883
        %4995 = vmatprep.subr.bf16.mxu0 %v4880
        %4996 = vmatpush1.bf16.msra.mxu0 %v4879
        %4997 = vmatprep.subr.bf16.mxu0 %v4876
        %4998 = vmatpush1.bf16.msra.mxu0 %v4875
        %4999 = vmatprep.subr.bf16.mxu0 %v4872
        %5000 = vmatpush1.bf16.msra.mxu0 %v4871
        %5001 = vmatprep.subr.bf16.mxu0 0
        %5002 = vmatpush2.bf16.msra.mxu0 0
        %5003 = vmatprep.subr.bf16.mxu0 0
        %5004 = vmatpush2.bf16.msra.mxu0 0
        %5005 = vmatprep.subr.bf16.mxu0 0
        %5006 = vmatpush2.bf16.msra.mxu0 0
        %5007 = vmatprep.subr.bf16.mxu0 0
        %5008 = vmatpush2.bf16.msra.mxu0 0
        %5009 = vmatprep.subr.bf16.mxu0 0
        %5010 = vmatpush2.bf16.msra.mxu0 0
        %5011 = vmatprep.subr.bf16.mxu0 0
        %5012 = vmatpush2.bf16.msra.mxu0 0
        %5013 = vmatprep.subr.bf16.mxu0 0
        %5014 = vmatpush2.bf16.msra.mxu0 0
        %5015 = vmatprep.subr.bf16.mxu0 %v4904
        %5016 = vmatpush2.bf16.msra.mxu0 %v4903
        %5017 = vmatprep.mubr.bf16.mxu0 %v4942
        %5018 = vmatmul.mubr.bf16.gmra.mxu0 %v4752
        %v5019 = vpop.f32.mrf.mxu0
        %v5020 = vadd.f32 %v4735, %v5019
        %v5021 = vpop.f32.mrf.mxu0
        %v5022 = vadd.f32 %v4735, %v5021
        %v5023 = vpop.f32.mrf.mxu0
        %v5024 = vpop.f32.mrf.mxu0
        %5025 = vdwg.mxu0
        %v5030 = vrot.slane %v4979, 1
        %v5031 = vrot.slane %v4981, 1
        %v5032 = vrot.slane %v5020, 1
        %v5033 = vrot.slane %v5022, 1
        %v5038 = vmax.f32 %v4979, %v5030
        %v5039 = vmax.f32 %v4981, %v5031
        %v5040 = vmax.f32 %v5020, %v5032
        %v5041 = vmax.f32 %v5022, %v5033
        %v5042 = vlaneseq
        %v5043 = vshrl.u32 %v5042, 7
        %v5044 = vsub.s32 0, %v5043
        %v5045 = vrot.slane %v5038, %v5044
        %v5046 = vlaneseq
        %v5047 = vshrl.u32 %v5046, 7
        %v5048 = vsub.s32 0, %v5047
        %v5049 = vrot.slane %v5039, %v5048
        %v5050 = vlaneseq
        %v5051 = vshrl.u32 %v5050, 7
        %v5052 = vsub.s32 0, %v5051
        %v5053 = vrot.slane %v5040, %v5052
        %v5054 = vlaneseq
        %v5055 = vshrl.u32 %v5054, 7
        %v5056 = vsub.s32 0, %v5055
        %v5057 = vrot.slane %v5041, %v5056
        %v5058 = vsub.f32 %v4979, %v5045
        %v5059 = vsub.f32 %v4981, %v5049
        %v5060 = vsub.f32 %v5020, %v5053
        %v5061 = vsub.f32 %v5022, %v5057
        %v5062 = vmul.f32 %v5058, 1.442695
        %v5063 = vpow.pop %v5062
        %v5064 = vmul.f32 %v5059, 1.442695
        %v5065 = vpow.pop %v5064
        %v5066 = vmul.f32 %v5060, 1.442695
        %v5067 = vpow.pop %v5066
        %v5068 = vmul.f32 %v5061, 1.442695
        %v5069 = vpow.pop %v5068
        %v5074 = vrot.slane %v5063, 1
        %v5075 = vrot.slane %v5065, 1
        %v5076 = vrot.slane %v5067, 1
        %v5077 = vrot.slane %v5069, 1
        %v5082 = vadd.f32 %v5063, %v5074
        %v5083 = vadd.f32 %v5065, %v5075
        %v5084 = vadd.f32 %v5067, %v5076
        %v5085 = vadd.f32 %v5069, %v5077
        %v5086 = vlaneseq
        %v5087 = vshrl.u32 %v5086, 7
        %v5088 = vsub.s32 0, %v5087
        %v5089 = vrot.slane %v5082, %v5088
        %v5090 = vlaneseq
        %v5091 = vshrl.u32 %v5090, 7
        %v5092 = vsub.s32 0, %v5091
        %v5093 = vrot.slane %v5083, %v5092
        %v5094 = vlaneseq
        %v5095 = vshrl.u32 %v5094, 7
        %v5096 = vsub.s32 0, %v5095
        %v5097 = vrot.slane %v5084, %v5096
        %v5098 = vlaneseq
        %v5099 = vshrl.u32 %v5098, 7
        %v5100 = vsub.s32 0, %v5099
        %v5101 = vrot.slane %v5085, %v5100
        %v5102 = vrcp.pop %v5089
        %v5103 = vmul.f32 %v5063, %v5102
        %v5104 = vrcp.pop %v5093
        %v5105 = vmul.f32 %v5065, %v5104
        %v5106 = vrcp.pop %v5097
        %v5107 = vmul.f32 %v5067, %v5106
        %v5108 = vrcp.pop %v5101
        %v5109 = vmul.f32 %v5069, %v5108
        %v5112 = vcombine.low %v5103, %v5105
        %v5114 = vunpack.c.l.s4 1983009808
        %v5115 = vunpack.c.0.s8 %v5114
        %v5116 = vlaneseq
        %v5117 = vshrl.u32 %v5116, 7
        %v5118 = vsub.s32 %v5115, %v5117
        %v5119 = vrot.slane %v5112, %v5118
        %5121 = vst [vmem:[%s302] sm:$0xf] %v5119
        %v5124 = vcombine.low %v5107, %v5109
        %v5126 = vunpack.c.l.s4 1983009808
        %v5127 = vunpack.c.0.s8 %v5126
        %v5128 = vlaneseq
        %v5129 = vshrl.u32 %v5128, 7
        %v5130 = vsub.s32 %v5127, %v5129
        %v5131 = vrot.slane %v5124, %v5130
        %s5133 = scalar_lea.vmem %s302, 4 [#allocation9]
        %5134 = vst [vmem:[%s5133] sm:$0xf] %v5131
        %s5135 = sand.u32 %s189, 1
        %s5136 = scalar_lea.sflag [#allocation8], %s5135
        %s5137 = sand.u32 %s189, 1
        %s5138 = smul.addr %s5137, 8
        %s5139 = scalar_lea.vmem [#allocation9], %s5138
        // Predicated region
        $region53: #{tpu_custom_call.1} parent=47 // pred_check
          %p5140 = pneg %p199
        $region54: #{tpu_custom_call.1} parent=47 // pred_check_branch
          %5142 = sbr.rel (%p5140) target = $region56
        $region55: #{tpu_custom_call.1} parent=47 // pred_region
          %s5143 = smul.u32 2, %s29
          %s5145 = ssub.s32 128, 128
          %5146 = vsyncadd %s5136, %s5145
          %s5147 = smul.addr %s5143, 2
          %s5148 = smul.addr %s5147, 32
          %s5149 = scalar_lea.hbm %s8, %s5148
          %s5150 = sshll.u32 %s5139, 4
          %s5151 = int_to_ptr.vmem [resolvable:$true] %s5150
          %5156 = dma.vmem_to_hbm [thread:$0]  %s5151, 128, %s5149, %s5136, 64, 64, 4
        $region56: #{tpu_custom_call.1} parent=47 // pred_fallthru
          _
      $region48: #{tpu_custom_call.1} parent=5 // pred_fallthru
        _
      %p5157 = scmp.le.s32.totalorder 2, %s24
      // Predicated region
      $region57: #{tpu_custom_call.1} parent=5 // pred_check
        %p5158 = pneg %p5157
      $region58: #{tpu_custom_call.1} parent=5 // pred_check_branch
        %5160 = sbr.rel (%p5158) target = $region60
      $region59: #{tpu_custom_call.1} parent=5 // pred_region
        %s5161 = ssub.s32 %s24, 2
        // Predicated region
        $region61: #{tpu_custom_call.1} parent=59 // pred_check
          %p5162 = pneg %p205
        $region62: #{tpu_custom_call.1} parent=59 // pred_check_branch
          %5164 = sbr.rel (%p5162) target = $region64
        $region63: #{tpu_custom_call.1} parent=59 // pred_region
          %s5165 = sand.u32 %s190, 1
          %s5166 = scalar_lea.sflag [#allocation8], %s5165
          %s5167 = sand.u32 %s190, 1
          %s5168 = smul.addr %s5167, 8
          %s5169 = scalar_lea.vmem [#allocation9], %s5168
          %5170 = dma.done %s5166, 128
        $region64: #{tpu_custom_call.1} parent=59 // pred_fallthru
          _
      $region60: #{tpu_custom_call.1} parent=5 // pred_fallthru
        _
    $region6: #{tpu_custom_call.1} parent=1 // loop_footer
      %s28 = sadd.s32 1, %s24
    $region7: #{tpu_custom_call.1} parent=1 // loop_footer_branch
      %23 = sbr.rel target = $region3
    $region8: #{tpu_custom_call.1} parent=1 // loop_exit
      _
    %5171 = vsyncpa [#allocation7], 1
    %s5172 = scalar_lea.sflag [#allocation7], 1
    %5173 = vsyncpa %s5172, 1
    %5174 = vsyncpa [#allocation8], 1
    %s5175 = scalar_lea.sflag [#allocation8], 1
    %5176 = vsyncpa %s5175, 1

</llo_original>
